<compile_context>
chip_gen: v6e
topology: v6e:2x2x1
jax: 0.10.0
libtpu: 0.0.40
codegen_flags: <defaults>
</compile_context>

<pallas_src>
import jax
import jax.numpy as jnp
from jax.experimental import pallas as pl
from jax.experimental.pallas import tpu as pltpu

IN_FEATURES = 196608   # = 3 * 256 * 256, as in the PyTorch module
OUT_FEATURES = 10
TK = 32768             # 196608 / 32768 = 6 grid steps; ~1 MiB/buffer tiles everywhere


def linear_kernel(x_ref, w_ref, b_ref, o_ref):
    # Grid: (k,). The output block index is constant, so o_ref ([N, B]) stays
    # resident in VMEM across the whole K reduction — accumulate into it directly.
    k = pl.program_id(0)

    @pl.when(k == 0)
    def _():
        o_ref[...] = jnp.zeros_like(o_ref)

    # VPU broadcast-multiply + lane reduction (no MXU):
    #   out[n, b] += sum_k w[n, k] * x[b, k]
    w = w_ref[...].astype(jnp.float32)           # (N, TK), hoisted bf16 -> f32 upcast
    for b in range(x_ref.shape[0]):              # B = 2, static unroll
        xb = x_ref[b:b + 1, :]                   # (1, TK) f32, sublane-broadcast
        col = jnp.sum(w * xb, axis=1, keepdims=True)   # (N, 1): VPU mult + XLU reduce
        o_ref[:, b:b + 1] += col

    @pl.when(k == pl.num_programs(0) - 1)
    def _():
        # Fused bias epilogue: (N, 1) broadcast across the B lane axis.
        o_ref[...] += b_ref[...]


@jax.jit
def linear_pallas(x, w, b):
    """x: [B, K] f32, w: [N, K] bf16 (PyTorch layout), b: [N] f32 -> [B, N] f32."""
    B, K = x.shape
    N, Kw = w.shape
    assert K == Kw and K % TK == 0
    k_steps = K // TK

    cost = pl.CostEstimate(
        flops=2 * B * K * N,
        transcendentals=0,
        bytes_accessed=(
            N * K * w.dtype.itemsize      # dominant: dense bf16 weight stream
            + B * K * x.dtype.itemsize    # f32 activations
            + B * N * 4 + N * 4
        ),
    )

    out_nb = pl.pallas_call(
        linear_kernel,
        out_shape=jax.ShapeDtypeStruct((N, B), jnp.float32),
        grid_spec=pltpu.PrefetchScalarGridSpec(
            num_scalar_prefetch=0,
            grid=(k_steps,),
            in_specs=[
                # x tile [B, TK]: B == full dim, TK lane-dense (multiple of 128).
                pl.BlockSpec((B, TK), lambda k: (0, k)),
                # weight tile [N, TK]: N == full dim, K on the lane axis -> contiguous
                # 64 KiB HBM rows per DMA, no 10->128 lane padding in VMEM.
                pl.BlockSpec((N, TK), lambda k: (0, k)),
                # bias [N, 1], constant block (fetched once).
                pl.BlockSpec((N, 1), lambda k: (0, 0)),
            ],
            out_specs=pl.BlockSpec((N, B), lambda k: (0, 0)),
        ),
        compiler_params=pltpu.CompilerParams(
            dimension_semantics=("arbitrary",),     # K is a reduction axis
            vmem_limit_bytes=32 * 1024 * 1024,      # ~10 MiB used; safe on v5e/v6e/v7x
        ),
        cost_estimate=cost,
    )(x, w, b.reshape(N, 1))

    # Tiny (10, 2) -> (2, 10) transpose to match PyTorch's [B, N] output.
    return out_nb.T


class NetPallas:
    """JAX/Pallas equivalent of the PyTorch Net (single Linear 196608 -> 10)."""

    def __init__(self, key):
        kw, kb = jax.random.split(key)
        # Mimic nn.Linear's U(-1/sqrt(fan_in), 1/sqrt(fan_in)) init.
        bound = 1.0 / (IN_FEATURES ** 0.5)
        w = jax.random.uniform(
            kw, (OUT_FEATURES, IN_FEATURES), jnp.float32, -bound, bound
        )
        b = jax.random.uniform(kb, (OUT_FEATURES,), jnp.float32, -bound, bound)
        # Native PyTorch layout [N, K], stored bf16 (weights quantized for the
        # HBM stream; accumulation stays f32 in-kernel).
        self.w = w.astype(jnp.bfloat16)
        self.b = b

    def __call__(self, x):
        # x: [B, IN_FEATURES] float32, same as PyTorch Linear on a 2-D input.
        return linear_pallas(x, self.w, self.b)


if __name__ == "__main__":
    key = jax.random.PRNGKey(0)
    k_param, k_x = jax.random.split(key)

    net = NetPallas(k_param)

    B = 2
    x = jax.random.normal(k_x, (B, IN_FEATURES), jnp.float32)

    y = net(x)
    jax.block_until_ready(y)

    # Reference with matched weight quantization (bf16 weight values, f32 math).
    w_f = net.w.astype(jnp.float32)
    y_ref = jnp.dot(x, w_f.T, precision=jax.lax.Precision.HIGHEST) + net.b[None, :]

    assert y.shape == (B, OUT_FEATURES)
    assert jnp.allclose(y, y_ref, atol=2e-3, rtol=2e-3), float(
        jnp.max(jnp.abs(y - y_ref))
    )

    print("KERNEL_OK")
</pallas_src>

<mosaic_0001>
module attributes {stable_mosaic.version = 11 : i64} {
  func.func @linear_kernel(%arg0: i32, %arg1: memref<2x32768xf32, #tpu.memory_space<vmem>>, %arg2: memref<10x32768xbf16, #tpu.memory_space<vmem>>, %arg3: memref<10x1xf32, #tpu.memory_space<vmem>>, %arg4: memref<10x2xf32, #tpu.memory_space<vmem>>) attributes {dimension_semantics = [#tpu.dimension_semantics<arbitrary>], iteration_bounds = array<i64: 6>, scalar_prefetch = 0 : i64, scratch_operands = 0 : i64, tpu.core_type = #tpu.core_type<tc>, window_params = [{transform_indices = @transform_0, window_bounds = array<i64: 2, 32768>}, {transform_indices = @transform_1, window_bounds = array<i64: 10, 32768>}, {pipeline_mode = #tpu.pipeline_mode<synchronous>, transform_indices = @transform_2, window_bounds = array<i64: 10, 1>}, {pipeline_mode = #tpu.pipeline_mode<synchronous>, transform_indices = @transform_3, window_bounds = array<i64: 10, 2>}]} {
    %c0_i32 = arith.constant 0 : i32
    %0 = arith.cmpi eq, %arg0, %c0_i32 : i32
    %1 = arith.extui %0 : i1 to i32
    %c0_i32_0 = arith.constant 0 : i32
    %2 = arith.cmpi ne, %1, %c0_i32_0 : i32
    scf.if %2 {
      %cst_15 = arith.constant 0.000000e+00 : f32
      %24 = vector.broadcast %cst_15 : f32 to vector<10x2xf32>
      %c0_16 = arith.constant 0 : index
      %c0_17 = arith.constant 0 : index
      %25 = vector.load %arg4[%c0_16, %c0_17] : memref<10x2xf32, #tpu.memory_space<vmem>>, vector<10x2xf32>
      tpu.vector_store %arg4[%c0_16, %c0_17], %24 {strides = array<i32>} : memref<10x2xf32, #tpu.memory_space<vmem>>, vector<10x2xf32>,
    } else {
    }
    %c0 = arith.constant 0 : index
    %c0_1 = arith.constant 0 : index
    %3 = vector.load %arg2[%c0, %c0_1] : memref<10x32768xbf16, #tpu.memory_space<vmem>>, vector<10x32768xbf16>
    %4 = arith.extf %3 : vector<10x32768xbf16> to vector<10x32768xf32>
    %c0_2 = arith.constant 0 : index
    %c0_3 = arith.constant 0 : index
    %5 = vector.load %arg1[%c0_2, %c0_3] : memref<2x32768xf32, #tpu.memory_space<vmem>>, vector<1x32768xf32>
    %6 = vector.broadcast %5 : vector<1x32768xf32> to vector<10x32768xf32>
    %7 = arith.mulf %4, %6 : vector<10x32768xf32>
    %cst = arith.constant dense<0.000000e+00> : vector<10xf32>
    %8 = vector.multi_reduction <add>, %7, %cst [1] : vector<10x32768xf32> to vector<10xf32>
    %9 = vector.shape_cast %8 : vector<10xf32> to vector<10x1xf32>
    %c0_4 = arith.constant 0 : index
    %c0_5 = arith.constant 0 : index
    %10 = vector.load %arg4[%c0_4, %c0_5] : memref<10x2xf32, #tpu.memory_space<vmem>>, vector<10x1xf32>
    %11 = arith.addf %10, %9 : vector<10x1xf32>
    %c0_6 = arith.constant 0 : index
    %c0_7 = arith.constant 0 : index
    %12 = vector.load %arg4[%c0_6, %c0_7] : memref<10x2xf32, #tpu.memory_space<vmem>>, vector<10x1xf32>
    tpu.vector_store %arg4[%c0_6, %c0_7], %11 {strides = array<i32>} : memref<10x2xf32, #tpu.memory_space<vmem>>, vector<10x1xf32>,
    %c1 = arith.constant 1 : index
    %c0_8 = arith.constant 0 : index
    %13 = vector.load %arg1[%c1, %c0_8] : memref<2x32768xf32, #tpu.memory_space<vmem>>, vector<1x32768xf32>
    %14 = vector.broadcast %13 : vector<1x32768xf32> to vector<10x32768xf32>
    %15 = arith.mulf %4, %14 : vector<10x32768xf32>
    %cst_9 = arith.constant dense<0.000000e+00> : vector<10xf32>
    %16 = vector.multi_reduction <add>, %15, %cst_9 [1] : vector<10x32768xf32> to vector<10xf32>
    %17 = vector.shape_cast %16 : vector<10xf32> to vector<10x1xf32>
    %c0_10 = arith.constant 0 : index
    %c1_11 = arith.constant 1 : index
    %18 = vector.load %arg4[%c0_10, %c1_11] : memref<10x2xf32, #tpu.memory_space<vmem>>, vector<10x1xf32>
    %19 = arith.addf %18, %17 : vector<10x1xf32>
    %c0_12 = arith.constant 0 : index
    %c1_13 = arith.constant 1 : index
    %20 = vector.load %arg4[%c0_12, %c1_13] : memref<10x2xf32, #tpu.memory_space<vmem>>, vector<10x1xf32>
    tpu.vector_store %arg4[%c0_12, %c1_13], %19 {strides = array<i32>} : memref<10x2xf32, #tpu.memory_space<vmem>>, vector<10x1xf32>,
    %c5_i32 = arith.constant 5 : i32
    %21 = arith.cmpi eq, %arg0, %c5_i32 : i32
    %22 = arith.extui %21 : i1 to i32
    %c0_i32_14 = arith.constant 0 : i32
    %23 = arith.cmpi ne, %22, %c0_i32_14 : i32
    scf.if %23 {
      %c0_15 = arith.constant 0 : index
      %c0_16 = arith.constant 0 : index
      %24 = vector.load %arg4[%c0_15, %c0_16] : memref<10x2xf32, #tpu.memory_space<vmem>>, vector<10x2xf32>
      %c0_17 = arith.constant 0 : index
      %c0_18 = arith.constant 0 : index
      %25 = vector.load %arg3[%c0_17, %c0_18] : memref<10x1xf32, #tpu.memory_space<vmem>>, vector<10x1xf32>
      %26 = vector.broadcast %25 : vector<10x1xf32> to vector<10x2xf32>
      %27 = arith.addf %24, %26 : vector<10x2xf32>
      %c0_19 = arith.constant 0 : index
      %c0_20 = arith.constant 0 : index
      %28 = vector.load %arg4[%c0_19, %c0_20] : memref<10x2xf32, #tpu.memory_space<vmem>>, vector<10x2xf32>
      tpu.vector_store %arg4[%c0_19, %c0_20], %27 {strides = array<i32>} : memref<10x2xf32, #tpu.memory_space<vmem>>, vector<10x2xf32>,
    } else {
    }
    return
  }
  func.func @transform_0(%arg0: i32) -> (i32, i32) {
    %c0_i32 = arith.constant 0 : i32
    %c0_i32_0 = arith.constant 0 : i32
    return %c0_i32, %arg0 : i32, i32
  }
  func.func @transform_1(%arg0: i32) -> (i32, i32) {
    %c0_i32 = arith.constant 0 : i32
    %c0_i32_0 = arith.constant 0 : i32
    return %c0_i32, %arg0 : i32, i32
  }
  func.func @transform_2(%arg0: i32) -> (i32, i32) {
    %c0_i32 = arith.constant 0 : i32
    %c0_i32_0 = arith.constant 0 : i32
    %c0_i32_1 = arith.constant 0 : i32
    return %c0_i32, %c0_i32_0 : i32, i32
  }
  func.func @transform_3(%arg0: i32) -> (i32, i32) {
    %c0_i32 = arith.constant 0 : i32
    %c0_i32_0 = arith.constant 0 : i32
    %c0_i32_1 = arith.constant 0 : i32
    return %c0_i32, %c0_i32_0 : i32, i32
  }
}

</mosaic_0001>

<llo_original>
// kernel: linear_pallas.1
$region0: #{linear_pallas.1}
  #allocation0 [shape = 'u32[]', space=smem, size = 0x4, offset = 0x4, fixed_abs, tag = 'smem constant byte address 0x4 - core index']
  #allocation1 [shape = 'u32[144,128]{1,0:T(1,128)}', space=vmem, size = 0x12000, scoped, tag = 'internal scratch']
  %s0 = inlined_call_operand.hbm [shape: f32[2,196608], index: 0, kind: input, shape index: {}]
  %s1 = inlined_call_operand.hbm [shape: bf16[10,196608], index: 1, kind: input, shape index: {}]
  %s2 = inlined_call_operand.vmem [shape: f32[10,1], index: 2, kind: input, shape index: {}]
  %s3 = inlined_call_operand.vmem [shape: f32[10,2], index: 3, kind: output, shape index: {}]
  %s4 = sld [smem:[#allocation0]]
  $region61: #{linear_pallas.1} parent=0
    _
  %s6 = ssub.s32 1, %s4
  %s7 = scalar_select 0, %s6, %s4
  $region1: #{linear_pallas.1} parent=0
    #allocation2 [shape = 'u8[524288]{0}', space=vmem, size = 0x80000, scoped, tag = 'input window, operand 0']
    #allocation3 [shape = 's32[2]{0}', space=sflag, size = 0x8, scoped, tag = 'scoped memory for linear_pallas.1']
    #allocation4 [shape = 'u8[2097152]{0}', space=vmem, size = 0x200000, scoped, tag = 'input window, operand 1']
    #allocation5 [shape = 's32[2]{0}', space=sflag, size = 0x8, scoped, tag = 'scoped memory for linear_pallas.1']
    %8 = vsyncpa [#allocation3], 0
    %s9 = scalar_lea.sflag [#allocation3], 1
    %10 = vsyncpa %s9, 0
    %11 = vsyncpa [#allocation5], 0
    %s12 = scalar_lea.sflag [#allocation5], 1
    %13 = vsyncpa %s12, 0
    loop: start=0, step=1, limit=8
    $region2: #{linear_pallas.1} parent=1 // loop_pre_header
      _
    $region3: #{linear_pallas.1} parent=1 // loop_header
      %s15 = sphi 0, %s19
      %p16 = scmp.ge.s32.totalorder %s15, 8
      %s25 = sphi 0, %s27
      %s28 = sphi 0, %s25
      %s29 = sphi 0, %s28
      %s45 = sphi 0, %s29
      %s51 = sphi 0, %s53
      %s54 = sphi 0, %s51
      %s55 = sphi 0, %s54
      %s71 = sphi 0, %s55
      %s75 = sphi 0, %s75
      %s77 = sphi 0, %s75
      %s78 = sphi 0, %s77
      %s92 = sphi 0, %s78
      %s96 = sphi 0, %s96
      %s98 = sphi 0, %s96
      %s99 = sphi 0, %s98
      %s113 = sphi 0, %s99
    $region4: #{linear_pallas.1} parent=1 // loop_header_branch
      %18 = sbr.rel (%p16) target = $region8
    $region5: #{linear_pallas.1} parent=1 // loop_body
      %s20 = ssub.s32 %s15, 1
      %s21 = ssub.s32 %s15, 2
      %s22 = sadd.s32 %s15, 1
      %s23 = ssub.s32 %s15, %s22
      %p24 = scmp.eq.s32.totalorder %s23, 0
      %s26 = sadd.s32 %s25, 1
      %s27 = scalar_select %p24, %s25, %s26
      %p30 = pneg %p24
      %p31 = scmp.eq.s32.totalorder %s15, 5
      %p32 = por %p30, %p31
      %p33 = scmp.ne.s32.totalorder %s25, %s28
      %p34 = scmp.eq.s32.totalorder %s15, 0
      %p35 = por %p33, %p34
      %p36 = scmp.ne.s32.totalorder %s25, %s28
      %p37 = scmp.eq.s32.totalorder %s20, 5
      %p38 = por %p36, %p37
      %p39 = scmp.ne.s32.totalorder %s28, %s29
      %p40 = scmp.eq.s32.totalorder %s20, 0
      %p41 = por %p39, %p40
      %p42 = scmp.ne.s32.totalorder %s28, %s29
      %p43 = scmp.eq.s32.totalorder %s21, 5
      %p44 = por %p42, %p43
      %p46 = scmp.ne.s32.totalorder %s29, %s45
      %p47 = scmp.eq.s32.totalorder %s21, 0
      %p48 = por %p46, %p47
      %s49 = ssub.s32 %s15, %s22
      %p50 = scmp.eq.s32.totalorder %s49, 0
      %s52 = sadd.s32 %s51, 1
      %s53 = scalar_select %p50, %s51, %s52
      %p56 = pneg %p50
      %p57 = scmp.eq.s32.totalorder %s15, 5
      %p58 = por %p56, %p57
      %p59 = scmp.ne.s32.totalorder %s51, %s54
      %p60 = scmp.eq.s32.totalorder %s15, 0
      %p61 = por %p59, %p60
      %p62 = scmp.ne.s32.totalorder %s51, %s54
      %p63 = scmp.eq.s32.totalorder %s20, 5
      %p64 = por %p62, %p63
      %p65 = scmp.ne.s32.totalorder %s54, %s55
      %p66 = scmp.eq.s32.totalorder %s20, 0
      %p67 = por %p65, %p66
      %p68 = scmp.ne.s32.totalorder %s54, %s55
      %p69 = scmp.eq.s32.totalorder %s21, 5
      %p70 = por %p68, %p69
      %p72 = scmp.ne.s32.totalorder %s55, %s71
      %p73 = scmp.eq.s32.totalorder %s21, 0
      %p74 = por %p72, %p73
      %s76 = sadd.s32 %s75, 1
      %p79 = scmp.eq.s32.totalorder %s15, 5
      %p80 = scmp.ne.s32.totalorder %s75, %s77
      %p81 = scmp.eq.s32.totalorder %s15, 0
      %p82 = por %p80, %p81
      %p83 = scmp.ne.s32.totalorder %s75, %s77
      %p84 = scmp.eq.s32.totalorder %s20, 5
      %p85 = por %p83, %p84
      %p86 = scmp.ne.s32.totalorder %s77, %s78
      %p87 = scmp.eq.s32.totalorder %s20, 0
      %p88 = por %p86, %p87
      %p89 = scmp.ne.s32.totalorder %s77, %s78
      %p90 = scmp.eq.s32.totalorder %s21, 5
      %p91 = por %p89, %p90
      %p93 = scmp.ne.s32.totalorder %s78, %s92
      %p94 = scmp.eq.s32.totalorder %s21, 0
      %p95 = por %p93, %p94
      %s97 = sadd.s32 %s96, 1
      %p100 = scmp.eq.s32.totalorder %s15, 5
      %p101 = scmp.ne.s32.totalorder %s96, %s98
      %p102 = scmp.eq.s32.totalorder %s15, 0
      %p103 = por %p101, %p102
      %p104 = scmp.ne.s32.totalorder %s96, %s98
      %p105 = scmp.eq.s32.totalorder %s20, 5
      %p106 = por %p104, %p105
      %p107 = scmp.ne.s32.totalorder %s98, %s99
      %p108 = scmp.eq.s32.totalorder %s20, 0
      %p109 = por %p107, %p108
      %p110 = scmp.ne.s32.totalorder %s98, %s99
      %p111 = scmp.eq.s32.totalorder %s21, 5
      %p112 = por %p110, %p111
      %p114 = scmp.ne.s32.totalorder %s99, %s113
      %p115 = scmp.eq.s32.totalorder %s21, 0
      %p116 = por %p114, %p115
      %p117 = scmp.le.s32.totalorder 1, %s15
      %p118 = scmp.lt.s32.totalorder %s15, 7
      %p119 = pnand %p117, %p118
      %p120 = pneg %p119
      // Predicated region
      $region9: #{linear_pallas.1} parent=5 // pred_check
        _
      $region10: #{linear_pallas.1} parent=5 // pred_check_branch
        %122 = sbr.rel (%p119) target = $region12
      $region11: #{linear_pallas.1} parent=5 // pred_region
        %s123 = ssub.s32 %s15, 1
        // Predicated region
        $region13: #{linear_pallas.1} parent=11 // pred_check
          %p124 = pneg %p88
        $region14: #{linear_pallas.1} parent=11 // pred_check_branch
          %126 = sbr.rel (%p124) target = $region16
        $region15: #{linear_pallas.1} parent=11 // pred_region
          _
        $region16: #{linear_pallas.1} parent=11 // pred_fallthru
          _
      $region12: #{linear_pallas.1} parent=5 // pred_fallthru
        _
      %p127 = scmp.lt.s32.totalorder %s15, 6
      // Predicated region
      $region17: #{linear_pallas.1} parent=5 // pred_check
        %p128 = pneg %p127
      $region18: #{linear_pallas.1} parent=5 // pred_check_branch
        %130 = sbr.rel (%p128) target = $region20
      $region19: #{linear_pallas.1} parent=5 // pred_region
        // Predicated region
        $region21: #{linear_pallas.1} parent=19 // pred_check
          %p131 = pneg %p35
        $region22: #{linear_pallas.1} parent=19 // pred_check_branch
          %133 = sbr.rel (%p131) target = $region24
        $region23: #{linear_pallas.1} parent=19 // pred_region
          %s134 = sand.u32 %s25, 1
          %s135 = scalar_lea.sflag [#allocation3], %s134
          %s136 = sand.u32 %s25, 1
          %s137 = smul.addr %s136, 512
          %s138 = scalar_lea.vmem [#allocation2], %s137
          %s139 = smul.u32 256, %s15
          %s141 = ssub.s32 8192, 8192
          %142 = vsyncadd %s135, %s141
          %s143 = smul.addr %s139, 32
          %s144 = scalar_lea.hbm %s0, %s143
          %s146 = sshll.u32 %s138, 4
          %s147 = int_to_ptr.vmem [resolvable:$true] %s146
          %149 = dma.hbm_to_vmem [thread:$0]  %s144, 8192, %s147, %s135
        $region24: #{linear_pallas.1} parent=19 // pred_fallthru
          _
        // Predicated region
        $region25: #{linear_pallas.1} parent=19 // pred_check
          %p150 = pneg %p61
        $region26: #{linear_pallas.1} parent=19 // pred_check_branch
          %152 = sbr.rel (%p150) target = $region28
        $region27: #{linear_pallas.1} parent=19 // pred_region
          %s153 = sand.u32 %s51, 1
          %s154 = scalar_lea.sflag [#allocation5], %s153
          %s155 = sand.u32 %s51, 1
          %s156 = smul.addr %s155, 2048
          %s157 = scalar_lea.vmem [#allocation4], %s156
          %s158 = smul.u32 256, %s15
          %s160 = ssub.s32 32768, 32768
          %161 = vsyncadd %s154, %s160
          %s162 = smul.addr %s158, 64
          %s163 = scalar_lea.hbm %s1, %s162
          %s164 = sshll.u32 %s157, 4
          %s165 = int_to_ptr.vmem [resolvable:$true] %s164
          %170 = dma.hbm_to_vmem [thread:$0]  %s163, 32768, %s165, %s154, 98304, 16384, 1024
        $region28: #{linear_pallas.1} parent=19 // pred_fallthru
          _
      $region20: #{linear_pallas.1} parent=5 // pred_fallthru
        _
      %p171 = scmp.le.s32.totalorder 1, %s15
      %p172 = scmp.lt.s32.totalorder %s15, 7
      %p173 = pnand %p171, %p172
      %p174 = pneg %p173
      // Predicated region
      $region29: #{linear_pallas.1} parent=5 // pred_check
        _
      $region30: #{linear_pallas.1} parent=5 // pred_check_branch
        %176 = sbr.rel (%p173) target = $region32
      $region31: #{linear_pallas.1} parent=5 // pred_region
        %s177 = ssub.s32 %s15, 1
        %s178 = sand.u32 %s28, 1
        %s179 = scalar_lea.sflag [#allocation3], %s178
        %s180 = sand.u32 %s28, 1
        %s181 = smul.addr %s180, 512
        %s182 = scalar_lea.vmem [#allocation2], %s181
        // Predicated region
        $region33: #{linear_pallas.1} parent=31 // pred_check
          %p183 = pneg %p41
        $region34: #{linear_pallas.1} parent=31 // pred_check_branch
          %185 = sbr.rel (%p183) target = $region36
        $region35: #{linear_pallas.1} parent=31 // pred_region
          %186 = dma.done %s179, 8192
        $region36: #{linear_pallas.1} parent=31 // pred_fallthru
          _
        %s187 = sand.u32 %s54, 1
        %s188 = scalar_lea.sflag [#allocation5], %s187
        %s189 = sand.u32 %s54, 1
        %s190 = smul.addr %s189, 2048
        %s191 = scalar_lea.vmem [#allocation4], %s190
        // Predicated region
        $region37: #{linear_pallas.1} parent=31 // pred_check
          %p192 = pneg %p67
        $region38: #{linear_pallas.1} parent=31 // pred_check_branch
          %194 = sbr.rel (%p192) target = $region40
        $region39: #{linear_pallas.1} parent=31 // pred_region
          %195 = dma.done %s188, 32768
        $region40: #{linear_pallas.1} parent=31 // pred_fallthru
          _
        %s196 = sand.u32 %s28, 1
        %s197 = scalar_lea.sflag [#allocation3], %s196
        %s198 = sand.u32 %s28, 1
        %s199 = smul.addr %s198, 512
        %s200 = scalar_lea.vmem [#allocation2], %s199
        %p201 = pneg %p41
        %p202 = pneg %p38
        %s203 = sand.u32 %s54, 1
        %s204 = scalar_lea.sflag [#allocation5], %s203
        %s205 = sand.u32 %s54, 1
        %s206 = smul.addr %s205, 2048
        %s207 = scalar_lea.vmem [#allocation4], %s206
        %p208 = pneg %p67
        %p209 = pneg %p64
        %p210 = pneg %p88
        %p211 = pneg %p85
        %p212 = pneg %p109
        %p213 = pneg %p106
        %s214 = smul.u32 256, %s20
        %s215 = smul.u32 256, %s20
        %p216 = scmp.eq.s32.totalorder %s20, 0
        // Predicated region
        $region41: #{linear_pallas.1} parent=31 // pred_check
          %p217 = pneg %p216
        $region42: #{linear_pallas.1} parent=31 // pred_check_branch
          %219 = sbr.rel (%p217) target = $region44
        $region43: #{linear_pallas.1} parent=31 // pred_region
          %vm220 = vcmask 15360
          %221 = vst.msk [vmem:[%s3] sm:$0xff] %vm220, 0.0
          %vm222 = vcmask 9216
          %223 = vst.msk [vmem:[%s3 + $0x8] sm:$0x3] %vm222, 0.0
        $region44: #{linear_pallas.1} parent=31 // pred_fallthru
          _
        %v224 = vld [vmem:[%s191] sm:$0xff]
        %v225 = vld [vmem:[%s191 + $0x8] sm:$0xff]
        %v226 = vld [vmem:[%s191 + $0x10] sm:$0xff]
        %v227 = vld [vmem:[%s191 + $0x18] sm:$0xff]
        %v228 = vld [vmem:[%s191 + $0x20] sm:$0xff]
        %v229 = vld [vmem:[%s191 + $0x28] sm:$0xff]
        %v230 = vld [vmem:[%s191 + $0x30] sm:$0xff]
        %v231 = vld [vmem:[%s191 + $0x38] sm:$0xff]
        %v232 = vld [vmem:[%s191 + $0x40] sm:$0xff]
        %v233 = vld [vmem:[%s191 + $0x48] sm:$0xff]
        %v234 = vld [vmem:[%s191 + $0x50] sm:$0xff]
        %v235 = vld [vmem:[%s191 + $0x58] sm:$0xff]
        %v236 = vld [vmem:[%s191 + $0x60] sm:$0xff]
        %v237 = vld [vmem:[%s191 + $0x68] sm:$0xff]
        %v238 = vld [vmem:[%s191 + $0x70] sm:$0xff]
        %v239 = vld [vmem:[%s191 + $0x78] sm:$0xff]
        %v240 = vld [vmem:[%s191 + $0x80] sm:$0xff]
        %v241 = vld [vmem:[%s191 + $0x88] sm:$0xff]
        %v242 = vld [vmem:[%s191 + $0x90] sm:$0xff]
        %v243 = vld [vmem:[%s191 + $0x98] sm:$0xff]
        %v244 = vld [vmem:[%s191 + $0xa0] sm:$0xff]
        %v245 = vld [vmem:[%s191 + $0xa8] sm:$0xff]
        %v246 = vld [vmem:[%s191 + $0xb0] sm:$0xff]
        %v247 = vld [vmem:[%s191 + $0xb8] sm:$0xff]
        %v248 = vld [vmem:[%s191 + $0xc0] sm:$0xff]
        %v249 = vld [vmem:[%s191 + $0xc8] sm:$0xff]
        %v250 = vld [vmem:[%s191 + $0xd0] sm:$0xff]
        %v251 = vld [vmem:[%s191 + $0xd8] sm:$0xff]
        %v252 = vld [vmem:[%s191 + $0xe0] sm:$0xff]
        %v253 = vld [vmem:[%s191 + $0xe8] sm:$0xff]
        %v254 = vld [vmem:[%s191 + $0xf0] sm:$0xff]
        %v255 = vld [vmem:[%s191 + $0xf8] sm:$0xff]
        %v256 = vld [vmem:[%s191 + $0x100] sm:$0xff]
        %v257 = vld [vmem:[%s191 + $0x108] sm:$0xff]
        %v258 = vld [vmem:[%s191 + $0x110] sm:$0xff]
        %v259 = vld [vmem:[%s191 + $0x118] sm:$0xff]
        %v260 = vld [vmem:[%s191 + $0x120] sm:$0xff]
        %v261 = vld [vmem:[%s191 + $0x128] sm:$0xff]
        %v262 = vld [vmem:[%s191 + $0x130] sm:$0xff]
        %v263 = vld [vmem:[%s191 + $0x138] sm:$0xff]
        %v264 = vld [vmem:[%s191 + $0x140] sm:$0xff]
        %v265 = vld [vmem:[%s191 + $0x148] sm:$0xff]
        %v266 = vld [vmem:[%s191 + $0x150] sm:$0xff]
        %v267 = vld [vmem:[%s191 + $0x158] sm:$0xff]
        %v268 = vld [vmem:[%s191 + $0x160] sm:$0xff]
        %v269 = vld [vmem:[%s191 + $0x168] sm:$0xff]
        %v270 = vld [vmem:[%s191 + $0x170] sm:$0xff]
        %v271 = vld [vmem:[%s191 + $0x178] sm:$0xff]
        %v272 = vld [vmem:[%s191 + $0x180] sm:$0xff]
        %v273 = vld [vmem:[%s191 + $0x188] sm:$0xff]
        %v274 = vld [vmem:[%s191 + $0x190] sm:$0xff]
        %v275 = vld [vmem:[%s191 + $0x198] sm:$0xff]
        %v276 = vld [vmem:[%s191 + $0x1a0] sm:$0xff]
        %v277 = vld [vmem:[%s191 + $0x1a8] sm:$0xff]
        %v278 = vld [vmem:[%s191 + $0x1b0] sm:$0xff]
        %v279 = vld [vmem:[%s191 + $0x1b8] sm:$0xff]
        %v280 = vld [vmem:[%s191 + $0x1c0] sm:$0xff]
        %v281 = vld [vmem:[%s191 + $0x1c8] sm:$0xff]
        %v282 = vld [vmem:[%s191 + $0x1d0] sm:$0xff]
        %v283 = vld [vmem:[%s191 + $0x1d8] sm:$0xff]
        %v284 = vld [vmem:[%s191 + $0x1e0] sm:$0xff]
        %v285 = vld [vmem:[%s191 + $0x1e8] sm:$0xff]
        %v286 = vld [vmem:[%s191 + $0x1f0] sm:$0xff]
        %v287 = vld [vmem:[%s191 + $0x1f8] sm:$0xff]
        %v288 = vld [vmem:[%s191 + $0x200] sm:$0xff]
        %v289 = vld [vmem:[%s191 + $0x208] sm:$0xff]
        %v290 = vld [vmem:[%s191 + $0x210] sm:$0xff]
        %v291 = vld [vmem:[%s191 + $0x218] sm:$0xff]
        %v292 = vld [vmem:[%s191 + $0x220] sm:$0xff]
        %v293 = vld [vmem:[%s191 + $0x228] sm:$0xff]
        %v294 = vld [vmem:[%s191 + $0x230] sm:$0xff]
        %v295 = vld [vmem:[%s191 + $0x238] sm:$0xff]
        %v296 = vld [vmem:[%s191 + $0x240] sm:$0xff]
        %v297 = vld [vmem:[%s191 + $0x248] sm:$0xff]
        %v298 = vld [vmem:[%s191 + $0x250] sm:$0xff]
        %v299 = vld [vmem:[%s191 + $0x258] sm:$0xff]
        %v300 = vld [vmem:[%s191 + $0x260] sm:$0xff]
        %v301 = vld [vmem:[%s191 + $0x268] sm:$0xff]
        %v302 = vld [vmem:[%s191 + $0x270] sm:$0xff]
        %v303 = vld [vmem:[%s191 + $0x278] sm:$0xff]
        %v304 = vld [vmem:[%s191 + $0x280] sm:$0xff]
        %v305 = vld [vmem:[%s191 + $0x288] sm:$0xff]
        %v306 = vld [vmem:[%s191 + $0x290] sm:$0xff]
        %v307 = vld [vmem:[%s191 + $0x298] sm:$0xff]
        %v308 = vld [vmem:[%s191 + $0x2a0] sm:$0xff]
        %v309 = vld [vmem:[%s191 + $0x2a8] sm:$0xff]
        %v310 = vld [vmem:[%s191 + $0x2b0] sm:$0xff]
        %v311 = vld [vmem:[%s191 + $0x2b8] sm:$0xff]
        %v312 = vld [vmem:[%s191 + $0x2c0] sm:$0xff]
        %v313 = vld [vmem:[%s191 + $0x2c8] sm:$0xff]
        %v314 = vld [vmem:[%s191 + $0x2d0] sm:$0xff]
        %v315 = vld [vmem:[%s191 + $0x2d8] sm:$0xff]
        %v316 = vld [vmem:[%s191 + $0x2e0] sm:$0xff]
        %v317 = vld [vmem:[%s191 + $0x2e8] sm:$0xff]
        %v318 = vld [vmem:[%s191 + $0x2f0] sm:$0xff]
        %v319 = vld [vmem:[%s191 + $0x2f8] sm:$0xff]
        %v320 = vld [vmem:[%s191 + $0x300] sm:$0xff]
        %v321 = vld [vmem:[%s191 + $0x308] sm:$0xff]
        %v322 = vld [vmem:[%s191 + $0x310] sm:$0xff]
        %v323 = vld [vmem:[%s191 + $0x318] sm:$0xff]
        %v324 = vld [vmem:[%s191 + $0x320] sm:$0xff]
        %v325 = vld [vmem:[%s191 + $0x328] sm:$0xff]
        %v326 = vld [vmem:[%s191 + $0x330] sm:$0xff]
        %v327 = vld [vmem:[%s191 + $0x338] sm:$0xff]
        %v328 = vld [vmem:[%s191 + $0x340] sm:$0xff]
        %v329 = vld [vmem:[%s191 + $0x348] sm:$0xff]
        %v330 = vld [vmem:[%s191 + $0x350] sm:$0xff]
        %v331 = vld [vmem:[%s191 + $0x358] sm:$0xff]
        %v332 = vld [vmem:[%s191 + $0x360] sm:$0xff]
        %v333 = vld [vmem:[%s191 + $0x368] sm:$0xff]
        %v334 = vld [vmem:[%s191 + $0x370] sm:$0xff]
        %v335 = vld [vmem:[%s191 + $0x378] sm:$0xff]
        %v336 = vld [vmem:[%s191 + $0x380] sm:$0xff]
        %v337 = vld [vmem:[%s191 + $0x388] sm:$0xff]
        %v338 = vld [vmem:[%s191 + $0x390] sm:$0xff]
        %v339 = vld [vmem:[%s191 + $0x398] sm:$0xff]
        %v340 = vld [vmem:[%s191 + $0x3a0] sm:$0xff]
        %v341 = vld [vmem:[%s191 + $0x3a8] sm:$0xff]
        %v342 = vld [vmem:[%s191 + $0x3b0] sm:$0xff]
        %v343 = vld [vmem:[%s191 + $0x3b8] sm:$0xff]
        %v344 = vld [vmem:[%s191 + $0x3c0] sm:$0xff]
        %v345 = vld [vmem:[%s191 + $0x3c8] sm:$0xff]
        %v346 = vld [vmem:[%s191 + $0x3d0] sm:$0xff]
        %v347 = vld [vmem:[%s191 + $0x3d8] sm:$0xff]
        %v348 = vld [vmem:[%s191 + $0x3e0] sm:$0xff]
        %v349 = vld [vmem:[%s191 + $0x3e8] sm:$0xff]
        %v350 = vld [vmem:[%s191 + $0x3f0] sm:$0xff]
        %v351 = vld [vmem:[%s191 + $0x3f8] sm:$0xff]
        %v352 = vld [vmem:[%s191 + $0x400] sm:$0x11]
        %v353 = vld [vmem:[%s191 + $0x408] sm:$0x11]
        %v354 = vld [vmem:[%s191 + $0x410] sm:$0x11]
        %v355 = vld [vmem:[%s191 + $0x418] sm:$0x11]
        %v356 = vld [vmem:[%s191 + $0x420] sm:$0x11]
        %v357 = vld [vmem:[%s191 + $0x428] sm:$0x11]
        %v358 = vld [vmem:[%s191 + $0x430] sm:$0x11]
        %v359 = vld [vmem:[%s191 + $0x438] sm:$0x11]
        %v360 = vld [vmem:[%s191 + $0x440] sm:$0x11]
        %v361 = vld [vmem:[%s191 + $0x448] sm:$0x11]
        %v362 = vld [vmem:[%s191 + $0x450] sm:$0x11]
        %v363 = vld [vmem:[%s191 + $0x458] sm:$0x11]
        %v364 = vld [vmem:[%s191 + $0x460] sm:$0x11]
        %v365 = vld [vmem:[%s191 + $0x468] sm:$0x11]
        %v366 = vld [vmem:[%s191 + $0x470] sm:$0x11]
        %v367 = vld [vmem:[%s191 + $0x478] sm:$0x11]
        %v368 = vld [vmem:[%s191 + $0x480] sm:$0x11]
        %v369 = vld [vmem:[%s191 + $0x488] sm:$0x11]
        %v370 = vld [vmem:[%s191 + $0x490] sm:$0x11]
        %v371 = vld [vmem:[%s191 + $0x498] sm:$0x11]
        %v372 = vld [vmem:[%s191 + $0x4a0] sm:$0x11]
        %v373 = vld [vmem:[%s191 + $0x4a8] sm:$0x11]
        %v374 = vld [vmem:[%s191 + $0x4b0] sm:$0x11]
        %v375 = vld [vmem:[%s191 + $0x4b8] sm:$0x11]
        %v376 = vld [vmem:[%s191 + $0x4c0] sm:$0x11]
        %v377 = vld [vmem:[%s191 + $0x4c8] sm:$0x11]
        %v378 = vld [vmem:[%s191 + $0x4d0] sm:$0x11]
        %v379 = vld [vmem:[%s191 + $0x4d8] sm:$0x11]
        %v380 = vld [vmem:[%s191 + $0x4e0] sm:$0x11]
        %v381 = vld [vmem:[%s191 + $0x4e8] sm:$0x11]
        %v382 = vld [vmem:[%s191 + $0x4f0] sm:$0x11]
        %v383 = vld [vmem:[%s191 + $0x4f8] sm:$0x11]
        %v384 = vld [vmem:[%s191 + $0x500] sm:$0x11]
        %v385 = vld [vmem:[%s191 + $0x508] sm:$0x11]
        %v386 = vld [vmem:[%s191 + $0x510] sm:$0x11]
        %v387 = vld [vmem:[%s191 + $0x518] sm:$0x11]
        %v388 = vld [vmem:[%s191 + $0x520] sm:$0x11]
        %v389 = vld [vmem:[%s191 + $0x528] sm:$0x11]
        %v390 = vld [vmem:[%s191 + $0x530] sm:$0x11]
        %v391 = vld [vmem:[%s191 + $0x538] sm:$0x11]
        %v392 = vld [vmem:[%s191 + $0x540] sm:$0x11]
        %v393 = vld [vmem:[%s191 + $0x548] sm:$0x11]
        %v394 = vld [vmem:[%s191 + $0x550] sm:$0x11]
        %v395 = vld [vmem:[%s191 + $0x558] sm:$0x11]
        %v396 = vld [vmem:[%s191 + $0x560] sm:$0x11]
        %v397 = vld [vmem:[%s191 + $0x568] sm:$0x11]
        %v398 = vld [vmem:[%s191 + $0x570] sm:$0x11]
        %v399 = vld [vmem:[%s191 + $0x578] sm:$0x11]
        %v400 = vld [vmem:[%s191 + $0x580] sm:$0x11]
        %v401 = vld [vmem:[%s191 + $0x588] sm:$0x11]
        %v402 = vld [vmem:[%s191 + $0x590] sm:$0x11]
        %v403 = vld [vmem:[%s191 + $0x598] sm:$0x11]
        %v404 = vld [vmem:[%s191 + $0x5a0] sm:$0x11]
        %v405 = vld [vmem:[%s191 + $0x5a8] sm:$0x11]
        %v406 = vld [vmem:[%s191 + $0x5b0] sm:$0x11]
        %v407 = vld [vmem:[%s191 + $0x5b8] sm:$0x11]
        %v408 = vld [vmem:[%s191 + $0x5c0] sm:$0x11]
        %v409 = vld [vmem:[%s191 + $0x5c8] sm:$0x11]
        %v410 = vld [vmem:[%s191 + $0x5d0] sm:$0x11]
        %v411 = vld [vmem:[%s191 + $0x5d8] sm:$0x11]
        %v412 = vld [vmem:[%s191 + $0x5e0] sm:$0x11]
        %v413 = vld [vmem:[%s191 + $0x5e8] sm:$0x11]
        %v414 = vld [vmem:[%s191 + $0x5f0] sm:$0x11]
        %v415 = vld [vmem:[%s191 + $0x5f8] sm:$0x11]
        %v416 = vld [vmem:[%s191 + $0x600] sm:$0x11]
        %v417 = vld [vmem:[%s191 + $0x608] sm:$0x11]
        %v418 = vld [vmem:[%s191 + $0x610] sm:$0x11]
        %v419 = vld [vmem:[%s191 + $0x618] sm:$0x11]
        %v420 = vld [vmem:[%s191 + $0x620] sm:$0x11]
        %v421 = vld [vmem:[%s191 + $0x628] sm:$0x11]
        %v422 = vld [vmem:[%s191 + $0x630] sm:$0x11]
        %v423 = vld [vmem:[%s191 + $0x638] sm:$0x11]
        %v424 = vld [vmem:[%s191 + $0x640] sm:$0x11]
        %v425 = vld [vmem:[%s191 + $0x648] sm:$0x11]
        %v426 = vld [vmem:[%s191 + $0x650] sm:$0x11]
        %v427 = vld [vmem:[%s191 + $0x658] sm:$0x11]
        %v428 = vld [vmem:[%s191 + $0x660] sm:$0x11]
        %v429 = vld [vmem:[%s191 + $0x668] sm:$0x11]
        %v430 = vld [vmem:[%s191 + $0x670] sm:$0x11]
        %v431 = vld [vmem:[%s191 + $0x678] sm:$0x11]
        %v432 = vld [vmem:[%s191 + $0x680] sm:$0x11]
        %v433 = vld [vmem:[%s191 + $0x688] sm:$0x11]
        %v434 = vld [vmem:[%s191 + $0x690] sm:$0x11]
        %v435 = vld [vmem:[%s191 + $0x698] sm:$0x11]
        %v436 = vld [vmem:[%s191 + $0x6a0] sm:$0x11]
        %v437 = vld [vmem:[%s191 + $0x6a8] sm:$0x11]
        %v438 = vld [vmem:[%s191 + $0x6b0] sm:$0x11]
        %v439 = vld [vmem:[%s191 + $0x6b8] sm:$0x11]
        %v440 = vld [vmem:[%s191 + $0x6c0] sm:$0x11]
        %v441 = vld [vmem:[%s191 + $0x6c8] sm:$0x11]
        %v442 = vld [vmem:[%s191 + $0x6d0] sm:$0x11]
        %v443 = vld [vmem:[%s191 + $0x6d8] sm:$0x11]
        %v444 = vld [vmem:[%s191 + $0x6e0] sm:$0x11]
        %v445 = vld [vmem:[%s191 + $0x6e8] sm:$0x11]
        %v446 = vld [vmem:[%s191 + $0x6f0] sm:$0x11]
        %v447 = vld [vmem:[%s191 + $0x6f8] sm:$0x11]
        %v448 = vld [vmem:[%s191 + $0x700] sm:$0x11]
        %v449 = vld [vmem:[%s191 + $0x708] sm:$0x11]
        %v450 = vld [vmem:[%s191 + $0x710] sm:$0x11]
        %v451 = vld [vmem:[%s191 + $0x718] sm:$0x11]
        %v452 = vld [vmem:[%s191 + $0x720] sm:$0x11]
        %v453 = vld [vmem:[%s191 + $0x728] sm:$0x11]
        %v454 = vld [vmem:[%s191 + $0x730] sm:$0x11]
        %v455 = vld [vmem:[%s191 + $0x738] sm:$0x11]
        %v456 = vld [vmem:[%s191 + $0x740] sm:$0x11]
        %v457 = vld [vmem:[%s191 + $0x748] sm:$0x11]
        %v458 = vld [vmem:[%s191 + $0x750] sm:$0x11]
        %v459 = vld [vmem:[%s191 + $0x758] sm:$0x11]
        %v460 = vld [vmem:[%s191 + $0x760] sm:$0x11]
        %v461 = vld [vmem:[%s191 + $0x768] sm:$0x11]
        %v462 = vld [vmem:[%s191 + $0x770] sm:$0x11]
        %v463 = vld [vmem:[%s191 + $0x778] sm:$0x11]
        %v464 = vld [vmem:[%s191 + $0x780] sm:$0x11]
        %v465 = vld [vmem:[%s191 + $0x788] sm:$0x11]
        %v466 = vld [vmem:[%s191 + $0x790] sm:$0x11]
        %v467 = vld [vmem:[%s191 + $0x798] sm:$0x11]
        %v468 = vld [vmem:[%s191 + $0x7a0] sm:$0x11]
        %v469 = vld [vmem:[%s191 + $0x7a8] sm:$0x11]
        %v470 = vld [vmem:[%s191 + $0x7b0] sm:$0x11]
        %v471 = vld [vmem:[%s191 + $0x7b8] sm:$0x11]
        %v472 = vld [vmem:[%s191 + $0x7c0] sm:$0x11]
        %v473 = vld [vmem:[%s191 + $0x7c8] sm:$0x11]
        %v474 = vld [vmem:[%s191 + $0x7d0] sm:$0x11]
        %v475 = vld [vmem:[%s191 + $0x7d8] sm:$0x11]
        %v476 = vld [vmem:[%s191 + $0x7e0] sm:$0x11]
        %v477 = vld [vmem:[%s191 + $0x7e8] sm:$0x11]
        %v478 = vld [vmem:[%s191 + $0x7f0] sm:$0x11]
        %v479 = vld [vmem:[%s191 + $0x7f8] sm:$0x11]
        %v480 = vunpack.c.l.bf16 %v224
        %v481 = vunpack.c.h.bf16 %v224
        %v482 = vunpack.c.l.bf16 %v225
        %v483 = vunpack.c.h.bf16 %v225
        %v484 = vunpack.c.l.bf16 %v226
        %v485 = vunpack.c.h.bf16 %v226
        %v486 = vunpack.c.l.bf16 %v227
        %v487 = vunpack.c.h.bf16 %v227
        %v488 = vunpack.c.l.bf16 %v228
        %v489 = vunpack.c.h.bf16 %v228
        %v490 = vunpack.c.l.bf16 %v229
        %v491 = vunpack.c.h.bf16 %v229
        %v492 = vunpack.c.l.bf16 %v230
        %v493 = vunpack.c.h.bf16 %v230
        %v494 = vunpack.c.l.bf16 %v231
        %v495 = vunpack.c.h.bf16 %v231
        %v496 = vunpack.c.l.bf16 %v232
        %v497 = vunpack.c.h.bf16 %v232
        %v498 = vunpack.c.l.bf16 %v233
        %v499 = vunpack.c.h.bf16 %v233
        %v500 = vunpack.c.l.bf16 %v234
        %v501 = vunpack.c.h.bf16 %v234
        %v502 = vunpack.c.l.bf16 %v235
        %v503 = vunpack.c.h.bf16 %v235
        %v504 = vunpack.c.l.bf16 %v236
        %v505 = vunpack.c.h.bf16 %v236
        %v506 = vunpack.c.l.bf16 %v237
        %v507 = vunpack.c.h.bf16 %v237
        %v508 = vunpack.c.l.bf16 %v238
        %v509 = vunpack.c.h.bf16 %v238
        %v510 = vunpack.c.l.bf16 %v239
        %v511 = vunpack.c.h.bf16 %v239
        %v512 = vunpack.c.l.bf16 %v240
        %v513 = vunpack.c.h.bf16 %v240
        %v514 = vunpack.c.l.bf16 %v241
        %v515 = vunpack.c.h.bf16 %v241
        %v516 = vunpack.c.l.bf16 %v242
        %v517 = vunpack.c.h.bf16 %v242
        %v518 = vunpack.c.l.bf16 %v243
        %v519 = vunpack.c.h.bf16 %v243
        %v520 = vunpack.c.l.bf16 %v244
        %v521 = vunpack.c.h.bf16 %v244
        %v522 = vunpack.c.l.bf16 %v245
        %v523 = vunpack.c.h.bf16 %v245
        %v524 = vunpack.c.l.bf16 %v246
        %v525 = vunpack.c.h.bf16 %v246
        %v526 = vunpack.c.l.bf16 %v247
        %v527 = vunpack.c.h.bf16 %v247
        %v528 = vunpack.c.l.bf16 %v248
        %v529 = vunpack.c.h.bf16 %v248
        %v530 = vunpack.c.l.bf16 %v249
        %v531 = vunpack.c.h.bf16 %v249
        %v532 = vunpack.c.l.bf16 %v250
        %v533 = vunpack.c.h.bf16 %v250
        %v534 = vunpack.c.l.bf16 %v251
        %v535 = vunpack.c.h.bf16 %v251
        %v536 = vunpack.c.l.bf16 %v252
        %v537 = vunpack.c.h.bf16 %v252
        %v538 = vunpack.c.l.bf16 %v253
        %v539 = vunpack.c.h.bf16 %v253
        %v540 = vunpack.c.l.bf16 %v254
        %v541 = vunpack.c.h.bf16 %v254
        %v542 = vunpack.c.l.bf16 %v255
        %v543 = vunpack.c.h.bf16 %v255
        %v544 = vunpack.c.l.bf16 %v256
        %v545 = vunpack.c.h.bf16 %v256
        %v546 = vunpack.c.l.bf16 %v257
        %v547 = vunpack.c.h.bf16 %v257
        %v548 = vunpack.c.l.bf16 %v258
        %v549 = vunpack.c.h.bf16 %v258
        %v550 = vunpack.c.l.bf16 %v259
        %v551 = vunpack.c.h.bf16 %v259
        %v552 = vunpack.c.l.bf16 %v260
        %v553 = vunpack.c.h.bf16 %v260
        %v554 = vunpack.c.l.bf16 %v261
        %v555 = vunpack.c.h.bf16 %v261
        %v556 = vunpack.c.l.bf16 %v262
        %v557 = vunpack.c.h.bf16 %v262
        %v558 = vunpack.c.l.bf16 %v263
        %v559 = vunpack.c.h.bf16 %v263
        %v560 = vunpack.c.l.bf16 %v264
        %v561 = vunpack.c.h.bf16 %v264
        %v562 = vunpack.c.l.bf16 %v265
        %v563 = vunpack.c.h.bf16 %v265
        %v564 = vunpack.c.l.bf16 %v266
        %v565 = vunpack.c.h.bf16 %v266
        %v566 = vunpack.c.l.bf16 %v267
        %v567 = vunpack.c.h.bf16 %v267
        %v568 = vunpack.c.l.bf16 %v268
        %v569 = vunpack.c.h.bf16 %v268
        %v570 = vunpack.c.l.bf16 %v269
        %v571 = vunpack.c.h.bf16 %v269
        %v572 = vunpack.c.l.bf16 %v270
        %v573 = vunpack.c.h.bf16 %v270
        %v574 = vunpack.c.l.bf16 %v271
        %v575 = vunpack.c.h.bf16 %v271
        %v576 = vunpack.c.l.bf16 %v272
        %v577 = vunpack.c.h.bf16 %v272
        %v578 = vunpack.c.l.bf16 %v273
        %v579 = vunpack.c.h.bf16 %v273
        %v580 = vunpack.c.l.bf16 %v274
        %v581 = vunpack.c.h.bf16 %v274
        %v582 = vunpack.c.l.bf16 %v275
        %v583 = vunpack.c.h.bf16 %v275
        %v584 = vunpack.c.l.bf16 %v276
        %v585 = vunpack.c.h.bf16 %v276
        %v586 = vunpack.c.l.bf16 %v277
        %v587 = vunpack.c.h.bf16 %v277
        %v588 = vunpack.c.l.bf16 %v278
        %v589 = vunpack.c.h.bf16 %v278
        %v590 = vunpack.c.l.bf16 %v279
        %v591 = vunpack.c.h.bf16 %v279
        %v592 = vunpack.c.l.bf16 %v280
        %v593 = vunpack.c.h.bf16 %v280
        %v594 = vunpack.c.l.bf16 %v281
        %v595 = vunpack.c.h.bf16 %v281
        %v596 = vunpack.c.l.bf16 %v282
        %v597 = vunpack.c.h.bf16 %v282
        %v598 = vunpack.c.l.bf16 %v283
        %v599 = vunpack.c.h.bf16 %v283
        %v600 = vunpack.c.l.bf16 %v284
        %v601 = vunpack.c.h.bf16 %v284
        %v602 = vunpack.c.l.bf16 %v285
        %v603 = vunpack.c.h.bf16 %v285
        %v604 = vunpack.c.l.bf16 %v286
        %v605 = vunpack.c.h.bf16 %v286
        %v606 = vunpack.c.l.bf16 %v287
        %v607 = vunpack.c.h.bf16 %v287
        %v608 = vunpack.c.l.bf16 %v288
        %v609 = vunpack.c.h.bf16 %v288
        %v610 = vunpack.c.l.bf16 %v289
        %v611 = vunpack.c.h.bf16 %v289
        %v612 = vunpack.c.l.bf16 %v290
        %v613 = vunpack.c.h.bf16 %v290
        %v614 = vunpack.c.l.bf16 %v291
        %v615 = vunpack.c.h.bf16 %v291
        %v616 = vunpack.c.l.bf16 %v292
        %v617 = vunpack.c.h.bf16 %v292
        %v618 = vunpack.c.l.bf16 %v293
        %v619 = vunpack.c.h.bf16 %v293
        %v620 = vunpack.c.l.bf16 %v294
        %v621 = vunpack.c.h.bf16 %v294
        %v622 = vunpack.c.l.bf16 %v295
        %v623 = vunpack.c.h.bf16 %v295
        %v624 = vunpack.c.l.bf16 %v296
        %v625 = vunpack.c.h.bf16 %v296
        %v626 = vunpack.c.l.bf16 %v297
        %v627 = vunpack.c.h.bf16 %v297
        %v628 = vunpack.c.l.bf16 %v298
        %v629 = vunpack.c.h.bf16 %v298
        %v630 = vunpack.c.l.bf16 %v299
        %v631 = vunpack.c.h.bf16 %v299
        %v632 = vunpack.c.l.bf16 %v300
        %v633 = vunpack.c.h.bf16 %v300
        %v634 = vunpack.c.l.bf16 %v301
        %v635 = vunpack.c.h.bf16 %v301
        %v636 = vunpack.c.l.bf16 %v302
        %v637 = vunpack.c.h.bf16 %v302
        %v638 = vunpack.c.l.bf16 %v303
        %v639 = vunpack.c.h.bf16 %v303
        %v640 = vunpack.c.l.bf16 %v304
        %v641 = vunpack.c.h.bf16 %v304
        %v642 = vunpack.c.l.bf16 %v305
        %v643 = vunpack.c.h.bf16 %v305
        %v644 = vunpack.c.l.bf16 %v306
        %v645 = vunpack.c.h.bf16 %v306
        %v646 = vunpack.c.l.bf16 %v307
        %v647 = vunpack.c.h.bf16 %v307
        %v648 = vunpack.c.l.bf16 %v308
        %v649 = vunpack.c.h.bf16 %v308
        %v650 = vunpack.c.l.bf16 %v309
        %v651 = vunpack.c.h.bf16 %v309
        %v652 = vunpack.c.l.bf16 %v310
        %v653 = vunpack.c.h.bf16 %v310
        %v654 = vunpack.c.l.bf16 %v311
        %v655 = vunpack.c.h.bf16 %v311
        %v656 = vunpack.c.l.bf16 %v312
        %v657 = vunpack.c.h.bf16 %v312
        %v658 = vunpack.c.l.bf16 %v313
        %v659 = vunpack.c.h.bf16 %v313
        %v660 = vunpack.c.l.bf16 %v314
        %v661 = vunpack.c.h.bf16 %v314
        %v662 = vunpack.c.l.bf16 %v315
        %v663 = vunpack.c.h.bf16 %v315
        %v664 = vunpack.c.l.bf16 %v316
        %v665 = vunpack.c.h.bf16 %v316
        %v666 = vunpack.c.l.bf16 %v317
        %v667 = vunpack.c.h.bf16 %v317
        %v668 = vunpack.c.l.bf16 %v318
        %v669 = vunpack.c.h.bf16 %v318
        %v670 = vunpack.c.l.bf16 %v319
        %v671 = vunpack.c.h.bf16 %v319
        %v672 = vunpack.c.l.bf16 %v320
        %v673 = vunpack.c.h.bf16 %v320
        %v674 = vunpack.c.l.bf16 %v321
        %v675 = vunpack.c.h.bf16 %v321
        %v676 = vunpack.c.l.bf16 %v322
        %v677 = vunpack.c.h.bf16 %v322
        %v678 = vunpack.c.l.bf16 %v323
        %v679 = vunpack.c.h.bf16 %v323
        %v680 = vunpack.c.l.bf16 %v324
        %v681 = vunpack.c.h.bf16 %v324
        %v682 = vunpack.c.l.bf16 %v325
        %v683 = vunpack.c.h.bf16 %v325
        %v684 = vunpack.c.l.bf16 %v326
        %v685 = vunpack.c.h.bf16 %v326
        %v686 = vunpack.c.l.bf16 %v327
        %v687 = vunpack.c.h.bf16 %v327
        %v688 = vunpack.c.l.bf16 %v328
        %v689 = vunpack.c.h.bf16 %v328
        %v690 = vunpack.c.l.bf16 %v329
        %v691 = vunpack.c.h.bf16 %v329
        %v692 = vunpack.c.l.bf16 %v330
        %v693 = vunpack.c.h.bf16 %v330
        %v694 = vunpack.c.l.bf16 %v331
        %v695 = vunpack.c.h.bf16 %v331
        %v696 = vunpack.c.l.bf16 %v332
        %v697 = vunpack.c.h.bf16 %v332
        %v698 = vunpack.c.l.bf16 %v333
        %v699 = vunpack.c.h.bf16 %v333
        %v700 = vunpack.c.l.bf16 %v334
        %v701 = vunpack.c.h.bf16 %v334
        %v702 = vunpack.c.l.bf16 %v335
        %v703 = vunpack.c.h.bf16 %v335
        %v704 = vunpack.c.l.bf16 %v336
        %v705 = vunpack.c.h.bf16 %v336
        %v706 = vunpack.c.l.bf16 %v337
        %v707 = vunpack.c.h.bf16 %v337
        %v708 = vunpack.c.l.bf16 %v338
        %v709 = vunpack.c.h.bf16 %v338
        %v710 = vunpack.c.l.bf16 %v339
        %v711 = vunpack.c.h.bf16 %v339
        %v712 = vunpack.c.l.bf16 %v340
        %v713 = vunpack.c.h.bf16 %v340
        %v714 = vunpack.c.l.bf16 %v341
        %v715 = vunpack.c.h.bf16 %v341
        %v716 = vunpack.c.l.bf16 %v342
        %v717 = vunpack.c.h.bf16 %v342
        %v718 = vunpack.c.l.bf16 %v343
        %v719 = vunpack.c.h.bf16 %v343
        %v720 = vunpack.c.l.bf16 %v344
        %v721 = vunpack.c.h.bf16 %v344
        %v722 = vunpack.c.l.bf16 %v345
        %v723 = vunpack.c.h.bf16 %v345
        %v724 = vunpack.c.l.bf16 %v346
        %v725 = vunpack.c.h.bf16 %v346
        %v726 = vunpack.c.l.bf16 %v347
        %v727 = vunpack.c.h.bf16 %v347
        %v728 = vunpack.c.l.bf16 %v348
        %v729 = vunpack.c.h.bf16 %v348
        %v730 = vunpack.c.l.bf16 %v349
        %v731 = vunpack.c.h.bf16 %v349
        %v732 = vunpack.c.l.bf16 %v350
        %v733 = vunpack.c.h.bf16 %v350
        %v734 = vunpack.c.l.bf16 %v351
        %v735 = vunpack.c.h.bf16 %v351
        %v736 = vunpack.c.l.bf16 %v352
        %v737 = vunpack.c.h.bf16 %v352
        %v738 = vunpack.c.l.bf16 %v353
        %v739 = vunpack.c.h.bf16 %v353
        %v740 = vunpack.c.l.bf16 %v354
        %v741 = vunpack.c.h.bf16 %v354
        %v742 = vunpack.c.l.bf16 %v355
        %v743 = vunpack.c.h.bf16 %v355
        %v744 = vunpack.c.l.bf16 %v356
        %v745 = vunpack.c.h.bf16 %v356
        %v746 = vunpack.c.l.bf16 %v357
        %v747 = vunpack.c.h.bf16 %v357
        %v748 = vunpack.c.l.bf16 %v358
        %v749 = vunpack.c.h.bf16 %v358
        %v750 = vunpack.c.l.bf16 %v359
        %v751 = vunpack.c.h.bf16 %v359
        %v752 = vunpack.c.l.bf16 %v360
        %v753 = vunpack.c.h.bf16 %v360
        %v754 = vunpack.c.l.bf16 %v361
        %v755 = vunpack.c.h.bf16 %v361
        %v756 = vunpack.c.l.bf16 %v362
        %v757 = vunpack.c.h.bf16 %v362
        %v758 = vunpack.c.l.bf16 %v363
        %v759 = vunpack.c.h.bf16 %v363
        %v760 = vunpack.c.l.bf16 %v364
        %v761 = vunpack.c.h.bf16 %v364
        %v762 = vunpack.c.l.bf16 %v365
        %v763 = vunpack.c.h.bf16 %v365
        %v764 = vunpack.c.l.bf16 %v366
        %v765 = vunpack.c.h.bf16 %v366
        %v766 = vunpack.c.l.bf16 %v367
        %v767 = vunpack.c.h.bf16 %v367
        %v768 = vunpack.c.l.bf16 %v368
        %v769 = vunpack.c.h.bf16 %v368
        %v770 = vunpack.c.l.bf16 %v369
        %v771 = vunpack.c.h.bf16 %v369
        %v772 = vunpack.c.l.bf16 %v370
        %v773 = vunpack.c.h.bf16 %v370
        %v774 = vunpack.c.l.bf16 %v371
        %v775 = vunpack.c.h.bf16 %v371
        %v776 = vunpack.c.l.bf16 %v372
        %v777 = vunpack.c.h.bf16 %v372
        %v778 = vunpack.c.l.bf16 %v373
        %v779 = vunpack.c.h.bf16 %v373
        %v780 = vunpack.c.l.bf16 %v374
        %v781 = vunpack.c.h.bf16 %v374
        %v782 = vunpack.c.l.bf16 %v375
        %v783 = vunpack.c.h.bf16 %v375
        %v784 = vunpack.c.l.bf16 %v376
        %v785 = vunpack.c.h.bf16 %v376
        %v786 = vunpack.c.l.bf16 %v377
        %v787 = vunpack.c.h.bf16 %v377
        %v788 = vunpack.c.l.bf16 %v378
        %v789 = vunpack.c.h.bf16 %v378
        %v790 = vunpack.c.l.bf16 %v379
        %v791 = vunpack.c.h.bf16 %v379
        %v792 = vunpack.c.l.bf16 %v380
        %v793 = vunpack.c.h.bf16 %v380
        %v794 = vunpack.c.l.bf16 %v381
        %v795 = vunpack.c.h.bf16 %v381
        %v796 = vunpack.c.l.bf16 %v382
        %v797 = vunpack.c.h.bf16 %v382
        %v798 = vunpack.c.l.bf16 %v383
        %v799 = vunpack.c.h.bf16 %v383
        %v800 = vunpack.c.l.bf16 %v384
        %v801 = vunpack.c.h.bf16 %v384
        %v802 = vunpack.c.l.bf16 %v385
        %v803 = vunpack.c.h.bf16 %v385
        %v804 = vunpack.c.l.bf16 %v386
        %v805 = vunpack.c.h.bf16 %v386
        %v806 = vunpack.c.l.bf16 %v387
        %v807 = vunpack.c.h.bf16 %v387
        %v808 = vunpack.c.l.bf16 %v388
        %v809 = vunpack.c.h.bf16 %v388
        %v810 = vunpack.c.l.bf16 %v389
        %v811 = vunpack.c.h.bf16 %v389
        %v812 = vunpack.c.l.bf16 %v390
        %v813 = vunpack.c.h.bf16 %v390
        %v814 = vunpack.c.l.bf16 %v391
        %v815 = vunpack.c.h.bf16 %v391
        %v816 = vunpack.c.l.bf16 %v392
        %v817 = vunpack.c.h.bf16 %v392
        %v818 = vunpack.c.l.bf16 %v393
        %v819 = vunpack.c.h.bf16 %v393
        %v820 = vunpack.c.l.bf16 %v394
        %v821 = vunpack.c.h.bf16 %v394
        %v822 = vunpack.c.l.bf16 %v395
        %v823 = vunpack.c.h.bf16 %v395
        %v824 = vunpack.c.l.bf16 %v396
        %v825 = vunpack.c.h.bf16 %v396
        %v826 = vunpack.c.l.bf16 %v397
        %v827 = vunpack.c.h.bf16 %v397
        %v828 = vunpack.c.l.bf16 %v398
        %v829 = vunpack.c.h.bf16 %v398
        %v830 = vunpack.c.l.bf16 %v399
        %v831 = vunpack.c.h.bf16 %v399
        %v832 = vunpack.c.l.bf16 %v400
        %v833 = vunpack.c.h.bf16 %v400
        %v834 = vunpack.c.l.bf16 %v401
        %v835 = vunpack.c.h.bf16 %v401
        %v836 = vunpack.c.l.bf16 %v402
        %v837 = vunpack.c.h.bf16 %v402
        %v838 = vunpack.c.l.bf16 %v403
        %v839 = vunpack.c.h.bf16 %v403
        %v840 = vunpack.c.l.bf16 %v404
        %v841 = vunpack.c.h.bf16 %v404
        %v842 = vunpack.c.l.bf16 %v405
        %v843 = vunpack.c.h.bf16 %v405
        %v844 = vunpack.c.l.bf16 %v406
        %v845 = vunpack.c.h.bf16 %v406
        %v846 = vunpack.c.l.bf16 %v407
        %v847 = vunpack.c.h.bf16 %v407
        %v848 = vunpack.c.l.bf16 %v408
        %v849 = vunpack.c.h.bf16 %v408
        %v850 = vunpack.c.l.bf16 %v409
        %v851 = vunpack.c.h.bf16 %v409
        %v852 = vunpack.c.l.bf16 %v410
        %v853 = vunpack.c.h.bf16 %v410
        %v854 = vunpack.c.l.bf16 %v411
        %v855 = vunpack.c.h.bf16 %v411
        %v856 = vunpack.c.l.bf16 %v412
        %v857 = vunpack.c.h.bf16 %v412
        %v858 = vunpack.c.l.bf16 %v413
        %v859 = vunpack.c.h.bf16 %v413
        %v860 = vunpack.c.l.bf16 %v414
        %v861 = vunpack.c.h.bf16 %v414
        %v862 = vunpack.c.l.bf16 %v415
        %v863 = vunpack.c.h.bf16 %v415
        %v864 = vunpack.c.l.bf16 %v416
        %v865 = vunpack.c.h.bf16 %v416
        %v866 = vunpack.c.l.bf16 %v417
        %v867 = vunpack.c.h.bf16 %v417
        %v868 = vunpack.c.l.bf16 %v418
        %v869 = vunpack.c.h.bf16 %v418
        %v870 = vunpack.c.l.bf16 %v419
        %v871 = vunpack.c.h.bf16 %v419
        %v872 = vunpack.c.l.bf16 %v420
        %v873 = vunpack.c.h.bf16 %v420
        %v874 = vunpack.c.l.bf16 %v421
        %v875 = vunpack.c.h.bf16 %v421
        %v876 = vunpack.c.l.bf16 %v422
        %v877 = vunpack.c.h.bf16 %v422
        %v878 = vunpack.c.l.bf16 %v423
        %v879 = vunpack.c.h.bf16 %v423
        %v880 = vunpack.c.l.bf16 %v424
        %v881 = vunpack.c.h.bf16 %v424
        %v882 = vunpack.c.l.bf16 %v425
        %v883 = vunpack.c.h.bf16 %v425
        %v884 = vunpack.c.l.bf16 %v426
        %v885 = vunpack.c.h.bf16 %v426
        %v886 = vunpack.c.l.bf16 %v427
        %v887 = vunpack.c.h.bf16 %v427
        %v888 = vunpack.c.l.bf16 %v428
        %v889 = vunpack.c.h.bf16 %v428
        %v890 = vunpack.c.l.bf16 %v429
        %v891 = vunpack.c.h.bf16 %v429
        %v892 = vunpack.c.l.bf16 %v430
        %v893 = vunpack.c.h.bf16 %v430
        %v894 = vunpack.c.l.bf16 %v431
        %v895 = vunpack.c.h.bf16 %v431
        %v896 = vunpack.c.l.bf16 %v432
        %v897 = vunpack.c.h.bf16 %v432
        %v898 = vunpack.c.l.bf16 %v433
        %v899 = vunpack.c.h.bf16 %v433
        %v900 = vunpack.c.l.bf16 %v434
        %v901 = vunpack.c.h.bf16 %v434
        %v902 = vunpack.c.l.bf16 %v435
        %v903 = vunpack.c.h.bf16 %v435
        %v904 = vunpack.c.l.bf16 %v436
        %v905 = vunpack.c.h.bf16 %v436
        %v906 = vunpack.c.l.bf16 %v437
        %v907 = vunpack.c.h.bf16 %v437
        %v908 = vunpack.c.l.bf16 %v438
        %v909 = vunpack.c.h.bf16 %v438
        %v910 = vunpack.c.l.bf16 %v439
        %v911 = vunpack.c.h.bf16 %v439
        %v912 = vunpack.c.l.bf16 %v440
        %v913 = vunpack.c.h.bf16 %v440
        %v914 = vunpack.c.l.bf16 %v441
        %v915 = vunpack.c.h.bf16 %v441
        %v916 = vunpack.c.l.bf16 %v442
        %v917 = vunpack.c.h.bf16 %v442
        %v918 = vunpack.c.l.bf16 %v443
        %v919 = vunpack.c.h.bf16 %v443
        %v920 = vunpack.c.l.bf16 %v444
        %v921 = vunpack.c.h.bf16 %v444
        %v922 = vunpack.c.l.bf16 %v445
        %v923 = vunpack.c.h.bf16 %v445
        %v924 = vunpack.c.l.bf16 %v446
        %v925 = vunpack.c.h.bf16 %v446
        %v926 = vunpack.c.l.bf16 %v447
        %v927 = vunpack.c.h.bf16 %v447
        %v928 = vunpack.c.l.bf16 %v448
        %v929 = vunpack.c.h.bf16 %v448
        %v930 = vunpack.c.l.bf16 %v449
        %v931 = vunpack.c.h.bf16 %v449
        %v932 = vunpack.c.l.bf16 %v450
        %v933 = vunpack.c.h.bf16 %v450
        %v934 = vunpack.c.l.bf16 %v451
        %v935 = vunpack.c.h.bf16 %v451
        %v936 = vunpack.c.l.bf16 %v452
        %v937 = vunpack.c.h.bf16 %v452
        %v938 = vunpack.c.l.bf16 %v453
        %v939 = vunpack.c.h.bf16 %v453
        %v940 = vunpack.c.l.bf16 %v454
        %v941 = vunpack.c.h.bf16 %v454
        %v942 = vunpack.c.l.bf16 %v455
        %v943 = vunpack.c.h.bf16 %v455
        %v944 = vunpack.c.l.bf16 %v456
        %v945 = vunpack.c.h.bf16 %v456
        %v946 = vunpack.c.l.bf16 %v457
        %v947 = vunpack.c.h.bf16 %v457
        %v948 = vunpack.c.l.bf16 %v458
        %v949 = vunpack.c.h.bf16 %v458
        %v950 = vunpack.c.l.bf16 %v459
        %v951 = vunpack.c.h.bf16 %v459
        %v952 = vunpack.c.l.bf16 %v460
        %v953 = vunpack.c.h.bf16 %v460
        %v954 = vunpack.c.l.bf16 %v461
        %v955 = vunpack.c.h.bf16 %v461
        %v956 = vunpack.c.l.bf16 %v462
        %v957 = vunpack.c.h.bf16 %v462
        %v958 = vunpack.c.l.bf16 %v463
        %v959 = vunpack.c.h.bf16 %v463
        %v960 = vunpack.c.l.bf16 %v464
        %v961 = vunpack.c.h.bf16 %v464
        %v962 = vunpack.c.l.bf16 %v465
        %v963 = vunpack.c.h.bf16 %v465
        %v964 = vunpack.c.l.bf16 %v466
        %v965 = vunpack.c.h.bf16 %v466
        %v966 = vunpack.c.l.bf16 %v467
        %v967 = vunpack.c.h.bf16 %v467
        %v968 = vunpack.c.l.bf16 %v468
        %v969 = vunpack.c.h.bf16 %v468
        %v970 = vunpack.c.l.bf16 %v469
        %v971 = vunpack.c.h.bf16 %v469
        %v972 = vunpack.c.l.bf16 %v470
        %v973 = vunpack.c.h.bf16 %v470
        %v974 = vunpack.c.l.bf16 %v471
        %v975 = vunpack.c.h.bf16 %v471
        %v976 = vunpack.c.l.bf16 %v472
        %v977 = vunpack.c.h.bf16 %v472
        %v978 = vunpack.c.l.bf16 %v473
        %v979 = vunpack.c.h.bf16 %v473
        %v980 = vunpack.c.l.bf16 %v474
        %v981 = vunpack.c.h.bf16 %v474
        %v982 = vunpack.c.l.bf16 %v475
        %v983 = vunpack.c.h.bf16 %v475
        %v984 = vunpack.c.l.bf16 %v476
        %v985 = vunpack.c.h.bf16 %v476
        %v986 = vunpack.c.l.bf16 %v477
        %v987 = vunpack.c.h.bf16 %v477
        %v988 = vunpack.c.l.bf16 %v478
        %v989 = vunpack.c.h.bf16 %v478
        %v990 = vunpack.c.l.bf16 %v479
        %v991 = vunpack.c.h.bf16 %v479
        %v992 = vld [vmem:[%s182] ss:$2 sm:$0xff]
        %s993 = scalar_lea.vmem %s182, 16 [#allocation2]
        %v994 = vld [vmem:[%s993] ss:$2 sm:$0xff]
        %s995 = scalar_lea.vmem %s182, 32 [#allocation2]
        %v996 = vld [vmem:[%s995] ss:$2 sm:$0xff]
        %s997 = scalar_lea.vmem %s182, 48 [#allocation2]
        %v998 = vld [vmem:[%s997] ss:$2 sm:$0xff]
        %s999 = scalar_lea.vmem %s182, 64 [#allocation2]
        %v1000 = vld [vmem:[%s999] ss:$2 sm:$0xff]
        %s1001 = scalar_lea.vmem %s182, 80 [#allocation2]
        %v1002 = vld [vmem:[%s1001] ss:$2 sm:$0xff]
        %s1003 = scalar_lea.vmem %s182, 96 [#allocation2]
        %v1004 = vld [vmem:[%s1003] ss:$2 sm:$0xff]
        %s1005 = scalar_lea.vmem %s182, 112 [#allocation2]
        %v1006 = vld [vmem:[%s1005] ss:$2 sm:$0xff]
        %s1007 = scalar_lea.vmem %s182, 128 [#allocation2]
        %v1008 = vld [vmem:[%s1007] ss:$2 sm:$0xff]
        %s1009 = scalar_lea.vmem %s182, 144 [#allocation2]
        %v1010 = vld [vmem:[%s1009] ss:$2 sm:$0xff]
        %s1011 = scalar_lea.vmem %s182, 160 [#allocation2]
        %v1012 = vld [vmem:[%s1011] ss:$2 sm:$0xff]
        %s1013 = scalar_lea.vmem %s182, 176 [#allocation2]
        %v1014 = vld [vmem:[%s1013] ss:$2 sm:$0xff]
        %s1015 = scalar_lea.vmem %s182, 192 [#allocation2]
        %v1016 = vld [vmem:[%s1015] ss:$2 sm:$0xff]
        %s1017 = scalar_lea.vmem %s182, 208 [#allocation2]
        %v1018 = vld [vmem:[%s1017] ss:$2 sm:$0xff]
        %s1019 = scalar_lea.vmem %s182, 224 [#allocation2]
        %v1020 = vld [vmem:[%s1019] ss:$2 sm:$0xff]
        %s1021 = scalar_lea.vmem %s182, 240 [#allocation2]
        %v1022 = vld [vmem:[%s1021] ss:$2 sm:$0xff]
        %s1023 = scalar_lea.vmem %s182, 256 [#allocation2]
        %v1024 = vld [vmem:[%s1023] ss:$2 sm:$0xff]
        %s1025 = scalar_lea.vmem %s182, 272 [#allocation2]
        %v1026 = vld [vmem:[%s1025] ss:$2 sm:$0xff]
        %s1027 = scalar_lea.vmem %s182, 288 [#allocation2]
        %v1028 = vld [vmem:[%s1027] ss:$2 sm:$0xff]
        %s1029 = scalar_lea.vmem %s182, 304 [#allocation2]
        %v1030 = vld [vmem:[%s1029] ss:$2 sm:$0xff]
        %s1031 = scalar_lea.vmem %s182, 320 [#allocation2]
        %v1032 = vld [vmem:[%s1031] ss:$2 sm:$0xff]
        %s1033 = scalar_lea.vmem %s182, 336 [#allocation2]
        %v1034 = vld [vmem:[%s1033] ss:$2 sm:$0xff]
        %s1035 = scalar_lea.vmem %s182, 352 [#allocation2]
        %v1036 = vld [vmem:[%s1035] ss:$2 sm:$0xff]
        %s1037 = scalar_lea.vmem %s182, 368 [#allocation2]
        %v1038 = vld [vmem:[%s1037] ss:$2 sm:$0xff]
        %s1039 = scalar_lea.vmem %s182, 384 [#allocation2]
        %v1040 = vld [vmem:[%s1039] ss:$2 sm:$0xff]
        %s1041 = scalar_lea.vmem %s182, 400 [#allocation2]
        %v1042 = vld [vmem:[%s1041] ss:$2 sm:$0xff]
        %s1043 = scalar_lea.vmem %s182, 416 [#allocation2]
        %v1044 = vld [vmem:[%s1043] ss:$2 sm:$0xff]
        %s1045 = scalar_lea.vmem %s182, 432 [#allocation2]
        %v1046 = vld [vmem:[%s1045] ss:$2 sm:$0xff]
        %s1047 = scalar_lea.vmem %s182, 448 [#allocation2]
        %v1048 = vld [vmem:[%s1047] ss:$2 sm:$0xff]
        %s1049 = scalar_lea.vmem %s182, 464 [#allocation2]
        %v1050 = vld [vmem:[%s1049] ss:$2 sm:$0xff]
        %s1051 = scalar_lea.vmem %s182, 480 [#allocation2]
        %v1052 = vld [vmem:[%s1051] ss:$2 sm:$0xff]
        %s1053 = scalar_lea.vmem %s182, 496 [#allocation2]
        %v1054 = vld [vmem:[%s1053] ss:$2 sm:$0xff]
        %v1087 = vlaneseq
        %v1088 = vshrl.u32 %v1087, 7
        %v1089 = vsub.s32 0, %v1088
        %v1090 = vrot.slane %v992, %v1089
        %v1091 = vlaneseq
        %v1092 = vshrl.u32 %v1091, 7
        %v1093 = vsub.s32 1, %v1092
        %v1094 = vrot.slane %v992, %v1093
        %v1095 = vlaneseq
        %v1096 = vshrl.u32 %v1095, 7
        %v1097 = vsub.s32 2, %v1096
        %v1098 = vrot.slane %v992, %v1097
        %v1099 = vlaneseq
        %v1100 = vshrl.u32 %v1099, 7
        %v1101 = vsub.s32 3, %v1100
        %v1102 = vrot.slane %v992, %v1101
        %v1103 = vlaneseq
        %v1104 = vshrl.u32 %v1103, 7
        %v1105 = vsub.s32 4, %v1104
        %v1106 = vrot.slane %v992, %v1105
        %v1107 = vlaneseq
        %v1108 = vshrl.u32 %v1107, 7
        %v1109 = vsub.s32 5, %v1108
        %v1110 = vrot.slane %v992, %v1109
        %v1111 = vlaneseq
        %v1112 = vshrl.u32 %v1111, 7
        %v1113 = vsub.s32 6, %v1112
        %v1114 = vrot.slane %v992, %v1113
        %v1115 = vlaneseq
        %v1116 = vshrl.u32 %v1115, 7
        %v1117 = vsub.s32 7, %v1116
        %v1118 = vrot.slane %v992, %v1117
        %v1119 = vlaneseq
        %v1120 = vshrl.u32 %v1119, 7
        %v1121 = vsub.s32 0, %v1120
        %v1122 = vrot.slane %v994, %v1121
        %v1123 = vlaneseq
        %v1124 = vshrl.u32 %v1123, 7
        %v1125 = vsub.s32 1, %v1124
        %v1126 = vrot.slane %v994, %v1125
        %v1127 = vlaneseq
        %v1128 = vshrl.u32 %v1127, 7
        %v1129 = vsub.s32 2, %v1128
        %v1130 = vrot.slane %v994, %v1129
        %v1131 = vlaneseq
        %v1132 = vshrl.u32 %v1131, 7
        %v1133 = vsub.s32 3, %v1132
        %v1134 = vrot.slane %v994, %v1133
        %v1135 = vlaneseq
        %v1136 = vshrl.u32 %v1135, 7
        %v1137 = vsub.s32 4, %v1136
        %v1138 = vrot.slane %v994, %v1137
        %v1139 = vlaneseq
        %v1140 = vshrl.u32 %v1139, 7
        %v1141 = vsub.s32 5, %v1140
        %v1142 = vrot.slane %v994, %v1141
        %v1143 = vlaneseq
        %v1144 = vshrl.u32 %v1143, 7
        %v1145 = vsub.s32 6, %v1144
        %v1146 = vrot.slane %v994, %v1145
        %v1147 = vlaneseq
        %v1148 = vshrl.u32 %v1147, 7
        %v1149 = vsub.s32 7, %v1148
        %v1150 = vrot.slane %v994, %v1149
        %v1151 = vlaneseq
        %v1152 = vshrl.u32 %v1151, 7
        %v1153 = vsub.s32 0, %v1152
        %v1154 = vrot.slane %v996, %v1153
        %v1155 = vlaneseq
        %v1156 = vshrl.u32 %v1155, 7
        %v1157 = vsub.s32 1, %v1156
        %v1158 = vrot.slane %v996, %v1157
        %v1159 = vlaneseq
        %v1160 = vshrl.u32 %v1159, 7
        %v1161 = vsub.s32 2, %v1160
        %v1162 = vrot.slane %v996, %v1161
        %v1163 = vlaneseq
        %v1164 = vshrl.u32 %v1163, 7
        %v1165 = vsub.s32 3, %v1164
        %v1166 = vrot.slane %v996, %v1165
        %v1167 = vlaneseq
        %v1168 = vshrl.u32 %v1167, 7
        %v1169 = vsub.s32 4, %v1168
        %v1170 = vrot.slane %v996, %v1169
        %v1171 = vlaneseq
        %v1172 = vshrl.u32 %v1171, 7
        %v1173 = vsub.s32 5, %v1172
        %v1174 = vrot.slane %v996, %v1173
        %v1175 = vlaneseq
        %v1176 = vshrl.u32 %v1175, 7
        %v1177 = vsub.s32 6, %v1176
        %v1178 = vrot.slane %v996, %v1177
        %v1179 = vlaneseq
        %v1180 = vshrl.u32 %v1179, 7
        %v1181 = vsub.s32 7, %v1180
        %v1182 = vrot.slane %v996, %v1181
        %v1183 = vlaneseq
        %v1184 = vshrl.u32 %v1183, 7
        %v1185 = vsub.s32 0, %v1184
        %v1186 = vrot.slane %v998, %v1185
        %v1187 = vlaneseq
        %v1188 = vshrl.u32 %v1187, 7
        %v1189 = vsub.s32 1, %v1188
        %v1190 = vrot.slane %v998, %v1189
        %v1191 = vlaneseq
        %v1192 = vshrl.u32 %v1191, 7
        %v1193 = vsub.s32 2, %v1192
        %v1194 = vrot.slane %v998, %v1193
        %v1195 = vlaneseq
        %v1196 = vshrl.u32 %v1195, 7
        %v1197 = vsub.s32 3, %v1196
        %v1198 = vrot.slane %v998, %v1197
        %v1199 = vlaneseq
        %v1200 = vshrl.u32 %v1199, 7
        %v1201 = vsub.s32 4, %v1200
        %v1202 = vrot.slane %v998, %v1201
        %v1203 = vlaneseq
        %v1204 = vshrl.u32 %v1203, 7
        %v1205 = vsub.s32 5, %v1204
        %v1206 = vrot.slane %v998, %v1205
        %v1207 = vlaneseq
        %v1208 = vshrl.u32 %v1207, 7
        %v1209 = vsub.s32 6, %v1208
        %v1210 = vrot.slane %v998, %v1209
        %v1211 = vlaneseq
        %v1212 = vshrl.u32 %v1211, 7
        %v1213 = vsub.s32 7, %v1212
        %v1214 = vrot.slane %v998, %v1213
        %v1215 = vlaneseq
        %v1216 = vshrl.u32 %v1215, 7
        %v1217 = vsub.s32 0, %v1216
        %v1218 = vrot.slane %v1000, %v1217
        %v1219 = vlaneseq
        %v1220 = vshrl.u32 %v1219, 7
        %v1221 = vsub.s32 1, %v1220
        %v1222 = vrot.slane %v1000, %v1221
        %v1223 = vlaneseq
        %v1224 = vshrl.u32 %v1223, 7
        %v1225 = vsub.s32 2, %v1224
        %v1226 = vrot.slane %v1000, %v1225
        %v1227 = vlaneseq
        %v1228 = vshrl.u32 %v1227, 7
        %v1229 = vsub.s32 3, %v1228
        %v1230 = vrot.slane %v1000, %v1229
        %v1231 = vlaneseq
        %v1232 = vshrl.u32 %v1231, 7
        %v1233 = vsub.s32 4, %v1232
        %v1234 = vrot.slane %v1000, %v1233
        %v1235 = vlaneseq
        %v1236 = vshrl.u32 %v1235, 7
        %v1237 = vsub.s32 5, %v1236
        %v1238 = vrot.slane %v1000, %v1237
        %v1239 = vlaneseq
        %v1240 = vshrl.u32 %v1239, 7
        %v1241 = vsub.s32 6, %v1240
        %v1242 = vrot.slane %v1000, %v1241
        %v1243 = vlaneseq
        %v1244 = vshrl.u32 %v1243, 7
        %v1245 = vsub.s32 7, %v1244
        %v1246 = vrot.slane %v1000, %v1245
        %v1247 = vlaneseq
        %v1248 = vshrl.u32 %v1247, 7
        %v1249 = vsub.s32 0, %v1248
        %v1250 = vrot.slane %v1002, %v1249
        %v1251 = vlaneseq
        %v1252 = vshrl.u32 %v1251, 7
        %v1253 = vsub.s32 1, %v1252
        %v1254 = vrot.slane %v1002, %v1253
        %v1255 = vlaneseq
        %v1256 = vshrl.u32 %v1255, 7
        %v1257 = vsub.s32 2, %v1256
        %v1258 = vrot.slane %v1002, %v1257
        %v1259 = vlaneseq
        %v1260 = vshrl.u32 %v1259, 7
        %v1261 = vsub.s32 3, %v1260
        %v1262 = vrot.slane %v1002, %v1261
        %v1263 = vlaneseq
        %v1264 = vshrl.u32 %v1263, 7
        %v1265 = vsub.s32 4, %v1264
        %v1266 = vrot.slane %v1002, %v1265
        %v1267 = vlaneseq
        %v1268 = vshrl.u32 %v1267, 7
        %v1269 = vsub.s32 5, %v1268
        %v1270 = vrot.slane %v1002, %v1269
        %v1271 = vlaneseq
        %v1272 = vshrl.u32 %v1271, 7
        %v1273 = vsub.s32 6, %v1272
        %v1274 = vrot.slane %v1002, %v1273
        %v1275 = vlaneseq
        %v1276 = vshrl.u32 %v1275, 7
        %v1277 = vsub.s32 7, %v1276
        %v1278 = vrot.slane %v1002, %v1277
        %v1279 = vlaneseq
        %v1280 = vshrl.u32 %v1279, 7
        %v1281 = vsub.s32 0, %v1280
        %v1282 = vrot.slane %v1004, %v1281
        %v1283 = vlaneseq
        %v1284 = vshrl.u32 %v1283, 7
        %v1285 = vsub.s32 1, %v1284
        %v1286 = vrot.slane %v1004, %v1285
        %v1287 = vlaneseq
        %v1288 = vshrl.u32 %v1287, 7
        %v1289 = vsub.s32 2, %v1288
        %v1290 = vrot.slane %v1004, %v1289
        %v1291 = vlaneseq
        %v1292 = vshrl.u32 %v1291, 7
        %v1293 = vsub.s32 3, %v1292
        %v1294 = vrot.slane %v1004, %v1293
        %v1295 = vlaneseq
        %v1296 = vshrl.u32 %v1295, 7
        %v1297 = vsub.s32 4, %v1296
        %v1298 = vrot.slane %v1004, %v1297
        %v1299 = vlaneseq
        %v1300 = vshrl.u32 %v1299, 7
        %v1301 = vsub.s32 5, %v1300
        %v1302 = vrot.slane %v1004, %v1301
        %v1303 = vlaneseq
        %v1304 = vshrl.u32 %v1303, 7
        %v1305 = vsub.s32 6, %v1304
        %v1306 = vrot.slane %v1004, %v1305
        %v1307 = vlaneseq
        %v1308 = vshrl.u32 %v1307, 7
        %v1309 = vsub.s32 7, %v1308
        %v1310 = vrot.slane %v1004, %v1309
        %v1311 = vlaneseq
        %v1312 = vshrl.u32 %v1311, 7
        %v1313 = vsub.s32 0, %v1312
        %v1314 = vrot.slane %v1006, %v1313
        %v1315 = vlaneseq
        %v1316 = vshrl.u32 %v1315, 7
        %v1317 = vsub.s32 1, %v1316
        %v1318 = vrot.slane %v1006, %v1317
        %v1319 = vlaneseq
        %v1320 = vshrl.u32 %v1319, 7
        %v1321 = vsub.s32 2, %v1320
        %v1322 = vrot.slane %v1006, %v1321
        %v1323 = vlaneseq
        %v1324 = vshrl.u32 %v1323, 7
        %v1325 = vsub.s32 3, %v1324
        %v1326 = vrot.slane %v1006, %v1325
        %v1327 = vlaneseq
        %v1328 = vshrl.u32 %v1327, 7
        %v1329 = vsub.s32 4, %v1328
        %v1330 = vrot.slane %v1006, %v1329
        %v1331 = vlaneseq
        %v1332 = vshrl.u32 %v1331, 7
        %v1333 = vsub.s32 5, %v1332
        %v1334 = vrot.slane %v1006, %v1333
        %v1335 = vlaneseq
        %v1336 = vshrl.u32 %v1335, 7
        %v1337 = vsub.s32 6, %v1336
        %v1338 = vrot.slane %v1006, %v1337
        %v1339 = vlaneseq
        %v1340 = vshrl.u32 %v1339, 7
        %v1341 = vsub.s32 7, %v1340
        %v1342 = vrot.slane %v1006, %v1341
        %v1343 = vlaneseq
        %v1344 = vshrl.u32 %v1343, 7
        %v1345 = vsub.s32 0, %v1344
        %v1346 = vrot.slane %v1008, %v1345
        %v1347 = vlaneseq
        %v1348 = vshrl.u32 %v1347, 7
        %v1349 = vsub.s32 1, %v1348
        %v1350 = vrot.slane %v1008, %v1349
        %v1351 = vlaneseq
        %v1352 = vshrl.u32 %v1351, 7
        %v1353 = vsub.s32 2, %v1352
        %v1354 = vrot.slane %v1008, %v1353
        %v1355 = vlaneseq
        %v1356 = vshrl.u32 %v1355, 7
        %v1357 = vsub.s32 3, %v1356
        %v1358 = vrot.slane %v1008, %v1357
        %v1359 = vlaneseq
        %v1360 = vshrl.u32 %v1359, 7
        %v1361 = vsub.s32 4, %v1360
        %v1362 = vrot.slane %v1008, %v1361
        %v1363 = vlaneseq
        %v1364 = vshrl.u32 %v1363, 7
        %v1365 = vsub.s32 5, %v1364
        %v1366 = vrot.slane %v1008, %v1365
        %v1367 = vlaneseq
        %v1368 = vshrl.u32 %v1367, 7
        %v1369 = vsub.s32 6, %v1368
        %v1370 = vrot.slane %v1008, %v1369
        %v1371 = vlaneseq
        %v1372 = vshrl.u32 %v1371, 7
        %v1373 = vsub.s32 7, %v1372
        %v1374 = vrot.slane %v1008, %v1373
        %v1375 = vlaneseq
        %v1376 = vshrl.u32 %v1375, 7
        %v1377 = vsub.s32 0, %v1376
        %v1378 = vrot.slane %v1010, %v1377
        %v1379 = vlaneseq
        %v1380 = vshrl.u32 %v1379, 7
        %v1381 = vsub.s32 1, %v1380
        %v1382 = vrot.slane %v1010, %v1381
        %v1383 = vlaneseq
        %v1384 = vshrl.u32 %v1383, 7
        %v1385 = vsub.s32 2, %v1384
        %v1386 = vrot.slane %v1010, %v1385
        %v1387 = vlaneseq
        %v1388 = vshrl.u32 %v1387, 7
        %v1389 = vsub.s32 3, %v1388
        %v1390 = vrot.slane %v1010, %v1389
        %v1391 = vlaneseq
        %v1392 = vshrl.u32 %v1391, 7
        %v1393 = vsub.s32 4, %v1392
        %v1394 = vrot.slane %v1010, %v1393
        %v1395 = vlaneseq
        %v1396 = vshrl.u32 %v1395, 7
        %v1397 = vsub.s32 5, %v1396
        %v1398 = vrot.slane %v1010, %v1397
        %v1399 = vlaneseq
        %v1400 = vshrl.u32 %v1399, 7
        %v1401 = vsub.s32 6, %v1400
        %v1402 = vrot.slane %v1010, %v1401
        %v1403 = vlaneseq
        %v1404 = vshrl.u32 %v1403, 7
        %v1405 = vsub.s32 7, %v1404
        %v1406 = vrot.slane %v1010, %v1405
        %v1407 = vlaneseq
        %v1408 = vshrl.u32 %v1407, 7
        %v1409 = vsub.s32 0, %v1408
        %v1410 = vrot.slane %v1012, %v1409
        %v1411 = vlaneseq
        %v1412 = vshrl.u32 %v1411, 7
        %v1413 = vsub.s32 1, %v1412
        %v1414 = vrot.slane %v1012, %v1413
        %v1415 = vlaneseq
        %v1416 = vshrl.u32 %v1415, 7
        %v1417 = vsub.s32 2, %v1416
        %v1418 = vrot.slane %v1012, %v1417
        %v1419 = vlaneseq
        %v1420 = vshrl.u32 %v1419, 7
        %v1421 = vsub.s32 3, %v1420
        %v1422 = vrot.slane %v1012, %v1421
        %v1423 = vlaneseq
        %v1424 = vshrl.u32 %v1423, 7
        %v1425 = vsub.s32 4, %v1424
        %v1426 = vrot.slane %v1012, %v1425
        %v1427 = vlaneseq
        %v1428 = vshrl.u32 %v1427, 7
        %v1429 = vsub.s32 5, %v1428
        %v1430 = vrot.slane %v1012, %v1429
        %v1431 = vlaneseq
        %v1432 = vshrl.u32 %v1431, 7
        %v1433 = vsub.s32 6, %v1432
        %v1434 = vrot.slane %v1012, %v1433
        %v1435 = vlaneseq
        %v1436 = vshrl.u32 %v1435, 7
        %v1437 = vsub.s32 7, %v1436
        %v1438 = vrot.slane %v1012, %v1437
        %v1439 = vlaneseq
        %v1440 = vshrl.u32 %v1439, 7
        %v1441 = vsub.s32 0, %v1440
        %v1442 = vrot.slane %v1014, %v1441
        %v1443 = vlaneseq
        %v1444 = vshrl.u32 %v1443, 7
        %v1445 = vsub.s32 1, %v1444
        %v1446 = vrot.slane %v1014, %v1445
        %v1447 = vlaneseq
        %v1448 = vshrl.u32 %v1447, 7
        %v1449 = vsub.s32 2, %v1448
        %v1450 = vrot.slane %v1014, %v1449
        %v1451 = vlaneseq
        %v1452 = vshrl.u32 %v1451, 7
        %v1453 = vsub.s32 3, %v1452
        %v1454 = vrot.slane %v1014, %v1453
        %v1455 = vlaneseq
        %v1456 = vshrl.u32 %v1455, 7
        %v1457 = vsub.s32 4, %v1456
        %v1458 = vrot.slane %v1014, %v1457
        %v1459 = vlaneseq
        %v1460 = vshrl.u32 %v1459, 7
        %v1461 = vsub.s32 5, %v1460
        %v1462 = vrot.slane %v1014, %v1461
        %v1463 = vlaneseq
        %v1464 = vshrl.u32 %v1463, 7
        %v1465 = vsub.s32 6, %v1464
        %v1466 = vrot.slane %v1014, %v1465
        %v1467 = vlaneseq
        %v1468 = vshrl.u32 %v1467, 7
        %v1469 = vsub.s32 7, %v1468
        %v1470 = vrot.slane %v1014, %v1469
        %v1471 = vlaneseq
        %v1472 = vshrl.u32 %v1471, 7
        %v1473 = vsub.s32 0, %v1472
        %v1474 = vrot.slane %v1016, %v1473
        %v1475 = vlaneseq
        %v1476 = vshrl.u32 %v1475, 7
        %v1477 = vsub.s32 1, %v1476
        %v1478 = vrot.slane %v1016, %v1477
        %v1479 = vlaneseq
        %v1480 = vshrl.u32 %v1479, 7
        %v1481 = vsub.s32 2, %v1480
        %v1482 = vrot.slane %v1016, %v1481
        %v1483 = vlaneseq
        %v1484 = vshrl.u32 %v1483, 7
        %v1485 = vsub.s32 3, %v1484
        %v1486 = vrot.slane %v1016, %v1485
        %v1487 = vlaneseq
        %v1488 = vshrl.u32 %v1487, 7
        %v1489 = vsub.s32 4, %v1488
        %v1490 = vrot.slane %v1016, %v1489
        %v1491 = vlaneseq
        %v1492 = vshrl.u32 %v1491, 7
        %v1493 = vsub.s32 5, %v1492
        %v1494 = vrot.slane %v1016, %v1493
        %v1495 = vlaneseq
        %v1496 = vshrl.u32 %v1495, 7
        %v1497 = vsub.s32 6, %v1496
        %v1498 = vrot.slane %v1016, %v1497
        %v1499 = vlaneseq
        %v1500 = vshrl.u32 %v1499, 7
        %v1501 = vsub.s32 7, %v1500
        %v1502 = vrot.slane %v1016, %v1501
        %v1503 = vlaneseq
        %v1504 = vshrl.u32 %v1503, 7
        %v1505 = vsub.s32 0, %v1504
        %v1506 = vrot.slane %v1018, %v1505
        %v1507 = vlaneseq
        %v1508 = vshrl.u32 %v1507, 7
        %v1509 = vsub.s32 1, %v1508
        %v1510 = vrot.slane %v1018, %v1509
        %v1511 = vlaneseq
        %v1512 = vshrl.u32 %v1511, 7
        %v1513 = vsub.s32 2, %v1512
        %v1514 = vrot.slane %v1018, %v1513
        %v1515 = vlaneseq
        %v1516 = vshrl.u32 %v1515, 7
        %v1517 = vsub.s32 3, %v1516
        %v1518 = vrot.slane %v1018, %v1517
        %v1519 = vlaneseq
        %v1520 = vshrl.u32 %v1519, 7
        %v1521 = vsub.s32 4, %v1520
        %v1522 = vrot.slane %v1018, %v1521
        %v1523 = vlaneseq
        %v1524 = vshrl.u32 %v1523, 7
        %v1525 = vsub.s32 5, %v1524
        %v1526 = vrot.slane %v1018, %v1525
        %v1527 = vlaneseq
        %v1528 = vshrl.u32 %v1527, 7
        %v1529 = vsub.s32 6, %v1528
        %v1530 = vrot.slane %v1018, %v1529
        %v1531 = vlaneseq
        %v1532 = vshrl.u32 %v1531, 7
        %v1533 = vsub.s32 7, %v1532
        %v1534 = vrot.slane %v1018, %v1533
        %v1535 = vlaneseq
        %v1536 = vshrl.u32 %v1535, 7
        %v1537 = vsub.s32 0, %v1536
        %v1538 = vrot.slane %v1020, %v1537
        %v1539 = vlaneseq
        %v1540 = vshrl.u32 %v1539, 7
        %v1541 = vsub.s32 1, %v1540
        %v1542 = vrot.slane %v1020, %v1541
        %v1543 = vlaneseq
        %v1544 = vshrl.u32 %v1543, 7
        %v1545 = vsub.s32 2, %v1544
        %v1546 = vrot.slane %v1020, %v1545
        %v1547 = vlaneseq
        %v1548 = vshrl.u32 %v1547, 7
        %v1549 = vsub.s32 3, %v1548
        %v1550 = vrot.slane %v1020, %v1549
        %v1551 = vlaneseq
        %v1552 = vshrl.u32 %v1551, 7
        %v1553 = vsub.s32 4, %v1552
        %v1554 = vrot.slane %v1020, %v1553
        %v1555 = vlaneseq
        %v1556 = vshrl.u32 %v1555, 7
        %v1557 = vsub.s32 5, %v1556
        %v1558 = vrot.slane %v1020, %v1557
        %v1559 = vlaneseq
        %v1560 = vshrl.u32 %v1559, 7
        %v1561 = vsub.s32 6, %v1560
        %v1562 = vrot.slane %v1020, %v1561
        %v1563 = vlaneseq
        %v1564 = vshrl.u32 %v1563, 7
        %v1565 = vsub.s32 7, %v1564
        %v1566 = vrot.slane %v1020, %v1565
        %v1567 = vlaneseq
        %v1568 = vshrl.u32 %v1567, 7
        %v1569 = vsub.s32 0, %v1568
        %v1570 = vrot.slane %v1022, %v1569
        %v1571 = vlaneseq
        %v1572 = vshrl.u32 %v1571, 7
        %v1573 = vsub.s32 1, %v1572
        %v1574 = vrot.slane %v1022, %v1573
        %v1575 = vlaneseq
        %v1576 = vshrl.u32 %v1575, 7
        %v1577 = vsub.s32 2, %v1576
        %v1578 = vrot.slane %v1022, %v1577
        %v1579 = vlaneseq
        %v1580 = vshrl.u32 %v1579, 7
        %v1581 = vsub.s32 3, %v1580
        %v1582 = vrot.slane %v1022, %v1581
        %v1583 = vlaneseq
        %v1584 = vshrl.u32 %v1583, 7
        %v1585 = vsub.s32 4, %v1584
        %v1586 = vrot.slane %v1022, %v1585
        %v1587 = vlaneseq
        %v1588 = vshrl.u32 %v1587, 7
        %v1589 = vsub.s32 5, %v1588
        %v1590 = vrot.slane %v1022, %v1589
        %v1591 = vlaneseq
        %v1592 = vshrl.u32 %v1591, 7
        %v1593 = vsub.s32 6, %v1592
        %v1594 = vrot.slane %v1022, %v1593
        %v1595 = vlaneseq
        %v1596 = vshrl.u32 %v1595, 7
        %v1597 = vsub.s32 7, %v1596
        %v1598 = vrot.slane %v1022, %v1597
        %v1599 = vlaneseq
        %v1600 = vshrl.u32 %v1599, 7
        %v1601 = vsub.s32 0, %v1600
        %v1602 = vrot.slane %v1024, %v1601
        %v1603 = vlaneseq
        %v1604 = vshrl.u32 %v1603, 7
        %v1605 = vsub.s32 1, %v1604
        %v1606 = vrot.slane %v1024, %v1605
        %v1607 = vlaneseq
        %v1608 = vshrl.u32 %v1607, 7
        %v1609 = vsub.s32 2, %v1608
        %v1610 = vrot.slane %v1024, %v1609
        %v1611 = vlaneseq
        %v1612 = vshrl.u32 %v1611, 7
        %v1613 = vsub.s32 3, %v1612
        %v1614 = vrot.slane %v1024, %v1613
        %v1615 = vlaneseq
        %v1616 = vshrl.u32 %v1615, 7
        %v1617 = vsub.s32 4, %v1616
        %v1618 = vrot.slane %v1024, %v1617
        %v1619 = vlaneseq
        %v1620 = vshrl.u32 %v1619, 7
        %v1621 = vsub.s32 5, %v1620
        %v1622 = vrot.slane %v1024, %v1621
        %v1623 = vlaneseq
        %v1624 = vshrl.u32 %v1623, 7
        %v1625 = vsub.s32 6, %v1624
        %v1626 = vrot.slane %v1024, %v1625
        %v1627 = vlaneseq
        %v1628 = vshrl.u32 %v1627, 7
        %v1629 = vsub.s32 7, %v1628
        %v1630 = vrot.slane %v1024, %v1629
        %v1631 = vlaneseq
        %v1632 = vshrl.u32 %v1631, 7
        %v1633 = vsub.s32 0, %v1632
        %v1634 = vrot.slane %v1026, %v1633
        %v1635 = vlaneseq
        %v1636 = vshrl.u32 %v1635, 7
        %v1637 = vsub.s32 1, %v1636
        %v1638 = vrot.slane %v1026, %v1637
        %v1639 = vlaneseq
        %v1640 = vshrl.u32 %v1639, 7
        %v1641 = vsub.s32 2, %v1640
        %v1642 = vrot.slane %v1026, %v1641
        %v1643 = vlaneseq
        %v1644 = vshrl.u32 %v1643, 7
        %v1645 = vsub.s32 3, %v1644
        %v1646 = vrot.slane %v1026, %v1645
        %v1647 = vlaneseq
        %v1648 = vshrl.u32 %v1647, 7
        %v1649 = vsub.s32 4, %v1648
        %v1650 = vrot.slane %v1026, %v1649
        %v1651 = vlaneseq
        %v1652 = vshrl.u32 %v1651, 7
        %v1653 = vsub.s32 5, %v1652
        %v1654 = vrot.slane %v1026, %v1653
        %v1655 = vlaneseq
        %v1656 = vshrl.u32 %v1655, 7
        %v1657 = vsub.s32 6, %v1656
        %v1658 = vrot.slane %v1026, %v1657
        %v1659 = vlaneseq
        %v1660 = vshrl.u32 %v1659, 7
        %v1661 = vsub.s32 7, %v1660
        %v1662 = vrot.slane %v1026, %v1661
        %v1663 = vlaneseq
        %v1664 = vshrl.u32 %v1663, 7
        %v1665 = vsub.s32 0, %v1664
        %v1666 = vrot.slane %v1028, %v1665
        %v1667 = vlaneseq
        %v1668 = vshrl.u32 %v1667, 7
        %v1669 = vsub.s32 1, %v1668
        %v1670 = vrot.slane %v1028, %v1669
        %v1671 = vlaneseq
        %v1672 = vshrl.u32 %v1671, 7
        %v1673 = vsub.s32 2, %v1672
        %v1674 = vrot.slane %v1028, %v1673
        %v1675 = vlaneseq
        %v1676 = vshrl.u32 %v1675, 7
        %v1677 = vsub.s32 3, %v1676
        %v1678 = vrot.slane %v1028, %v1677
        %v1679 = vlaneseq
        %v1680 = vshrl.u32 %v1679, 7
        %v1681 = vsub.s32 4, %v1680
        %v1682 = vrot.slane %v1028, %v1681
        %v1683 = vlaneseq
        %v1684 = vshrl.u32 %v1683, 7
        %v1685 = vsub.s32 5, %v1684
        %v1686 = vrot.slane %v1028, %v1685
        %v1687 = vlaneseq
        %v1688 = vshrl.u32 %v1687, 7
        %v1689 = vsub.s32 6, %v1688
        %v1690 = vrot.slane %v1028, %v1689
        %v1691 = vlaneseq
        %v1692 = vshrl.u32 %v1691, 7
        %v1693 = vsub.s32 7, %v1692
        %v1694 = vrot.slane %v1028, %v1693
        %v1695 = vlaneseq
        %v1696 = vshrl.u32 %v1695, 7
        %v1697 = vsub.s32 0, %v1696
        %v1698 = vrot.slane %v1030, %v1697
        %v1699 = vlaneseq
        %v1700 = vshrl.u32 %v1699, 7
        %v1701 = vsub.s32 1, %v1700
        %v1702 = vrot.slane %v1030, %v1701
        %v1703 = vlaneseq
        %v1704 = vshrl.u32 %v1703, 7
        %v1705 = vsub.s32 2, %v1704
        %v1706 = vrot.slane %v1030, %v1705
        %v1707 = vlaneseq
        %v1708 = vshrl.u32 %v1707, 7
        %v1709 = vsub.s32 3, %v1708
        %v1710 = vrot.slane %v1030, %v1709
        %v1711 = vlaneseq
        %v1712 = vshrl.u32 %v1711, 7
        %v1713 = vsub.s32 4, %v1712
        %v1714 = vrot.slane %v1030, %v1713
        %v1715 = vlaneseq
        %v1716 = vshrl.u32 %v1715, 7
        %v1717 = vsub.s32 5, %v1716
        %v1718 = vrot.slane %v1030, %v1717
        %v1719 = vlaneseq
        %v1720 = vshrl.u32 %v1719, 7
        %v1721 = vsub.s32 6, %v1720
        %v1722 = vrot.slane %v1030, %v1721
        %v1723 = vlaneseq
        %v1724 = vshrl.u32 %v1723, 7
        %v1725 = vsub.s32 7, %v1724
        %v1726 = vrot.slane %v1030, %v1725
        %v1727 = vlaneseq
        %v1728 = vshrl.u32 %v1727, 7
        %v1729 = vsub.s32 0, %v1728
        %v1730 = vrot.slane %v1032, %v1729
        %v1731 = vlaneseq
        %v1732 = vshrl.u32 %v1731, 7
        %v1733 = vsub.s32 1, %v1732
        %v1734 = vrot.slane %v1032, %v1733
        %v1735 = vlaneseq
        %v1736 = vshrl.u32 %v1735, 7
        %v1737 = vsub.s32 2, %v1736
        %v1738 = vrot.slane %v1032, %v1737
        %v1739 = vlaneseq
        %v1740 = vshrl.u32 %v1739, 7
        %v1741 = vsub.s32 3, %v1740
        %v1742 = vrot.slane %v1032, %v1741
        %v1743 = vlaneseq
        %v1744 = vshrl.u32 %v1743, 7
        %v1745 = vsub.s32 4, %v1744
        %v1746 = vrot.slane %v1032, %v1745
        %v1747 = vlaneseq
        %v1748 = vshrl.u32 %v1747, 7
        %v1749 = vsub.s32 5, %v1748
        %v1750 = vrot.slane %v1032, %v1749
        %v1751 = vlaneseq
        %v1752 = vshrl.u32 %v1751, 7
        %v1753 = vsub.s32 6, %v1752
        %v1754 = vrot.slane %v1032, %v1753
        %v1755 = vlaneseq
        %v1756 = vshrl.u32 %v1755, 7
        %v1757 = vsub.s32 7, %v1756
        %v1758 = vrot.slane %v1032, %v1757
        %v1759 = vlaneseq
        %v1760 = vshrl.u32 %v1759, 7
        %v1761 = vsub.s32 0, %v1760
        %v1762 = vrot.slane %v1034, %v1761
        %v1763 = vlaneseq
        %v1764 = vshrl.u32 %v1763, 7
        %v1765 = vsub.s32 1, %v1764
        %v1766 = vrot.slane %v1034, %v1765
        %v1767 = vlaneseq
        %v1768 = vshrl.u32 %v1767, 7
        %v1769 = vsub.s32 2, %v1768
        %v1770 = vrot.slane %v1034, %v1769
        %v1771 = vlaneseq
        %v1772 = vshrl.u32 %v1771, 7
        %v1773 = vsub.s32 3, %v1772
        %v1774 = vrot.slane %v1034, %v1773
        %v1775 = vlaneseq
        %v1776 = vshrl.u32 %v1775, 7
        %v1777 = vsub.s32 4, %v1776
        %v1778 = vrot.slane %v1034, %v1777
        %v1779 = vlaneseq
        %v1780 = vshrl.u32 %v1779, 7
        %v1781 = vsub.s32 5, %v1780
        %v1782 = vrot.slane %v1034, %v1781
        %v1783 = vlaneseq
        %v1784 = vshrl.u32 %v1783, 7
        %v1785 = vsub.s32 6, %v1784
        %v1786 = vrot.slane %v1034, %v1785
        %v1787 = vlaneseq
        %v1788 = vshrl.u32 %v1787, 7
        %v1789 = vsub.s32 7, %v1788
        %v1790 = vrot.slane %v1034, %v1789
        %v1791 = vlaneseq
        %v1792 = vshrl.u32 %v1791, 7
        %v1793 = vsub.s32 0, %v1792
        %v1794 = vrot.slane %v1036, %v1793
        %v1795 = vlaneseq
        %v1796 = vshrl.u32 %v1795, 7
        %v1797 = vsub.s32 1, %v1796
        %v1798 = vrot.slane %v1036, %v1797
        %v1799 = vlaneseq
        %v1800 = vshrl.u32 %v1799, 7
        %v1801 = vsub.s32 2, %v1800
        %v1802 = vrot.slane %v1036, %v1801
        %v1803 = vlaneseq
        %v1804 = vshrl.u32 %v1803, 7
        %v1805 = vsub.s32 3, %v1804
        %v1806 = vrot.slane %v1036, %v1805
        %v1807 = vlaneseq
        %v1808 = vshrl.u32 %v1807, 7
        %v1809 = vsub.s32 4, %v1808
        %v1810 = vrot.slane %v1036, %v1809
        %v1811 = vlaneseq
        %v1812 = vshrl.u32 %v1811, 7
        %v1813 = vsub.s32 5, %v1812
        %v1814 = vrot.slane %v1036, %v1813
        %v1815 = vlaneseq
        %v1816 = vshrl.u32 %v1815, 7
        %v1817 = vsub.s32 6, %v1816
        %v1818 = vrot.slane %v1036, %v1817
        %v1819 = vlaneseq
        %v1820 = vshrl.u32 %v1819, 7
        %v1821 = vsub.s32 7, %v1820
        %v1822 = vrot.slane %v1036, %v1821
        %v1823 = vlaneseq
        %v1824 = vshrl.u32 %v1823, 7
        %v1825 = vsub.s32 0, %v1824
        %v1826 = vrot.slane %v1038, %v1825
        %v1827 = vlaneseq
        %v1828 = vshrl.u32 %v1827, 7
        %v1829 = vsub.s32 1, %v1828
        %v1830 = vrot.slane %v1038, %v1829
        %v1831 = vlaneseq
        %v1832 = vshrl.u32 %v1831, 7
        %v1833 = vsub.s32 2, %v1832
        %v1834 = vrot.slane %v1038, %v1833
        %v1835 = vlaneseq
        %v1836 = vshrl.u32 %v1835, 7
        %v1837 = vsub.s32 3, %v1836
        %v1838 = vrot.slane %v1038, %v1837
        %v1839 = vlaneseq
        %v1840 = vshrl.u32 %v1839, 7
        %v1841 = vsub.s32 4, %v1840
        %v1842 = vrot.slane %v1038, %v1841
        %v1843 = vlaneseq
        %v1844 = vshrl.u32 %v1843, 7
        %v1845 = vsub.s32 5, %v1844
        %v1846 = vrot.slane %v1038, %v1845
        %v1847 = vlaneseq
        %v1848 = vshrl.u32 %v1847, 7
        %v1849 = vsub.s32 6, %v1848
        %v1850 = vrot.slane %v1038, %v1849
        %v1851 = vlaneseq
        %v1852 = vshrl.u32 %v1851, 7
        %v1853 = vsub.s32 7, %v1852
        %v1854 = vrot.slane %v1038, %v1853
        %v1855 = vlaneseq
        %v1856 = vshrl.u32 %v1855, 7
        %v1857 = vsub.s32 0, %v1856
        %v1858 = vrot.slane %v1040, %v1857
        %v1859 = vlaneseq
        %v1860 = vshrl.u32 %v1859, 7
        %v1861 = vsub.s32 1, %v1860
        %v1862 = vrot.slane %v1040, %v1861
        %v1863 = vlaneseq
        %v1864 = vshrl.u32 %v1863, 7
        %v1865 = vsub.s32 2, %v1864
        %v1866 = vrot.slane %v1040, %v1865
        %v1867 = vlaneseq
        %v1868 = vshrl.u32 %v1867, 7
        %v1869 = vsub.s32 3, %v1868
        %v1870 = vrot.slane %v1040, %v1869
        %v1871 = vlaneseq
        %v1872 = vshrl.u32 %v1871, 7
        %v1873 = vsub.s32 4, %v1872
        %v1874 = vrot.slane %v1040, %v1873
        %v1875 = vlaneseq
        %v1876 = vshrl.u32 %v1875, 7
        %v1877 = vsub.s32 5, %v1876
        %v1878 = vrot.slane %v1040, %v1877
        %v1879 = vlaneseq
        %v1880 = vshrl.u32 %v1879, 7
        %v1881 = vsub.s32 6, %v1880
        %v1882 = vrot.slane %v1040, %v1881
        %v1883 = vlaneseq
        %v1884 = vshrl.u32 %v1883, 7
        %v1885 = vsub.s32 7, %v1884
        %v1886 = vrot.slane %v1040, %v1885
        %v1887 = vlaneseq
        %v1888 = vshrl.u32 %v1887, 7
        %v1889 = vsub.s32 0, %v1888
        %v1890 = vrot.slane %v1042, %v1889
        %v1891 = vlaneseq
        %v1892 = vshrl.u32 %v1891, 7
        %v1893 = vsub.s32 1, %v1892
        %v1894 = vrot.slane %v1042, %v1893
        %v1895 = vlaneseq
        %v1896 = vshrl.u32 %v1895, 7
        %v1897 = vsub.s32 2, %v1896
        %v1898 = vrot.slane %v1042, %v1897
        %v1899 = vlaneseq
        %v1900 = vshrl.u32 %v1899, 7
        %v1901 = vsub.s32 3, %v1900
        %v1902 = vrot.slane %v1042, %v1901
        %v1903 = vlaneseq
        %v1904 = vshrl.u32 %v1903, 7
        %v1905 = vsub.s32 4, %v1904
        %v1906 = vrot.slane %v1042, %v1905
        %v1907 = vlaneseq
        %v1908 = vshrl.u32 %v1907, 7
        %v1909 = vsub.s32 5, %v1908
        %v1910 = vrot.slane %v1042, %v1909
        %v1911 = vlaneseq
        %v1912 = vshrl.u32 %v1911, 7
        %v1913 = vsub.s32 6, %v1912
        %v1914 = vrot.slane %v1042, %v1913
        %v1915 = vlaneseq
        %v1916 = vshrl.u32 %v1915, 7
        %v1917 = vsub.s32 7, %v1916
        %v1918 = vrot.slane %v1042, %v1917
        %v1919 = vlaneseq
        %v1920 = vshrl.u32 %v1919, 7
        %v1921 = vsub.s32 0, %v1920
        %v1922 = vrot.slane %v1044, %v1921
        %v1923 = vlaneseq
        %v1924 = vshrl.u32 %v1923, 7
        %v1925 = vsub.s32 1, %v1924
        %v1926 = vrot.slane %v1044, %v1925
        %v1927 = vlaneseq
        %v1928 = vshrl.u32 %v1927, 7
        %v1929 = vsub.s32 2, %v1928
        %v1930 = vrot.slane %v1044, %v1929
        %v1931 = vlaneseq
        %v1932 = vshrl.u32 %v1931, 7
        %v1933 = vsub.s32 3, %v1932
        %v1934 = vrot.slane %v1044, %v1933
        %v1935 = vlaneseq
        %v1936 = vshrl.u32 %v1935, 7
        %v1937 = vsub.s32 4, %v1936
        %v1938 = vrot.slane %v1044, %v1937
        %v1939 = vlaneseq
        %v1940 = vshrl.u32 %v1939, 7
        %v1941 = vsub.s32 5, %v1940
        %v1942 = vrot.slane %v1044, %v1941
        %v1943 = vlaneseq
        %v1944 = vshrl.u32 %v1943, 7
        %v1945 = vsub.s32 6, %v1944
        %v1946 = vrot.slane %v1044, %v1945
        %v1947 = vlaneseq
        %v1948 = vshrl.u32 %v1947, 7
        %v1949 = vsub.s32 7, %v1948
        %v1950 = vrot.slane %v1044, %v1949
        %v1951 = vlaneseq
        %v1952 = vshrl.u32 %v1951, 7
        %v1953 = vsub.s32 0, %v1952
        %v1954 = vrot.slane %v1046, %v1953
        %v1955 = vlaneseq
        %v1956 = vshrl.u32 %v1955, 7
        %v1957 = vsub.s32 1, %v1956
        %v1958 = vrot.slane %v1046, %v1957
        %v1959 = vlaneseq
        %v1960 = vshrl.u32 %v1959, 7
        %v1961 = vsub.s32 2, %v1960
        %v1962 = vrot.slane %v1046, %v1961
        %v1963 = vlaneseq
        %v1964 = vshrl.u32 %v1963, 7
        %v1965 = vsub.s32 3, %v1964
        %v1966 = vrot.slane %v1046, %v1965
        %v1967 = vlaneseq
        %v1968 = vshrl.u32 %v1967, 7
        %v1969 = vsub.s32 4, %v1968
        %v1970 = vrot.slane %v1046, %v1969
        %v1971 = vlaneseq
        %v1972 = vshrl.u32 %v1971, 7
        %v1973 = vsub.s32 5, %v1972
        %v1974 = vrot.slane %v1046, %v1973
        %v1975 = vlaneseq
        %v1976 = vshrl.u32 %v1975, 7
        %v1977 = vsub.s32 6, %v1976
        %v1978 = vrot.slane %v1046, %v1977
        %v1979 = vlaneseq
        %v1980 = vshrl.u32 %v1979, 7
        %v1981 = vsub.s32 7, %v1980
        %v1982 = vrot.slane %v1046, %v1981
        %v1983 = vlaneseq
        %v1984 = vshrl.u32 %v1983, 7
        %v1985 = vsub.s32 0, %v1984
        %v1986 = vrot.slane %v1048, %v1985
        %v1987 = vlaneseq
        %v1988 = vshrl.u32 %v1987, 7
        %v1989 = vsub.s32 1, %v1988
        %v1990 = vrot.slane %v1048, %v1989
        %v1991 = vlaneseq
        %v1992 = vshrl.u32 %v1991, 7
        %v1993 = vsub.s32 2, %v1992
        %v1994 = vrot.slane %v1048, %v1993
        %v1995 = vlaneseq
        %v1996 = vshrl.u32 %v1995, 7
        %v1997 = vsub.s32 3, %v1996
        %v1998 = vrot.slane %v1048, %v1997
        %v1999 = vlaneseq
        %v2000 = vshrl.u32 %v1999, 7
        %v2001 = vsub.s32 4, %v2000
        %v2002 = vrot.slane %v1048, %v2001
        %v2003 = vlaneseq
        %v2004 = vshrl.u32 %v2003, 7
        %v2005 = vsub.s32 5, %v2004
        %v2006 = vrot.slane %v1048, %v2005
        %v2007 = vlaneseq
        %v2008 = vshrl.u32 %v2007, 7
        %v2009 = vsub.s32 6, %v2008
        %v2010 = vrot.slane %v1048, %v2009
        %v2011 = vlaneseq
        %v2012 = vshrl.u32 %v2011, 7
        %v2013 = vsub.s32 7, %v2012
        %v2014 = vrot.slane %v1048, %v2013
        %v2015 = vlaneseq
        %v2016 = vshrl.u32 %v2015, 7
        %v2017 = vsub.s32 0, %v2016
        %v2018 = vrot.slane %v1050, %v2017
        %v2019 = vlaneseq
        %v2020 = vshrl.u32 %v2019, 7
        %v2021 = vsub.s32 1, %v2020
        %v2022 = vrot.slane %v1050, %v2021
        %v2023 = vlaneseq
        %v2024 = vshrl.u32 %v2023, 7
        %v2025 = vsub.s32 2, %v2024
        %v2026 = vrot.slane %v1050, %v2025
        %v2027 = vlaneseq
        %v2028 = vshrl.u32 %v2027, 7
        %v2029 = vsub.s32 3, %v2028
        %v2030 = vrot.slane %v1050, %v2029
        %v2031 = vlaneseq
        %v2032 = vshrl.u32 %v2031, 7
        %v2033 = vsub.s32 4, %v2032
        %v2034 = vrot.slane %v1050, %v2033
        %v2035 = vlaneseq
        %v2036 = vshrl.u32 %v2035, 7
        %v2037 = vsub.s32 5, %v2036
        %v2038 = vrot.slane %v1050, %v2037
        %v2039 = vlaneseq
        %v2040 = vshrl.u32 %v2039, 7
        %v2041 = vsub.s32 6, %v2040
        %v2042 = vrot.slane %v1050, %v2041
        %v2043 = vlaneseq
        %v2044 = vshrl.u32 %v2043, 7
        %v2045 = vsub.s32 7, %v2044
        %v2046 = vrot.slane %v1050, %v2045
        %v2047 = vlaneseq
        %v2048 = vshrl.u32 %v2047, 7
        %v2049 = vsub.s32 0, %v2048
        %v2050 = vrot.slane %v1052, %v2049
        %v2051 = vlaneseq
        %v2052 = vshrl.u32 %v2051, 7
        %v2053 = vsub.s32 1, %v2052
        %v2054 = vrot.slane %v1052, %v2053
        %v2055 = vlaneseq
        %v2056 = vshrl.u32 %v2055, 7
        %v2057 = vsub.s32 2, %v2056
        %v2058 = vrot.slane %v1052, %v2057
        %v2059 = vlaneseq
        %v2060 = vshrl.u32 %v2059, 7
        %v2061 = vsub.s32 3, %v2060
        %v2062 = vrot.slane %v1052, %v2061
        %v2063 = vlaneseq
        %v2064 = vshrl.u32 %v2063, 7
        %v2065 = vsub.s32 4, %v2064
        %v2066 = vrot.slane %v1052, %v2065
        %v2067 = vlaneseq
        %v2068 = vshrl.u32 %v2067, 7
        %v2069 = vsub.s32 5, %v2068
        %v2070 = vrot.slane %v1052, %v2069
        %v2071 = vlaneseq
        %v2072 = vshrl.u32 %v2071, 7
        %v2073 = vsub.s32 6, %v2072
        %v2074 = vrot.slane %v1052, %v2073
        %v2075 = vlaneseq
        %v2076 = vshrl.u32 %v2075, 7
        %v2077 = vsub.s32 7, %v2076
        %v2078 = vrot.slane %v1052, %v2077
        %v2079 = vlaneseq
        %v2080 = vshrl.u32 %v2079, 7
        %v2081 = vsub.s32 0, %v2080
        %v2082 = vrot.slane %v1054, %v2081
        %v2083 = vlaneseq
        %v2084 = vshrl.u32 %v2083, 7
        %v2085 = vsub.s32 1, %v2084
        %v2086 = vrot.slane %v1054, %v2085
        %v2087 = vlaneseq
        %v2088 = vshrl.u32 %v2087, 7
        %v2089 = vsub.s32 2, %v2088
        %v2090 = vrot.slane %v1054, %v2089
        %v2091 = vlaneseq
        %v2092 = vshrl.u32 %v2091, 7
        %v2093 = vsub.s32 3, %v2092
        %v2094 = vrot.slane %v1054, %v2093
        %v2095 = vlaneseq
        %v2096 = vshrl.u32 %v2095, 7
        %v2097 = vsub.s32 4, %v2096
        %v2098 = vrot.slane %v1054, %v2097
        %v2099 = vlaneseq
        %v2100 = vshrl.u32 %v2099, 7
        %v2101 = vsub.s32 5, %v2100
        %v2102 = vrot.slane %v1054, %v2101
        %v2103 = vlaneseq
        %v2104 = vshrl.u32 %v2103, 7
        %v2105 = vsub.s32 6, %v2104
        %v2106 = vrot.slane %v1054, %v2105
        %v2107 = vlaneseq
        %v2108 = vshrl.u32 %v2107, 7
        %v2109 = vsub.s32 7, %v2108
        %v2110 = vrot.slane %v1054, %v2109
        %v2367 = vmul.f32 %v480, %v1090
        %v2368 = vmul.f32 %v481, %v1094
        %v2369 = vmul.f32 %v482, %v1098
        %v2370 = vmul.f32 %v483, %v1102
        %v2371 = vmul.f32 %v484, %v1106
        %v2372 = vmul.f32 %v485, %v1110
        %v2373 = vmul.f32 %v486, %v1114
        %v2374 = vmul.f32 %v487, %v1118
        %v2375 = vmul.f32 %v488, %v1122
        %v2376 = vmul.f32 %v489, %v1126
        %v2377 = vmul.f32 %v490, %v1130
        %v2378 = vmul.f32 %v491, %v1134
        %v2379 = vmul.f32 %v492, %v1138
        %v2380 = vmul.f32 %v493, %v1142
        %v2381 = vmul.f32 %v494, %v1146
        %v2382 = vmul.f32 %v495, %v1150
        %v2383 = vmul.f32 %v496, %v1154
        %v2384 = vmul.f32 %v497, %v1158
        %v2385 = vmul.f32 %v498, %v1162
        %v2386 = vmul.f32 %v499, %v1166
        %v2387 = vmul.f32 %v500, %v1170
        %v2388 = vmul.f32 %v501, %v1174
        %v2389 = vmul.f32 %v502, %v1178
        %v2390 = vmul.f32 %v503, %v1182
        %v2391 = vmul.f32 %v504, %v1186
        %v2392 = vmul.f32 %v505, %v1190
        %v2393 = vmul.f32 %v506, %v1194
        %v2394 = vmul.f32 %v507, %v1198
        %v2395 = vmul.f32 %v508, %v1202
        %v2396 = vmul.f32 %v509, %v1206
        %v2397 = vmul.f32 %v510, %v1210
        %v2398 = vmul.f32 %v511, %v1214
        %v2399 = vmul.f32 %v512, %v1218
        %v2400 = vmul.f32 %v513, %v1222
        %v2401 = vmul.f32 %v514, %v1226
        %v2402 = vmul.f32 %v515, %v1230
        %v2403 = vmul.f32 %v516, %v1234
        %v2404 = vmul.f32 %v517, %v1238
        %v2405 = vmul.f32 %v518, %v1242
        %v2406 = vmul.f32 %v519, %v1246
        %v2407 = vmul.f32 %v520, %v1250
        %v2408 = vmul.f32 %v521, %v1254
        %v2409 = vmul.f32 %v522, %v1258
        %v2410 = vmul.f32 %v523, %v1262
        %v2411 = vmul.f32 %v524, %v1266
        %v2412 = vmul.f32 %v525, %v1270
        %v2413 = vmul.f32 %v526, %v1274
        %v2414 = vmul.f32 %v527, %v1278
        %v2415 = vmul.f32 %v528, %v1282
        %v2416 = vmul.f32 %v529, %v1286
        %v2417 = vmul.f32 %v530, %v1290
        %v2418 = vmul.f32 %v531, %v1294
        %v2419 = vmul.f32 %v532, %v1298
        %v2420 = vmul.f32 %v533, %v1302
        %v2421 = vmul.f32 %v534, %v1306
        %v2422 = vmul.f32 %v535, %v1310
        %v2423 = vmul.f32 %v536, %v1314
        %v2424 = vmul.f32 %v537, %v1318
        %v2425 = vmul.f32 %v538, %v1322
        %v2426 = vmul.f32 %v539, %v1326
        %v2427 = vmul.f32 %v540, %v1330
        %v2428 = vmul.f32 %v541, %v1334
        %v2429 = vmul.f32 %v542, %v1338
        %v2430 = vmul.f32 %v543, %v1342
        %v2431 = vmul.f32 %v544, %v1346
        %v2432 = vmul.f32 %v545, %v1350
        %v2433 = vmul.f32 %v546, %v1354
        %v2434 = vmul.f32 %v547, %v1358
        %v2435 = vmul.f32 %v548, %v1362
        %v2436 = vmul.f32 %v549, %v1366
        %v2437 = vmul.f32 %v550, %v1370
        %v2438 = vmul.f32 %v551, %v1374
        %v2439 = vmul.f32 %v552, %v1378
        %v2440 = vmul.f32 %v553, %v1382
        %v2441 = vmul.f32 %v554, %v1386
        %v2442 = vmul.f32 %v555, %v1390
        %v2443 = vmul.f32 %v556, %v1394
        %v2444 = vmul.f32 %v557, %v1398
        %v2445 = vmul.f32 %v558, %v1402
        %v2446 = vmul.f32 %v559, %v1406
        %v2447 = vmul.f32 %v560, %v1410
        %v2448 = vmul.f32 %v561, %v1414
        %v2449 = vmul.f32 %v562, %v1418
        %v2450 = vmul.f32 %v563, %v1422
        %v2451 = vmul.f32 %v564, %v1426
        %v2452 = vmul.f32 %v565, %v1430
        %v2453 = vmul.f32 %v566, %v1434
        %v2454 = vmul.f32 %v567, %v1438
        %v2455 = vmul.f32 %v568, %v1442
        %v2456 = vmul.f32 %v569, %v1446
        %v2457 = vmul.f32 %v570, %v1450
        %v2458 = vmul.f32 %v571, %v1454
        %v2459 = vmul.f32 %v572, %v1458
        %v2460 = vmul.f32 %v573, %v1462
        %v2461 = vmul.f32 %v574, %v1466
        %v2462 = vmul.f32 %v575, %v1470
        %v2463 = vmul.f32 %v576, %v1474
        %v2464 = vmul.f32 %v577, %v1478
        %v2465 = vmul.f32 %v578, %v1482
        %v2466 = vmul.f32 %v579, %v1486
        %v2467 = vmul.f32 %v580, %v1490
        %v2468 = vmul.f32 %v581, %v1494
        %v2469 = vmul.f32 %v582, %v1498
        %v2470 = vmul.f32 %v583, %v1502
        %v2471 = vmul.f32 %v584, %v1506
        %v2472 = vmul.f32 %v585, %v1510
        %v2473 = vmul.f32 %v586, %v1514
        %v2474 = vmul.f32 %v587, %v1518
        %v2475 = vmul.f32 %v588, %v1522
        %v2476 = vmul.f32 %v589, %v1526
        %v2477 = vmul.f32 %v590, %v1530
        %v2478 = vmul.f32 %v591, %v1534
        %v2479 = vmul.f32 %v592, %v1538
        %v2480 = vmul.f32 %v593, %v1542
        %v2481 = vmul.f32 %v594, %v1546
        %v2482 = vmul.f32 %v595, %v1550
        %v2483 = vmul.f32 %v596, %v1554
        %v2484 = vmul.f32 %v597, %v1558
        %v2485 = vmul.f32 %v598, %v1562
        %v2486 = vmul.f32 %v599, %v1566
        %v2487 = vmul.f32 %v600, %v1570
        %v2488 = vmul.f32 %v601, %v1574
        %v2489 = vmul.f32 %v602, %v1578
        %v2490 = vmul.f32 %v603, %v1582
        %v2491 = vmul.f32 %v604, %v1586
        %v2492 = vmul.f32 %v605, %v1590
        %v2493 = vmul.f32 %v606, %v1594
        %v2494 = vmul.f32 %v607, %v1598
        %v2495 = vmul.f32 %v608, %v1602
        %v2496 = vmul.f32 %v609, %v1606
        %v2497 = vmul.f32 %v610, %v1610
        %v2498 = vmul.f32 %v611, %v1614
        %v2499 = vmul.f32 %v612, %v1618
        %v2500 = vmul.f32 %v613, %v1622
        %v2501 = vmul.f32 %v614, %v1626
        %v2502 = vmul.f32 %v615, %v1630
        %v2503 = vmul.f32 %v616, %v1634
        %v2504 = vmul.f32 %v617, %v1638
        %v2505 = vmul.f32 %v618, %v1642
        %v2506 = vmul.f32 %v619, %v1646
        %v2507 = vmul.f32 %v620, %v1650
        %v2508 = vmul.f32 %v621, %v1654
        %v2509 = vmul.f32 %v622, %v1658
        %v2510 = vmul.f32 %v623, %v1662
        %v2511 = vmul.f32 %v624, %v1666
        %v2512 = vmul.f32 %v625, %v1670
        %v2513 = vmul.f32 %v626, %v1674
        %v2514 = vmul.f32 %v627, %v1678
        %v2515 = vmul.f32 %v628, %v1682
        %v2516 = vmul.f32 %v629, %v1686
        %v2517 = vmul.f32 %v630, %v1690
        %v2518 = vmul.f32 %v631, %v1694
        %v2519 = vmul.f32 %v632, %v1698
        %v2520 = vmul.f32 %v633, %v1702
        %v2521 = vmul.f32 %v634, %v1706
        %v2522 = vmul.f32 %v635, %v1710
        %v2523 = vmul.f32 %v636, %v1714
        %v2524 = vmul.f32 %v637, %v1718
        %v2525 = vmul.f32 %v638, %v1722
        %v2526 = vmul.f32 %v639, %v1726
        %v2527 = vmul.f32 %v640, %v1730
        %v2528 = vmul.f32 %v641, %v1734
        %v2529 = vmul.f32 %v642, %v1738
        %v2530 = vmul.f32 %v643, %v1742
        %v2531 = vmul.f32 %v644, %v1746
        %v2532 = vmul.f32 %v645, %v1750
        %v2533 = vmul.f32 %v646, %v1754
        %v2534 = vmul.f32 %v647, %v1758
        %v2535 = vmul.f32 %v648, %v1762
        %v2536 = vmul.f32 %v649, %v1766
        %v2537 = vmul.f32 %v650, %v1770
        %v2538 = vmul.f32 %v651, %v1774
        %v2539 = vmul.f32 %v652, %v1778
        %v2540 = vmul.f32 %v653, %v1782
        %v2541 = vmul.f32 %v654, %v1786
        %v2542 = vmul.f32 %v655, %v1790
        %v2543 = vmul.f32 %v656, %v1794
        %v2544 = vmul.f32 %v657, %v1798
        %v2545 = vmul.f32 %v658, %v1802
        %v2546 = vmul.f32 %v659, %v1806
        %v2547 = vmul.f32 %v660, %v1810
        %v2548 = vmul.f32 %v661, %v1814
        %v2549 = vmul.f32 %v662, %v1818
        %v2550 = vmul.f32 %v663, %v1822
        %v2551 = vmul.f32 %v664, %v1826
        %v2552 = vmul.f32 %v665, %v1830
        %v2553 = vmul.f32 %v666, %v1834
        %v2554 = vmul.f32 %v667, %v1838
        %v2555 = vmul.f32 %v668, %v1842
        %v2556 = vmul.f32 %v669, %v1846
        %v2557 = vmul.f32 %v670, %v1850
        %v2558 = vmul.f32 %v671, %v1854
        %v2559 = vmul.f32 %v672, %v1858
        %v2560 = vmul.f32 %v673, %v1862
        %v2561 = vmul.f32 %v674, %v1866
        %v2562 = vmul.f32 %v675, %v1870
        %v2563 = vmul.f32 %v676, %v1874
        %v2564 = vmul.f32 %v677, %v1878
        %v2565 = vmul.f32 %v678, %v1882
        %v2566 = vmul.f32 %v679, %v1886
        %v2567 = vmul.f32 %v680, %v1890
        %v2568 = vmul.f32 %v681, %v1894
        %v2569 = vmul.f32 %v682, %v1898
        %v2570 = vmul.f32 %v683, %v1902
        %v2571 = vmul.f32 %v684, %v1906
        %v2572 = vmul.f32 %v685, %v1910
        %v2573 = vmul.f32 %v686, %v1914
        %v2574 = vmul.f32 %v687, %v1918
        %v2575 = vmul.f32 %v688, %v1922
        %v2576 = vmul.f32 %v689, %v1926
        %v2577 = vmul.f32 %v690, %v1930
        %v2578 = vmul.f32 %v691, %v1934
        %v2579 = vmul.f32 %v692, %v1938
        %v2580 = vmul.f32 %v693, %v1942
        %v2581 = vmul.f32 %v694, %v1946
        %v2582 = vmul.f32 %v695, %v1950
        %v2583 = vmul.f32 %v696, %v1954
        %v2584 = vmul.f32 %v697, %v1958
        %v2585 = vmul.f32 %v698, %v1962
        %v2586 = vmul.f32 %v699, %v1966
        %v2587 = vmul.f32 %v700, %v1970
        %v2588 = vmul.f32 %v701, %v1974
        %v2589 = vmul.f32 %v702, %v1978
        %v2590 = vmul.f32 %v703, %v1982
        %v2591 = vmul.f32 %v704, %v1986
        %v2592 = vmul.f32 %v705, %v1990
        %v2593 = vmul.f32 %v706, %v1994
        %v2594 = vmul.f32 %v707, %v1998
        %v2595 = vmul.f32 %v708, %v2002
        %v2596 = vmul.f32 %v709, %v2006
        %v2597 = vmul.f32 %v710, %v2010
        %v2598 = vmul.f32 %v711, %v2014
        %v2599 = vmul.f32 %v712, %v2018
        %v2600 = vmul.f32 %v713, %v2022
        %v2601 = vmul.f32 %v714, %v2026
        %v2602 = vmul.f32 %v715, %v2030
        %v2603 = vmul.f32 %v716, %v2034
        %v2604 = vmul.f32 %v717, %v2038
        %v2605 = vmul.f32 %v718, %v2042
        %v2606 = vmul.f32 %v719, %v2046
        %v2607 = vmul.f32 %v720, %v2050
        %v2608 = vmul.f32 %v721, %v2054
        %v2609 = vmul.f32 %v722, %v2058
        %v2610 = vmul.f32 %v723, %v2062
        %v2611 = vmul.f32 %v724, %v2066
        %v2612 = vmul.f32 %v725, %v2070
        %v2613 = vmul.f32 %v726, %v2074
        %v2614 = vmul.f32 %v727, %v2078
        %v2615 = vmul.f32 %v728, %v2082
        %v2616 = vmul.f32 %v729, %v2086
        %v2617 = vmul.f32 %v730, %v2090
        %v2618 = vmul.f32 %v731, %v2094
        %v2619 = vmul.f32 %v732, %v2098
        %v2620 = vmul.f32 %v733, %v2102
        %v2621 = vmul.f32 %v734, %v2106
        %v2622 = vmul.f32 %v735, %v2110
        %v2623 = vmul.f32 %v736, %v1090
        %v2624 = vmul.f32 %v737, %v1094
        %v2625 = vmul.f32 %v738, %v1098
        %v2626 = vmul.f32 %v739, %v1102
        %v2627 = vmul.f32 %v740, %v1106
        %v2628 = vmul.f32 %v741, %v1110
        %v2629 = vmul.f32 %v742, %v1114
        %v2630 = vmul.f32 %v743, %v1118
        %v2631 = vmul.f32 %v744, %v1122
        %v2632 = vmul.f32 %v745, %v1126
        %v2633 = vmul.f32 %v746, %v1130
        %v2634 = vmul.f32 %v747, %v1134
        %v2635 = vmul.f32 %v748, %v1138
        %v2636 = vmul.f32 %v749, %v1142
        %v2637 = vmul.f32 %v750, %v1146
        %v2638 = vmul.f32 %v751, %v1150
        %v2639 = vmul.f32 %v752, %v1154
        %v2640 = vmul.f32 %v753, %v1158
        %v2641 = vmul.f32 %v754, %v1162
        %v2642 = vmul.f32 %v755, %v1166
        %v2643 = vmul.f32 %v756, %v1170
        %v2644 = vmul.f32 %v757, %v1174
        %v2645 = vmul.f32 %v758, %v1178
        %v2646 = vmul.f32 %v759, %v1182
        %v2647 = vmul.f32 %v760, %v1186
        %v2648 = vmul.f32 %v761, %v1190
        %v2649 = vmul.f32 %v762, %v1194
        %v2650 = vmul.f32 %v763, %v1198
        %v2651 = vmul.f32 %v764, %v1202
        %v2652 = vmul.f32 %v765, %v1206
        %v2653 = vmul.f32 %v766, %v1210
        %v2654 = vmul.f32 %v767, %v1214
        %v2655 = vmul.f32 %v768, %v1218
        %v2656 = vmul.f32 %v769, %v1222
        %v2657 = vmul.f32 %v770, %v1226
        %v2658 = vmul.f32 %v771, %v1230
        %v2659 = vmul.f32 %v772, %v1234
        %v2660 = vmul.f32 %v773, %v1238
        %v2661 = vmul.f32 %v774, %v1242
        %v2662 = vmul.f32 %v775, %v1246
        %v2663 = vmul.f32 %v776, %v1250
        %v2664 = vmul.f32 %v777, %v1254
        %v2665 = vmul.f32 %v778, %v1258
        %v2666 = vmul.f32 %v779, %v1262
        %v2667 = vmul.f32 %v780, %v1266
        %v2668 = vmul.f32 %v781, %v1270
        %v2669 = vmul.f32 %v782, %v1274
        %v2670 = vmul.f32 %v783, %v1278
        %v2671 = vmul.f32 %v784, %v1282
        %v2672 = vmul.f32 %v785, %v1286
        %v2673 = vmul.f32 %v786, %v1290
        %v2674 = vmul.f32 %v787, %v1294
        %v2675 = vmul.f32 %v788, %v1298
        %v2676 = vmul.f32 %v789, %v1302
        %v2677 = vmul.f32 %v790, %v1306
        %v2678 = vmul.f32 %v791, %v1310
        %v2679 = vmul.f32 %v792, %v1314
        %v2680 = vmul.f32 %v793, %v1318
        %v2681 = vmul.f32 %v794, %v1322
        %v2682 = vmul.f32 %v795, %v1326
        %v2683 = vmul.f32 %v796, %v1330
        %v2684 = vmul.f32 %v797, %v1334
        %v2685 = vmul.f32 %v798, %v1338
        %v2686 = vmul.f32 %v799, %v1342
        %v2687 = vmul.f32 %v800, %v1346
        %v2688 = vmul.f32 %v801, %v1350
        %v2689 = vmul.f32 %v802, %v1354
        %v2690 = vmul.f32 %v803, %v1358
        %v2691 = vmul.f32 %v804, %v1362
        %v2692 = vmul.f32 %v805, %v1366
        %v2693 = vmul.f32 %v806, %v1370
        %v2694 = vmul.f32 %v807, %v1374
        %v2695 = vmul.f32 %v808, %v1378
        %v2696 = vmul.f32 %v809, %v1382
        %v2697 = vmul.f32 %v810, %v1386
        %v2698 = vmul.f32 %v811, %v1390
        %v2699 = vmul.f32 %v812, %v1394
        %v2700 = vmul.f32 %v813, %v1398
        %v2701 = vmul.f32 %v814, %v1402
        %v2702 = vmul.f32 %v815, %v1406
        %v2703 = vmul.f32 %v816, %v1410
        %v2704 = vmul.f32 %v817, %v1414
        %v2705 = vmul.f32 %v818, %v1418
        %v2706 = vmul.f32 %v819, %v1422
        %v2707 = vmul.f32 %v820, %v1426
        %v2708 = vmul.f32 %v821, %v1430
        %v2709 = vmul.f32 %v822, %v1434
        %v2710 = vmul.f32 %v823, %v1438
        %v2711 = vmul.f32 %v824, %v1442
        %v2712 = vmul.f32 %v825, %v1446
        %v2713 = vmul.f32 %v826, %v1450
        %v2714 = vmul.f32 %v827, %v1454
        %v2715 = vmul.f32 %v828, %v1458
        %v2716 = vmul.f32 %v829, %v1462
        %v2717 = vmul.f32 %v830, %v1466
        %v2718 = vmul.f32 %v831, %v1470
        %v2719 = vmul.f32 %v832, %v1474
        %v2720 = vmul.f32 %v833, %v1478
        %v2721 = vmul.f32 %v834, %v1482
        %v2722 = vmul.f32 %v835, %v1486
        %v2723 = vmul.f32 %v836, %v1490
        %v2724 = vmul.f32 %v837, %v1494
        %v2725 = vmul.f32 %v838, %v1498
        %v2726 = vmul.f32 %v839, %v1502
        %v2727 = vmul.f32 %v840, %v1506
        %v2728 = vmul.f32 %v841, %v1510
        %v2729 = vmul.f32 %v842, %v1514
        %v2730 = vmul.f32 %v843, %v1518
        %v2731 = vmul.f32 %v844, %v1522
        %v2732 = vmul.f32 %v845, %v1526
        %v2733 = vmul.f32 %v846, %v1530
        %v2734 = vmul.f32 %v847, %v1534
        %v2735 = vmul.f32 %v848, %v1538
        %v2736 = vmul.f32 %v849, %v1542
        %v2737 = vmul.f32 %v850, %v1546
        %v2738 = vmul.f32 %v851, %v1550
        %v2739 = vmul.f32 %v852, %v1554
        %v2740 = vmul.f32 %v853, %v1558
        %v2741 = vmul.f32 %v854, %v1562
        %v2742 = vmul.f32 %v855, %v1566
        %v2743 = vmul.f32 %v856, %v1570
        %v2744 = vmul.f32 %v857, %v1574
        %v2745 = vmul.f32 %v858, %v1578
        %v2746 = vmul.f32 %v859, %v1582
        %v2747 = vmul.f32 %v860, %v1586
        %v2748 = vmul.f32 %v861, %v1590
        %v2749 = vmul.f32 %v862, %v1594
        %v2750 = vmul.f32 %v863, %v1598
        %v2751 = vmul.f32 %v864, %v1602
        %v2752 = vmul.f32 %v865, %v1606
        %v2753 = vmul.f32 %v866, %v1610
        %v2754 = vmul.f32 %v867, %v1614
        %v2755 = vmul.f32 %v868, %v1618
        %v2756 = vmul.f32 %v869, %v1622
        %v2757 = vmul.f32 %v870, %v1626
        %v2758 = vmul.f32 %v871, %v1630
        %v2759 = vmul.f32 %v872, %v1634
        %v2760 = vmul.f32 %v873, %v1638
        %v2761 = vmul.f32 %v874, %v1642
        %v2762 = vmul.f32 %v875, %v1646
        %v2763 = vmul.f32 %v876, %v1650
        %v2764 = vmul.f32 %v877, %v1654
        %v2765 = vmul.f32 %v878, %v1658
        %v2766 = vmul.f32 %v879, %v1662
        %v2767 = vmul.f32 %v880, %v1666
        %v2768 = vmul.f32 %v881, %v1670
        %v2769 = vmul.f32 %v882, %v1674
        %v2770 = vmul.f32 %v883, %v1678
        %v2771 = vmul.f32 %v884, %v1682
        %v2772 = vmul.f32 %v885, %v1686
        %v2773 = vmul.f32 %v886, %v1690
        %v2774 = vmul.f32 %v887, %v1694
        %v2775 = vmul.f32 %v888, %v1698
        %v2776 = vmul.f32 %v889, %v1702
        %v2777 = vmul.f32 %v890, %v1706
        %v2778 = vmul.f32 %v891, %v1710
        %v2779 = vmul.f32 %v892, %v1714
        %v2780 = vmul.f32 %v893, %v1718
        %v2781 = vmul.f32 %v894, %v1722
        %v2782 = vmul.f32 %v895, %v1726
        %v2783 = vmul.f32 %v896, %v1730
        %v2784 = vmul.f32 %v897, %v1734
        %v2785 = vmul.f32 %v898, %v1738
        %v2786 = vmul.f32 %v899, %v1742
        %v2787 = vmul.f32 %v900, %v1746
        %v2788 = vmul.f32 %v901, %v1750
        %v2789 = vmul.f32 %v902, %v1754
        %v2790 = vmul.f32 %v903, %v1758
        %v2791 = vmul.f32 %v904, %v1762
        %v2792 = vmul.f32 %v905, %v1766
        %v2793 = vmul.f32 %v906, %v1770
        %v2794 = vmul.f32 %v907, %v1774
        %v2795 = vmul.f32 %v908, %v1778
        %v2796 = vmul.f32 %v909, %v1782
        %v2797 = vmul.f32 %v910, %v1786
        %v2798 = vmul.f32 %v911, %v1790
        %v2799 = vmul.f32 %v912, %v1794
        %v2800 = vmul.f32 %v913, %v1798
        %v2801 = vmul.f32 %v914, %v1802
        %v2802 = vmul.f32 %v915, %v1806
        %v2803 = vmul.f32 %v916, %v1810
        %v2804 = vmul.f32 %v917, %v1814
        %v2805 = vmul.f32 %v918, %v1818
        %v2806 = vmul.f32 %v919, %v1822
        %v2807 = vmul.f32 %v920, %v1826
        %v2808 = vmul.f32 %v921, %v1830
        %v2809 = vmul.f32 %v922, %v1834
        %v2810 = vmul.f32 %v923, %v1838
        %v2811 = vmul.f32 %v924, %v1842
        %v2812 = vmul.f32 %v925, %v1846
        %v2813 = vmul.f32 %v926, %v1850
        %v2814 = vmul.f32 %v927, %v1854
        %v2815 = vmul.f32 %v928, %v1858
        %v2816 = vmul.f32 %v929, %v1862
        %v2817 = vmul.f32 %v930, %v1866
        %v2818 = vmul.f32 %v931, %v1870
        %v2819 = vmul.f32 %v932, %v1874
        %v2820 = vmul.f32 %v933, %v1878
        %v2821 = vmul.f32 %v934, %v1882
        %v2822 = vmul.f32 %v935, %v1886
        %v2823 = vmul.f32 %v936, %v1890
        %v2824 = vmul.f32 %v937, %v1894
        %v2825 = vmul.f32 %v938, %v1898
        %v2826 = vmul.f32 %v939, %v1902
        %v2827 = vmul.f32 %v940, %v1906
        %v2828 = vmul.f32 %v941, %v1910
        %v2829 = vmul.f32 %v942, %v1914
        %v2830 = vmul.f32 %v943, %v1918
        %v2831 = vmul.f32 %v944, %v1922
        %v2832 = vmul.f32 %v945, %v1926
        %v2833 = vmul.f32 %v946, %v1930
        %v2834 = vmul.f32 %v947, %v1934
        %v2835 = vmul.f32 %v948, %v1938
        %v2836 = vmul.f32 %v949, %v1942
        %v2837 = vmul.f32 %v950, %v1946
        %v2838 = vmul.f32 %v951, %v1950
        %v2839 = vmul.f32 %v952, %v1954
        %v2840 = vmul.f32 %v953, %v1958
        %v2841 = vmul.f32 %v954, %v1962
        %v2842 = vmul.f32 %v955, %v1966
        %v2843 = vmul.f32 %v956, %v1970
        %v2844 = vmul.f32 %v957, %v1974
        %v2845 = vmul.f32 %v958, %v1978
        %v2846 = vmul.f32 %v959, %v1982
        %v2847 = vmul.f32 %v960, %v1986
        %v2848 = vmul.f32 %v961, %v1990
        %v2849 = vmul.f32 %v962, %v1994
        %v2850 = vmul.f32 %v963, %v1998
        %v2851 = vmul.f32 %v964, %v2002
        %v2852 = vmul.f32 %v965, %v2006
        %v2853 = vmul.f32 %v966, %v2010
        %v2854 = vmul.f32 %v967, %v2014
        %v2855 = vmul.f32 %v968, %v2018
        %v2856 = vmul.f32 %v969, %v2022
        %v2857 = vmul.f32 %v970, %v2026
        %v2858 = vmul.f32 %v971, %v2030
        %v2859 = vmul.f32 %v972, %v2034
        %v2860 = vmul.f32 %v973, %v2038
        %v2861 = vmul.f32 %v974, %v2042
        %v2862 = vmul.f32 %v975, %v2046
        %v2863 = vmul.f32 %v976, %v2050
        %v2864 = vmul.f32 %v977, %v2054
        %v2865 = vmul.f32 %v978, %v2058
        %v2866 = vmul.f32 %v979, %v2062
        %v2867 = vmul.f32 %v980, %v2066
        %v2868 = vmul.f32 %v981, %v2070
        %v2869 = vmul.f32 %v982, %v2074
        %v2870 = vmul.f32 %v983, %v2078
        %v2871 = vmul.f32 %v984, %v2082
        %v2872 = vmul.f32 %v985, %v2086
        %v2873 = vmul.f32 %v986, %v2090
        %v2874 = vmul.f32 %v987, %v2094
        %v2875 = vmul.f32 %v988, %v2098
        %v2876 = vmul.f32 %v989, %v2102
        %v2877 = vmul.f32 %v990, %v2106
        %v2878 = vmul.f32 %v991, %v2110
        %v2879 = vadd.f32 %v2367, %v2368
        %v2880 = vadd.f32 %v2879, %v2369
        %v2881 = vadd.f32 %v2880, %v2370
        %v2882 = vadd.f32 %v2881, %v2371
        %v2883 = vadd.f32 %v2882, %v2372
        %v2884 = vadd.f32 %v2883, %v2373
        %v2885 = vadd.f32 %v2884, %v2374
        %v2886 = vadd.f32 %v2885, %v2375
        %v2887 = vadd.f32 %v2886, %v2376
        %v2888 = vadd.f32 %v2887, %v2377
        %v2889 = vadd.f32 %v2888, %v2378
        %v2890 = vadd.f32 %v2889, %v2379
        %v2891 = vadd.f32 %v2890, %v2380
        %v2892 = vadd.f32 %v2891, %v2381
        %v2893 = vadd.f32 %v2892, %v2382
        %v2894 = vadd.f32 %v2893, %v2383
        %v2895 = vadd.f32 %v2894, %v2384
        %v2896 = vadd.f32 %v2895, %v2385
        %v2897 = vadd.f32 %v2896, %v2386
        %v2898 = vadd.f32 %v2897, %v2387
        %v2899 = vadd.f32 %v2898, %v2388
        %v2900 = vadd.f32 %v2899, %v2389
        %v2901 = vadd.f32 %v2900, %v2390
        %v2902 = vadd.f32 %v2901, %v2391
        %v2903 = vadd.f32 %v2902, %v2392
        %v2904 = vadd.f32 %v2903, %v2393
        %v2905 = vadd.f32 %v2904, %v2394
        %v2906 = vadd.f32 %v2905, %v2395
        %v2907 = vadd.f32 %v2906, %v2396
        %v2908 = vadd.f32 %v2907, %v2397
        %v2909 = vadd.f32 %v2908, %v2398
        %v2910 = vadd.f32 %v2909, %v2399
        %v2911 = vadd.f32 %v2910, %v2400
        %v2912 = vadd.f32 %v2911, %v2401
        %v2913 = vadd.f32 %v2912, %v2402
        %v2914 = vadd.f32 %v2913, %v2403
        %v2915 = vadd.f32 %v2914, %v2404
        %v2916 = vadd.f32 %v2915, %v2405
        %v2917 = vadd.f32 %v2916, %v2406
        %v2918 = vadd.f32 %v2917, %v2407
        %v2919 = vadd.f32 %v2918, %v2408
        %v2920 = vadd.f32 %v2919, %v2409
        %v2921 = vadd.f32 %v2920, %v2410
        %v2922 = vadd.f32 %v2921, %v2411
        %v2923 = vadd.f32 %v2922, %v2412
        %v2924 = vadd.f32 %v2923, %v2413
        %v2925 = vadd.f32 %v2924, %v2414
        %v2926 = vadd.f32 %v2925, %v2415
        %v2927 = vadd.f32 %v2926, %v2416
        %v2928 = vadd.f32 %v2927, %v2417
        %v2929 = vadd.f32 %v2928, %v2418
        %v2930 = vadd.f32 %v2929, %v2419
        %v2931 = vadd.f32 %v2930, %v2420
        %v2932 = vadd.f32 %v2931, %v2421
        %v2933 = vadd.f32 %v2932, %v2422
        %v2934 = vadd.f32 %v2933, %v2423
        %v2935 = vadd.f32 %v2934, %v2424
        %v2936 = vadd.f32 %v2935, %v2425
        %v2937 = vadd.f32 %v2936, %v2426
        %v2938 = vadd.f32 %v2937, %v2427
        %v2939 = vadd.f32 %v2938, %v2428
        %v2940 = vadd.f32 %v2939, %v2429
        %v2941 = vadd.f32 %v2940, %v2430
        %v2942 = vadd.f32 %v2941, %v2431
        %v2943 = vadd.f32 %v2942, %v2432
        %v2944 = vadd.f32 %v2943, %v2433
        %v2945 = vadd.f32 %v2944, %v2434
        %v2946 = vadd.f32 %v2945, %v2435
        %v2947 = vadd.f32 %v2946, %v2436
        %v2948 = vadd.f32 %v2947, %v2437
        %v2949 = vadd.f32 %v2948, %v2438
        %v2950 = vadd.f32 %v2949, %v2439
        %v2951 = vadd.f32 %v2950, %v2440
        %v2952 = vadd.f32 %v2951, %v2441
        %v2953 = vadd.f32 %v2952, %v2442
        %v2954 = vadd.f32 %v2953, %v2443
        %v2955 = vadd.f32 %v2954, %v2444
        %v2956 = vadd.f32 %v2955, %v2445
        %v2957 = vadd.f32 %v2956, %v2446
        %v2958 = vadd.f32 %v2957, %v2447
        %v2959 = vadd.f32 %v2958, %v2448
        %v2960 = vadd.f32 %v2959, %v2449
        %v2961 = vadd.f32 %v2960, %v2450
        %v2962 = vadd.f32 %v2961, %v2451
        %v2963 = vadd.f32 %v2962, %v2452
        %v2964 = vadd.f32 %v2963, %v2453
        %v2965 = vadd.f32 %v2964, %v2454
        %v2966 = vadd.f32 %v2965, %v2455
        %v2967 = vadd.f32 %v2966, %v2456
        %v2968 = vadd.f32 %v2967, %v2457
        %v2969 = vadd.f32 %v2968, %v2458
        %v2970 = vadd.f32 %v2969, %v2459
        %v2971 = vadd.f32 %v2970, %v2460
        %v2972 = vadd.f32 %v2971, %v2461
        %v2973 = vadd.f32 %v2972, %v2462
        %v2974 = vadd.f32 %v2973, %v2463
        %v2975 = vadd.f32 %v2974, %v2464
        %v2976 = vadd.f32 %v2975, %v2465
        %v2977 = vadd.f32 %v2976, %v2466
        %v2978 = vadd.f32 %v2977, %v2467
        %v2979 = vadd.f32 %v2978, %v2468
        %v2980 = vadd.f32 %v2979, %v2469
        %v2981 = vadd.f32 %v2980, %v2470
        %v2982 = vadd.f32 %v2981, %v2471
        %v2983 = vadd.f32 %v2982, %v2472
        %v2984 = vadd.f32 %v2983, %v2473
        %v2985 = vadd.f32 %v2984, %v2474
        %v2986 = vadd.f32 %v2985, %v2475
        %v2987 = vadd.f32 %v2986, %v2476
        %v2988 = vadd.f32 %v2987, %v2477
        %v2989 = vadd.f32 %v2988, %v2478
        %v2990 = vadd.f32 %v2989, %v2479
        %v2991 = vadd.f32 %v2990, %v2480
        %v2992 = vadd.f32 %v2991, %v2481
        %v2993 = vadd.f32 %v2992, %v2482
        %v2994 = vadd.f32 %v2993, %v2483
        %v2995 = vadd.f32 %v2994, %v2484
        %v2996 = vadd.f32 %v2995, %v2485
        %v2997 = vadd.f32 %v2996, %v2486
        %v2998 = vadd.f32 %v2997, %v2487
        %v2999 = vadd.f32 %v2998, %v2488
        %v3000 = vadd.f32 %v2999, %v2489
        %v3001 = vadd.f32 %v3000, %v2490
        %v3002 = vadd.f32 %v3001, %v2491
        %v3003 = vadd.f32 %v3002, %v2492
        %v3004 = vadd.f32 %v3003, %v2493
        %v3005 = vadd.f32 %v3004, %v2494
        %v3006 = vadd.f32 %v3005, %v2495
        %v3007 = vadd.f32 %v3006, %v2496
        %v3008 = vadd.f32 %v3007, %v2497
        %v3009 = vadd.f32 %v3008, %v2498
        %v3010 = vadd.f32 %v3009, %v2499
        %v3011 = vadd.f32 %v3010, %v2500
        %v3012 = vadd.f32 %v3011, %v2501
        %v3013 = vadd.f32 %v3012, %v2502
        %v3014 = vadd.f32 %v3013, %v2503
        %v3015 = vadd.f32 %v3014, %v2504
        %v3016 = vadd.f32 %v3015, %v2505
        %v3017 = vadd.f32 %v3016, %v2506
        %v3018 = vadd.f32 %v3017, %v2507
        %v3019 = vadd.f32 %v3018, %v2508
        %v3020 = vadd.f32 %v3019, %v2509
        %v3021 = vadd.f32 %v3020, %v2510
        %v3022 = vadd.f32 %v3021, %v2511
        %v3023 = vadd.f32 %v3022, %v2512
        %v3024 = vadd.f32 %v3023, %v2513
        %v3025 = vadd.f32 %v3024, %v2514
        %v3026 = vadd.f32 %v3025, %v2515
        %v3027 = vadd.f32 %v3026, %v2516
        %v3028 = vadd.f32 %v3027, %v2517
        %v3029 = vadd.f32 %v3028, %v2518
        %v3030 = vadd.f32 %v3029, %v2519
        %v3031 = vadd.f32 %v3030, %v2520
        %v3032 = vadd.f32 %v3031, %v2521
        %v3033 = vadd.f32 %v3032, %v2522
        %v3034 = vadd.f32 %v3033, %v2523
        %v3035 = vadd.f32 %v3034, %v2524
        %v3036 = vadd.f32 %v3035, %v2525
        %v3037 = vadd.f32 %v3036, %v2526
        %v3038 = vadd.f32 %v3037, %v2527
        %v3039 = vadd.f32 %v3038, %v2528
        %v3040 = vadd.f32 %v3039, %v2529
        %v3041 = vadd.f32 %v3040, %v2530
        %v3042 = vadd.f32 %v3041, %v2531
        %v3043 = vadd.f32 %v3042, %v2532
        %v3044 = vadd.f32 %v3043, %v2533
        %v3045 = vadd.f32 %v3044, %v2534
        %v3046 = vadd.f32 %v3045, %v2535
        %v3047 = vadd.f32 %v3046, %v2536
        %v3048 = vadd.f32 %v3047, %v2537
        %v3049 = vadd.f32 %v3048, %v2538
        %v3050 = vadd.f32 %v3049, %v2539
        %v3051 = vadd.f32 %v3050, %v2540
        %v3052 = vadd.f32 %v3051, %v2541
        %v3053 = vadd.f32 %v3052, %v2542
        %v3054 = vadd.f32 %v3053, %v2543
        %v3055 = vadd.f32 %v3054, %v2544
        %v3056 = vadd.f32 %v3055, %v2545
        %v3057 = vadd.f32 %v3056, %v2546
        %v3058 = vadd.f32 %v3057, %v2547
        %v3059 = vadd.f32 %v3058, %v2548
        %v3060 = vadd.f32 %v3059, %v2549
        %v3061 = vadd.f32 %v3060, %v2550
        %v3062 = vadd.f32 %v3061, %v2551
        %v3063 = vadd.f32 %v3062, %v2552
        %v3064 = vadd.f32 %v3063, %v2553
        %v3065 = vadd.f32 %v3064, %v2554
        %v3066 = vadd.f32 %v3065, %v2555
        %v3067 = vadd.f32 %v3066, %v2556
        %v3068 = vadd.f32 %v3067, %v2557
        %v3069 = vadd.f32 %v3068, %v2558
        %v3070 = vadd.f32 %v3069, %v2559
        %v3071 = vadd.f32 %v3070, %v2560
        %v3072 = vadd.f32 %v3071, %v2561
        %v3073 = vadd.f32 %v3072, %v2562
        %v3074 = vadd.f32 %v3073, %v2563
        %v3075 = vadd.f32 %v3074, %v2564
        %v3076 = vadd.f32 %v3075, %v2565
        %v3077 = vadd.f32 %v3076, %v2566
        %v3078 = vadd.f32 %v3077, %v2567
        %v3079 = vadd.f32 %v3078, %v2568
        %v3080 = vadd.f32 %v3079, %v2569
        %v3081 = vadd.f32 %v3080, %v2570
        %v3082 = vadd.f32 %v3081, %v2571
        %v3083 = vadd.f32 %v3082, %v2572
        %v3084 = vadd.f32 %v3083, %v2573
        %v3085 = vadd.f32 %v3084, %v2574
        %v3086 = vadd.f32 %v3085, %v2575
        %v3087 = vadd.f32 %v3086, %v2576
        %v3088 = vadd.f32 %v3087, %v2577
        %v3089 = vadd.f32 %v3088, %v2578
        %v3090 = vadd.f32 %v3089, %v2579
        %v3091 = vadd.f32 %v3090, %v2580
        %v3092 = vadd.f32 %v3091, %v2581
        %v3093 = vadd.f32 %v3092, %v2582
        %v3094 = vadd.f32 %v3093, %v2583
        %v3095 = vadd.f32 %v3094, %v2584
        %v3096 = vadd.f32 %v3095, %v2585
        %v3097 = vadd.f32 %v3096, %v2586
        %v3098 = vadd.f32 %v3097, %v2587
        %v3099 = vadd.f32 %v3098, %v2588
        %v3100 = vadd.f32 %v3099, %v2589
        %v3101 = vadd.f32 %v3100, %v2590
        %v3102 = vadd.f32 %v3101, %v2591
        %v3103 = vadd.f32 %v3102, %v2592
        %v3104 = vadd.f32 %v3103, %v2593
        %v3105 = vadd.f32 %v3104, %v2594
        %v3106 = vadd.f32 %v3105, %v2595
        %v3107 = vadd.f32 %v3106, %v2596
        %v3108 = vadd.f32 %v3107, %v2597
        %v3109 = vadd.f32 %v3108, %v2598
        %v3110 = vadd.f32 %v3109, %v2599
        %v3111 = vadd.f32 %v3110, %v2600
        %v3112 = vadd.f32 %v3111, %v2601
        %v3113 = vadd.f32 %v3112, %v2602
        %v3114 = vadd.f32 %v3113, %v2603
        %v3115 = vadd.f32 %v3114, %v2604
        %v3116 = vadd.f32 %v3115, %v2605
        %v3117 = vadd.f32 %v3116, %v2606
        %v3118 = vadd.f32 %v3117, %v2607
        %v3119 = vadd.f32 %v3118, %v2608
        %v3120 = vadd.f32 %v3119, %v2609
        %v3121 = vadd.f32 %v3120, %v2610
        %v3122 = vadd.f32 %v3121, %v2611
        %v3123 = vadd.f32 %v3122, %v2612
        %v3124 = vadd.f32 %v3123, %v2613
        %v3125 = vadd.f32 %v3124, %v2614
        %v3126 = vadd.f32 %v3125, %v2615
        %v3127 = vadd.f32 %v3126, %v2616
        %v3128 = vadd.f32 %v3127, %v2617
        %v3129 = vadd.f32 %v3128, %v2618
        %v3130 = vadd.f32 %v3129, %v2619
        %v3131 = vadd.f32 %v3130, %v2620
        %v3132 = vadd.f32 %v3131, %v2621
        %v3133 = vadd.f32 %v3132, %v2622
        %3134 = vadd.xlane.f32.xlu0 %v3133
        %v3135 = vpop.xlane.xlu0 %3134
        %vm3136 = vcmask 1041408
        %v3137 = vsel %vm3136, %v2623, 0.0
        %v3138 = vsel %vm3136, %v2624, 0.0
        %v3139 = vadd.f32 %v3137, %v3138
        %v3140 = vsel %vm3136, %v2625, 0.0
        %v3141 = vadd.f32 %v3139, %v3140
        %v3142 = vsel %vm3136, %v2626, 0.0
        %v3143 = vadd.f32 %v3141, %v3142
        %v3144 = vsel %vm3136, %v2627, 0.0
        %v3145 = vadd.f32 %v3143, %v3144
        %v3146 = vsel %vm3136, %v2628, 0.0
        %v3147 = vadd.f32 %v3145, %v3146
        %v3148 = vsel %vm3136, %v2629, 0.0
        %v3149 = vadd.f32 %v3147, %v3148
        %v3150 = vsel %vm3136, %v2630, 0.0
        %v3151 = vadd.f32 %v3149, %v3150
        %v3152 = vsel %vm3136, %v2631, 0.0
        %v3153 = vadd.f32 %v3151, %v3152
        %v3154 = vsel %vm3136, %v2632, 0.0
        %v3155 = vadd.f32 %v3153, %v3154
        %v3156 = vsel %vm3136, %v2633, 0.0
        %v3157 = vadd.f32 %v3155, %v3156
        %v3158 = vsel %vm3136, %v2634, 0.0
        %v3159 = vadd.f32 %v3157, %v3158
        %v3160 = vsel %vm3136, %v2635, 0.0
        %v3161 = vadd.f32 %v3159, %v3160
        %v3162 = vsel %vm3136, %v2636, 0.0
        %v3163 = vadd.f32 %v3161, %v3162
        %v3164 = vsel %vm3136, %v2637, 0.0
        %v3165 = vadd.f32 %v3163, %v3164
        %v3166 = vsel %vm3136, %v2638, 0.0
        %v3167 = vadd.f32 %v3165, %v3166
        %v3168 = vsel %vm3136, %v2639, 0.0
        %v3169 = vadd.f32 %v3167, %v3168
        %v3170 = vsel %vm3136, %v2640, 0.0
        %v3171 = vadd.f32 %v3169, %v3170
        %v3172 = vsel %vm3136, %v2641, 0.0
        %v3173 = vadd.f32 %v3171, %v3172
        %v3174 = vsel %vm3136, %v2642, 0.0
        %v3175 = vadd.f32 %v3173, %v3174
        %v3176 = vsel %vm3136, %v2643, 0.0
        %v3177 = vadd.f32 %v3175, %v3176
        %v3178 = vsel %vm3136, %v2644, 0.0
        %v3179 = vadd.f32 %v3177, %v3178
        %v3180 = vsel %vm3136, %v2645, 0.0
        %v3181 = vadd.f32 %v3179, %v3180
        %v3182 = vsel %vm3136, %v2646, 0.0
        %v3183 = vadd.f32 %v3181, %v3182
        %v3184 = vsel %vm3136, %v2647, 0.0
        %v3185 = vadd.f32 %v3183, %v3184
        %v3186 = vsel %vm3136, %v2648, 0.0
        %v3187 = vadd.f32 %v3185, %v3186
        %v3188 = vsel %vm3136, %v2649, 0.0
        %v3189 = vadd.f32 %v3187, %v3188
        %v3190 = vsel %vm3136, %v2650, 0.0
        %v3191 = vadd.f32 %v3189, %v3190
        %v3192 = vsel %vm3136, %v2651, 0.0
        %v3193 = vadd.f32 %v3191, %v3192
        %v3194 = vsel %vm3136, %v2652, 0.0
        %v3195 = vadd.f32 %v3193, %v3194
        %v3196 = vsel %vm3136, %v2653, 0.0
        %v3197 = vadd.f32 %v3195, %v3196
        %v3198 = vsel %vm3136, %v2654, 0.0
        %v3199 = vadd.f32 %v3197, %v3198
        %v3200 = vsel %vm3136, %v2655, 0.0
        %v3201 = vadd.f32 %v3199, %v3200
        %v3202 = vsel %vm3136, %v2656, 0.0
        %v3203 = vadd.f32 %v3201, %v3202
        %v3204 = vsel %vm3136, %v2657, 0.0
        %v3205 = vadd.f32 %v3203, %v3204
        %v3206 = vsel %vm3136, %v2658, 0.0
        %v3207 = vadd.f32 %v3205, %v3206
        %v3208 = vsel %vm3136, %v2659, 0.0
        %v3209 = vadd.f32 %v3207, %v3208
        %v3210 = vsel %vm3136, %v2660, 0.0
        %v3211 = vadd.f32 %v3209, %v3210
        %v3212 = vsel %vm3136, %v2661, 0.0
        %v3213 = vadd.f32 %v3211, %v3212
        %v3214 = vsel %vm3136, %v2662, 0.0
        %v3215 = vadd.f32 %v3213, %v3214
        %v3216 = vsel %vm3136, %v2663, 0.0
        %v3217 = vadd.f32 %v3215, %v3216
        %v3218 = vsel %vm3136, %v2664, 0.0
        %v3219 = vadd.f32 %v3217, %v3218
        %v3220 = vsel %vm3136, %v2665, 0.0
        %v3221 = vadd.f32 %v3219, %v3220
        %v3222 = vsel %vm3136, %v2666, 0.0
        %v3223 = vadd.f32 %v3221, %v3222
        %v3224 = vsel %vm3136, %v2667, 0.0
        %v3225 = vadd.f32 %v3223, %v3224
        %v3226 = vsel %vm3136, %v2668, 0.0
        %v3227 = vadd.f32 %v3225, %v3226
        %v3228 = vsel %vm3136, %v2669, 0.0
        %v3229 = vadd.f32 %v3227, %v3228
        %v3230 = vsel %vm3136, %v2670, 0.0
        %v3231 = vadd.f32 %v3229, %v3230
        %v3232 = vsel %vm3136, %v2671, 0.0
        %v3233 = vadd.f32 %v3231, %v3232
        %v3234 = vsel %vm3136, %v2672, 0.0
        %v3235 = vadd.f32 %v3233, %v3234
        %v3236 = vsel %vm3136, %v2673, 0.0
        %v3237 = vadd.f32 %v3235, %v3236
        %v3238 = vsel %vm3136, %v2674, 0.0
        %v3239 = vadd.f32 %v3237, %v3238
        %v3240 = vsel %vm3136, %v2675, 0.0
        %v3241 = vadd.f32 %v3239, %v3240
        %v3242 = vsel %vm3136, %v2676, 0.0
        %v3243 = vadd.f32 %v3241, %v3242
        %v3244 = vsel %vm3136, %v2677, 0.0
        %v3245 = vadd.f32 %v3243, %v3244
        %v3246 = vsel %vm3136, %v2678, 0.0
        %v3247 = vadd.f32 %v3245, %v3246
        %v3248 = vsel %vm3136, %v2679, 0.0
        %v3249 = vadd.f32 %v3247, %v3248
        %v3250 = vsel %vm3136, %v2680, 0.0
        %v3251 = vadd.f32 %v3249, %v3250
        %v3252 = vsel %vm3136, %v2681, 0.0
        %v3253 = vadd.f32 %v3251, %v3252
        %v3254 = vsel %vm3136, %v2682, 0.0
        %v3255 = vadd.f32 %v3253, %v3254
        %v3256 = vsel %vm3136, %v2683, 0.0
        %v3257 = vadd.f32 %v3255, %v3256
        %v3258 = vsel %vm3136, %v2684, 0.0
        %v3259 = vadd.f32 %v3257, %v3258
        %v3260 = vsel %vm3136, %v2685, 0.0
        %v3261 = vadd.f32 %v3259, %v3260
        %v3262 = vsel %vm3136, %v2686, 0.0
        %v3263 = vadd.f32 %v3261, %v3262
        %v3264 = vsel %vm3136, %v2687, 0.0
        %v3265 = vadd.f32 %v3263, %v3264
        %v3266 = vsel %vm3136, %v2688, 0.0
        %v3267 = vadd.f32 %v3265, %v3266
        %v3268 = vsel %vm3136, %v2689, 0.0
        %v3269 = vadd.f32 %v3267, %v3268
        %v3270 = vsel %vm3136, %v2690, 0.0
        %v3271 = vadd.f32 %v3269, %v3270
        %v3272 = vsel %vm3136, %v2691, 0.0
        %v3273 = vadd.f32 %v3271, %v3272
        %v3274 = vsel %vm3136, %v2692, 0.0
        %v3275 = vadd.f32 %v3273, %v3274
        %v3276 = vsel %vm3136, %v2693, 0.0
        %v3277 = vadd.f32 %v3275, %v3276
        %v3278 = vsel %vm3136, %v2694, 0.0
        %v3279 = vadd.f32 %v3277, %v3278
        %v3280 = vsel %vm3136, %v2695, 0.0
        %v3281 = vadd.f32 %v3279, %v3280
        %v3282 = vsel %vm3136, %v2696, 0.0
        %v3283 = vadd.f32 %v3281, %v3282
        %v3284 = vsel %vm3136, %v2697, 0.0
        %v3285 = vadd.f32 %v3283, %v3284
        %v3286 = vsel %vm3136, %v2698, 0.0
        %v3287 = vadd.f32 %v3285, %v3286
        %v3288 = vsel %vm3136, %v2699, 0.0
        %v3289 = vadd.f32 %v3287, %v3288
        %v3290 = vsel %vm3136, %v2700, 0.0
        %v3291 = vadd.f32 %v3289, %v3290
        %v3292 = vsel %vm3136, %v2701, 0.0
        %v3293 = vadd.f32 %v3291, %v3292
        %v3294 = vsel %vm3136, %v2702, 0.0
        %v3295 = vadd.f32 %v3293, %v3294
        %v3296 = vsel %vm3136, %v2703, 0.0
        %v3297 = vadd.f32 %v3295, %v3296
        %v3298 = vsel %vm3136, %v2704, 0.0
        %v3299 = vadd.f32 %v3297, %v3298
        %v3300 = vsel %vm3136, %v2705, 0.0
        %v3301 = vadd.f32 %v3299, %v3300
        %v3302 = vsel %vm3136, %v2706, 0.0
        %v3303 = vadd.f32 %v3301, %v3302
        %v3304 = vsel %vm3136, %v2707, 0.0
        %v3305 = vadd.f32 %v3303, %v3304
        %v3306 = vsel %vm3136, %v2708, 0.0
        %v3307 = vadd.f32 %v3305, %v3306
        %v3308 = vsel %vm3136, %v2709, 0.0
        %v3309 = vadd.f32 %v3307, %v3308
        %v3310 = vsel %vm3136, %v2710, 0.0
        %v3311 = vadd.f32 %v3309, %v3310
        %v3312 = vsel %vm3136, %v2711, 0.0
        %v3313 = vadd.f32 %v3311, %v3312
        %v3314 = vsel %vm3136, %v2712, 0.0
        %v3315 = vadd.f32 %v3313, %v3314
        %v3316 = vsel %vm3136, %v2713, 0.0
        %v3317 = vadd.f32 %v3315, %v3316
        %v3318 = vsel %vm3136, %v2714, 0.0
        %v3319 = vadd.f32 %v3317, %v3318
        %v3320 = vsel %vm3136, %v2715, 0.0
        %v3321 = vadd.f32 %v3319, %v3320
        %v3322 = vsel %vm3136, %v2716, 0.0
        %v3323 = vadd.f32 %v3321, %v3322
        %v3324 = vsel %vm3136, %v2717, 0.0
        %v3325 = vadd.f32 %v3323, %v3324
        %v3326 = vsel %vm3136, %v2718, 0.0
        %v3327 = vadd.f32 %v3325, %v3326
        %v3328 = vsel %vm3136, %v2719, 0.0
        %v3329 = vadd.f32 %v3327, %v3328
        %v3330 = vsel %vm3136, %v2720, 0.0
        %v3331 = vadd.f32 %v3329, %v3330
        %v3332 = vsel %vm3136, %v2721, 0.0
        %v3333 = vadd.f32 %v3331, %v3332
        %v3334 = vsel %vm3136, %v2722, 0.0
        %v3335 = vadd.f32 %v3333, %v3334
        %v3336 = vsel %vm3136, %v2723, 0.0
        %v3337 = vadd.f32 %v3335, %v3336
        %v3338 = vsel %vm3136, %v2724, 0.0
        %v3339 = vadd.f32 %v3337, %v3338
        %v3340 = vsel %vm3136, %v2725, 0.0
        %v3341 = vadd.f32 %v3339, %v3340
        %v3342 = vsel %vm3136, %v2726, 0.0
        %v3343 = vadd.f32 %v3341, %v3342
        %v3344 = vsel %vm3136, %v2727, 0.0
        %v3345 = vadd.f32 %v3343, %v3344
        %v3346 = vsel %vm3136, %v2728, 0.0
        %v3347 = vadd.f32 %v3345, %v3346
        %v3348 = vsel %vm3136, %v2729, 0.0
        %v3349 = vadd.f32 %v3347, %v3348
        %v3350 = vsel %vm3136, %v2730, 0.0
        %v3351 = vadd.f32 %v3349, %v3350
        %v3352 = vsel %vm3136, %v2731, 0.0
        %v3353 = vadd.f32 %v3351, %v3352
        %v3354 = vsel %vm3136, %v2732, 0.0
        %v3355 = vadd.f32 %v3353, %v3354
        %v3356 = vsel %vm3136, %v2733, 0.0
        %v3357 = vadd.f32 %v3355, %v3356
        %v3358 = vsel %vm3136, %v2734, 0.0
        %v3359 = vadd.f32 %v3357, %v3358
        %v3360 = vsel %vm3136, %v2735, 0.0
        %v3361 = vadd.f32 %v3359, %v3360
        %v3362 = vsel %vm3136, %v2736, 0.0
        %v3363 = vadd.f32 %v3361, %v3362
        %v3364 = vsel %vm3136, %v2737, 0.0
        %v3365 = vadd.f32 %v3363, %v3364
        %v3366 = vsel %vm3136, %v2738, 0.0
        %v3367 = vadd.f32 %v3365, %v3366
        %v3368 = vsel %vm3136, %v2739, 0.0
        %v3369 = vadd.f32 %v3367, %v3368
        %v3370 = vsel %vm3136, %v2740, 0.0
        %v3371 = vadd.f32 %v3369, %v3370
        %v3372 = vsel %vm3136, %v2741, 0.0
        %v3373 = vadd.f32 %v3371, %v3372
        %v3374 = vsel %vm3136, %v2742, 0.0
        %v3375 = vadd.f32 %v3373, %v3374
        %v3376 = vsel %vm3136, %v2743, 0.0
        %v3377 = vadd.f32 %v3375, %v3376
        %v3378 = vsel %vm3136, %v2744, 0.0
        %v3379 = vadd.f32 %v3377, %v3378
        %v3380 = vsel %vm3136, %v2745, 0.0
        %v3381 = vadd.f32 %v3379, %v3380
        %v3382 = vsel %vm3136, %v2746, 0.0
        %v3383 = vadd.f32 %v3381, %v3382
        %v3384 = vsel %vm3136, %v2747, 0.0
        %v3385 = vadd.f32 %v3383, %v3384
        %v3386 = vsel %vm3136, %v2748, 0.0
        %v3387 = vadd.f32 %v3385, %v3386
        %v3388 = vsel %vm3136, %v2749, 0.0
        %v3389 = vadd.f32 %v3387, %v3388
        %v3390 = vsel %vm3136, %v2750, 0.0
        %v3391 = vadd.f32 %v3389, %v3390
        %v3392 = vsel %vm3136, %v2751, 0.0
        %v3393 = vadd.f32 %v3391, %v3392
        %v3394 = vsel %vm3136, %v2752, 0.0
        %v3395 = vadd.f32 %v3393, %v3394
        %v3396 = vsel %vm3136, %v2753, 0.0
        %v3397 = vadd.f32 %v3395, %v3396
        %v3398 = vsel %vm3136, %v2754, 0.0
        %v3399 = vadd.f32 %v3397, %v3398
        %v3400 = vsel %vm3136, %v2755, 0.0
        %v3401 = vadd.f32 %v3399, %v3400
        %v3402 = vsel %vm3136, %v2756, 0.0
        %v3403 = vadd.f32 %v3401, %v3402
        %v3404 = vsel %vm3136, %v2757, 0.0
        %v3405 = vadd.f32 %v3403, %v3404
        %v3406 = vsel %vm3136, %v2758, 0.0
        %v3407 = vadd.f32 %v3405, %v3406
        %v3408 = vsel %vm3136, %v2759, 0.0
        %v3409 = vadd.f32 %v3407, %v3408
        %v3410 = vsel %vm3136, %v2760, 0.0
        %v3411 = vadd.f32 %v3409, %v3410
        %v3412 = vsel %vm3136, %v2761, 0.0
        %v3413 = vadd.f32 %v3411, %v3412
        %v3414 = vsel %vm3136, %v2762, 0.0
        %v3415 = vadd.f32 %v3413, %v3414
        %v3416 = vsel %vm3136, %v2763, 0.0
        %v3417 = vadd.f32 %v3415, %v3416
        %v3418 = vsel %vm3136, %v2764, 0.0
        %v3419 = vadd.f32 %v3417, %v3418
        %v3420 = vsel %vm3136, %v2765, 0.0
        %v3421 = vadd.f32 %v3419, %v3420
        %v3422 = vsel %vm3136, %v2766, 0.0
        %v3423 = vadd.f32 %v3421, %v3422
        %v3424 = vsel %vm3136, %v2767, 0.0
        %v3425 = vadd.f32 %v3423, %v3424
        %v3426 = vsel %vm3136, %v2768, 0.0
        %v3427 = vadd.f32 %v3425, %v3426
        %v3428 = vsel %vm3136, %v2769, 0.0
        %v3429 = vadd.f32 %v3427, %v3428
        %v3430 = vsel %vm3136, %v2770, 0.0
        %v3431 = vadd.f32 %v3429, %v3430
        %v3432 = vsel %vm3136, %v2771, 0.0
        %v3433 = vadd.f32 %v3431, %v3432
        %v3434 = vsel %vm3136, %v2772, 0.0
        %v3435 = vadd.f32 %v3433, %v3434
        %v3436 = vsel %vm3136, %v2773, 0.0
        %v3437 = vadd.f32 %v3435, %v3436
        %v3438 = vsel %vm3136, %v2774, 0.0
        %v3439 = vadd.f32 %v3437, %v3438
        %v3440 = vsel %vm3136, %v2775, 0.0
        %v3441 = vadd.f32 %v3439, %v3440
        %v3442 = vsel %vm3136, %v2776, 0.0
        %v3443 = vadd.f32 %v3441, %v3442
        %v3444 = vsel %vm3136, %v2777, 0.0
        %v3445 = vadd.f32 %v3443, %v3444
        %v3446 = vsel %vm3136, %v2778, 0.0
        %v3447 = vadd.f32 %v3445, %v3446
        %v3448 = vsel %vm3136, %v2779, 0.0
        %v3449 = vadd.f32 %v3447, %v3448
        %v3450 = vsel %vm3136, %v2780, 0.0
        %v3451 = vadd.f32 %v3449, %v3450
        %v3452 = vsel %vm3136, %v2781, 0.0
        %v3453 = vadd.f32 %v3451, %v3452
        %v3454 = vsel %vm3136, %v2782, 0.0
        %v3455 = vadd.f32 %v3453, %v3454
        %v3456 = vsel %vm3136, %v2783, 0.0
        %v3457 = vadd.f32 %v3455, %v3456
        %v3458 = vsel %vm3136, %v2784, 0.0
        %v3459 = vadd.f32 %v3457, %v3458
        %v3460 = vsel %vm3136, %v2785, 0.0
        %v3461 = vadd.f32 %v3459, %v3460
        %v3462 = vsel %vm3136, %v2786, 0.0
        %v3463 = vadd.f32 %v3461, %v3462
        %v3464 = vsel %vm3136, %v2787, 0.0
        %v3465 = vadd.f32 %v3463, %v3464
        %v3466 = vsel %vm3136, %v2788, 0.0
        %v3467 = vadd.f32 %v3465, %v3466
        %v3468 = vsel %vm3136, %v2789, 0.0
        %v3469 = vadd.f32 %v3467, %v3468
        %v3470 = vsel %vm3136, %v2790, 0.0
        %v3471 = vadd.f32 %v3469, %v3470
        %v3472 = vsel %vm3136, %v2791, 0.0
        %v3473 = vadd.f32 %v3471, %v3472
        %v3474 = vsel %vm3136, %v2792, 0.0
        %v3475 = vadd.f32 %v3473, %v3474
        %v3476 = vsel %vm3136, %v2793, 0.0
        %v3477 = vadd.f32 %v3475, %v3476
        %v3478 = vsel %vm3136, %v2794, 0.0
        %v3479 = vadd.f32 %v3477, %v3478
        %v3480 = vsel %vm3136, %v2795, 0.0
        %v3481 = vadd.f32 %v3479, %v3480
        %v3482 = vsel %vm3136, %v2796, 0.0
        %v3483 = vadd.f32 %v3481, %v3482
        %v3484 = vsel %vm3136, %v2797, 0.0
        %v3485 = vadd.f32 %v3483, %v3484
        %v3486 = vsel %vm3136, %v2798, 0.0
        %v3487 = vadd.f32 %v3485, %v3486
        %v3488 = vsel %vm3136, %v2799, 0.0
        %v3489 = vadd.f32 %v3487, %v3488
        %v3490 = vsel %vm3136, %v2800, 0.0
        %v3491 = vadd.f32 %v3489, %v3490
        %v3492 = vsel %vm3136, %v2801, 0.0
        %v3493 = vadd.f32 %v3491, %v3492
        %v3494 = vsel %vm3136, %v2802, 0.0
        %v3495 = vadd.f32 %v3493, %v3494
        %v3496 = vsel %vm3136, %v2803, 0.0
        %v3497 = vadd.f32 %v3495, %v3496
        %v3498 = vsel %vm3136, %v2804, 0.0
        %v3499 = vadd.f32 %v3497, %v3498
        %v3500 = vsel %vm3136, %v2805, 0.0
        %v3501 = vadd.f32 %v3499, %v3500
        %v3502 = vsel %vm3136, %v2806, 0.0
        %v3503 = vadd.f32 %v3501, %v3502
        %v3504 = vsel %vm3136, %v2807, 0.0
        %v3505 = vadd.f32 %v3503, %v3504
        %v3506 = vsel %vm3136, %v2808, 0.0
        %v3507 = vadd.f32 %v3505, %v3506
        %v3508 = vsel %vm3136, %v2809, 0.0
        %v3509 = vadd.f32 %v3507, %v3508
        %v3510 = vsel %vm3136, %v2810, 0.0
        %v3511 = vadd.f32 %v3509, %v3510
        %v3512 = vsel %vm3136, %v2811, 0.0
        %v3513 = vadd.f32 %v3511, %v3512
        %v3514 = vsel %vm3136, %v2812, 0.0
        %v3515 = vadd.f32 %v3513, %v3514
        %v3516 = vsel %vm3136, %v2813, 0.0
        %v3517 = vadd.f32 %v3515, %v3516
        %v3518 = vsel %vm3136, %v2814, 0.0
        %v3519 = vadd.f32 %v3517, %v3518
        %v3520 = vsel %vm3136, %v2815, 0.0
        %v3521 = vadd.f32 %v3519, %v3520
        %v3522 = vsel %vm3136, %v2816, 0.0
        %v3523 = vadd.f32 %v3521, %v3522
        %v3524 = vsel %vm3136, %v2817, 0.0
        %v3525 = vadd.f32 %v3523, %v3524
        %v3526 = vsel %vm3136, %v2818, 0.0
        %v3527 = vadd.f32 %v3525, %v3526
        %v3528 = vsel %vm3136, %v2819, 0.0
        %v3529 = vadd.f32 %v3527, %v3528
        %v3530 = vsel %vm3136, %v2820, 0.0
        %v3531 = vadd.f32 %v3529, %v3530
        %v3532 = vsel %vm3136, %v2821, 0.0
        %v3533 = vadd.f32 %v3531, %v3532
        %v3534 = vsel %vm3136, %v2822, 0.0
        %v3535 = vadd.f32 %v3533, %v3534
        %v3536 = vsel %vm3136, %v2823, 0.0
        %v3537 = vadd.f32 %v3535, %v3536
        %v3538 = vsel %vm3136, %v2824, 0.0
        %v3539 = vadd.f32 %v3537, %v3538
        %v3540 = vsel %vm3136, %v2825, 0.0
        %v3541 = vadd.f32 %v3539, %v3540
        %v3542 = vsel %vm3136, %v2826, 0.0
        %v3543 = vadd.f32 %v3541, %v3542
        %v3544 = vsel %vm3136, %v2827, 0.0
        %v3545 = vadd.f32 %v3543, %v3544
        %v3546 = vsel %vm3136, %v2828, 0.0
        %v3547 = vadd.f32 %v3545, %v3546
        %v3548 = vsel %vm3136, %v2829, 0.0
        %v3549 = vadd.f32 %v3547, %v3548
        %v3550 = vsel %vm3136, %v2830, 0.0
        %v3551 = vadd.f32 %v3549, %v3550
        %v3552 = vsel %vm3136, %v2831, 0.0
        %v3553 = vadd.f32 %v3551, %v3552
        %v3554 = vsel %vm3136, %v2832, 0.0
        %v3555 = vadd.f32 %v3553, %v3554
        %v3556 = vsel %vm3136, %v2833, 0.0
        %v3557 = vadd.f32 %v3555, %v3556
        %v3558 = vsel %vm3136, %v2834, 0.0
        %v3559 = vadd.f32 %v3557, %v3558
        %v3560 = vsel %vm3136, %v2835, 0.0
        %v3561 = vadd.f32 %v3559, %v3560
        %v3562 = vsel %vm3136, %v2836, 0.0
        %v3563 = vadd.f32 %v3561, %v3562
        %v3564 = vsel %vm3136, %v2837, 0.0
        %v3565 = vadd.f32 %v3563, %v3564
        %v3566 = vsel %vm3136, %v2838, 0.0
        %v3567 = vadd.f32 %v3565, %v3566
        %v3568 = vsel %vm3136, %v2839, 0.0
        %v3569 = vadd.f32 %v3567, %v3568
        %v3570 = vsel %vm3136, %v2840, 0.0
        %v3571 = vadd.f32 %v3569, %v3570
        %v3572 = vsel %vm3136, %v2841, 0.0
        %v3573 = vadd.f32 %v3571, %v3572
        %v3574 = vsel %vm3136, %v2842, 0.0
        %v3575 = vadd.f32 %v3573, %v3574
        %v3576 = vsel %vm3136, %v2843, 0.0
        %v3577 = vadd.f32 %v3575, %v3576
        %v3578 = vsel %vm3136, %v2844, 0.0
        %v3579 = vadd.f32 %v3577, %v3578
        %v3580 = vsel %vm3136, %v2845, 0.0
        %v3581 = vadd.f32 %v3579, %v3580
        %v3582 = vsel %vm3136, %v2846, 0.0
        %v3583 = vadd.f32 %v3581, %v3582
        %v3584 = vsel %vm3136, %v2847, 0.0
        %v3585 = vadd.f32 %v3583, %v3584
        %v3586 = vsel %vm3136, %v2848, 0.0
        %v3587 = vadd.f32 %v3585, %v3586
        %v3588 = vsel %vm3136, %v2849, 0.0
        %v3589 = vadd.f32 %v3587, %v3588
        %v3590 = vsel %vm3136, %v2850, 0.0
        %v3591 = vadd.f32 %v3589, %v3590
        %v3592 = vsel %vm3136, %v2851, 0.0
        %v3593 = vadd.f32 %v3591, %v3592
        %v3594 = vsel %vm3136, %v2852, 0.0
        %v3595 = vadd.f32 %v3593, %v3594
        %v3596 = vsel %vm3136, %v2853, 0.0
        %v3597 = vadd.f32 %v3595, %v3596
        %v3598 = vsel %vm3136, %v2854, 0.0
        %v3599 = vadd.f32 %v3597, %v3598
        %v3600 = vsel %vm3136, %v2855, 0.0
        %v3601 = vadd.f32 %v3599, %v3600
        %v3602 = vsel %vm3136, %v2856, 0.0
        %v3603 = vadd.f32 %v3601, %v3602
        %v3604 = vsel %vm3136, %v2857, 0.0
        %v3605 = vadd.f32 %v3603, %v3604
        %v3606 = vsel %vm3136, %v2858, 0.0
        %v3607 = vadd.f32 %v3605, %v3606
        %v3608 = vsel %vm3136, %v2859, 0.0
        %v3609 = vadd.f32 %v3607, %v3608
        %v3610 = vsel %vm3136, %v2860, 0.0
        %v3611 = vadd.f32 %v3609, %v3610
        %v3612 = vsel %vm3136, %v2861, 0.0
        %v3613 = vadd.f32 %v3611, %v3612
        %v3614 = vsel %vm3136, %v2862, 0.0
        %v3615 = vadd.f32 %v3613, %v3614
        %v3616 = vsel %vm3136, %v2863, 0.0
        %v3617 = vadd.f32 %v3615, %v3616
        %v3618 = vsel %vm3136, %v2864, 0.0
        %v3619 = vadd.f32 %v3617, %v3618
        %v3620 = vsel %vm3136, %v2865, 0.0
        %v3621 = vadd.f32 %v3619, %v3620
        %v3622 = vsel %vm3136, %v2866, 0.0
        %v3623 = vadd.f32 %v3621, %v3622
        %v3624 = vsel %vm3136, %v2867, 0.0
        %v3625 = vadd.f32 %v3623, %v3624
        %v3626 = vsel %vm3136, %v2868, 0.0
        %v3627 = vadd.f32 %v3625, %v3626
        %v3628 = vsel %vm3136, %v2869, 0.0
        %v3629 = vadd.f32 %v3627, %v3628
        %v3630 = vsel %vm3136, %v2870, 0.0
        %v3631 = vadd.f32 %v3629, %v3630
        %v3632 = vsel %vm3136, %v2871, 0.0
        %v3633 = vadd.f32 %v3631, %v3632
        %v3634 = vsel %vm3136, %v2872, 0.0
        %v3635 = vadd.f32 %v3633, %v3634
        %v3636 = vsel %vm3136, %v2873, 0.0
        %v3637 = vadd.f32 %v3635, %v3636
        %v3638 = vsel %vm3136, %v2874, 0.0
        %v3639 = vadd.f32 %v3637, %v3638
        %v3640 = vsel %vm3136, %v2875, 0.0
        %v3641 = vadd.f32 %v3639, %v3640
        %v3642 = vsel %vm3136, %v2876, 0.0
        %v3643 = vadd.f32 %v3641, %v3642
        %v3644 = vsel %vm3136, %v2877, 0.0
        %v3645 = vadd.f32 %v3643, %v3644
        %v3646 = vsel %vm3136, %v2878, 0.0
        %v3647 = vadd.f32 %v3645, %v3646
        %3648 = vadd.xlane.f32.xlu0 %v3647
        %v3649 = vpop.xlane.xlu0 %3648
        %v3650 = vld [vmem:[%s3] sm:$0xff]
        %v3651 = vld [vmem:[%s3 + $0x8] sm:$0x3]
        %v3652 = vadd.f32 %v3650, %v3135
        %v3653 = vadd.f32 %v3651, %v3649
        %vm3654 = vcmask 7168
        %3655 = vst.msk [vmem:[%s3] sm:$0xff] %vm3654, %v3652
        %vm3656 = vcmask 1024
        %3657 = vst.msk [vmem:[%s3 + $0x8] sm:$0x3] %vm3656, %v3653
        %s3658 = scalar_lea.vmem %s182, 1 [#allocation2]
        %v3659 = vld [vmem:[%s3658] ss:$2 sm:$0xff]
        %s3660 = scalar_lea.vmem %s182, 17 [#allocation2]
        %v3661 = vld [vmem:[%s3660] ss:$2 sm:$0xff]
        %s3662 = scalar_lea.vmem %s182, 33 [#allocation2]
        %v3663 = vld [vmem:[%s3662] ss:$2 sm:$0xff]
        %s3664 = scalar_lea.vmem %s182, 49 [#allocation2]
        %v3665 = vld [vmem:[%s3664] ss:$2 sm:$0xff]
        %s3666 = scalar_lea.vmem %s182, 65 [#allocation2]
        %v3667 = vld [vmem:[%s3666] ss:$2 sm:$0xff]
        %s3668 = scalar_lea.vmem %s182, 81 [#allocation2]
        %v3669 = vld [vmem:[%s3668] ss:$2 sm:$0xff]
        %s3670 = scalar_lea.vmem %s182, 97 [#allocation2]
        %v3671 = vld [vmem:[%s3670] ss:$2 sm:$0xff]
        %s3672 = scalar_lea.vmem %s182, 113 [#allocation2]
        %v3673 = vld [vmem:[%s3672] ss:$2 sm:$0xff]
        %s3674 = scalar_lea.vmem %s182, 129 [#allocation2]
        %v3675 = vld [vmem:[%s3674] ss:$2 sm:$0xff]
        %s3676 = scalar_lea.vmem %s182, 145 [#allocation2]
        %v3677 = vld [vmem:[%s3676] ss:$2 sm:$0xff]
        %s3678 = scalar_lea.vmem %s182, 161 [#allocation2]
        %v3679 = vld [vmem:[%s3678] ss:$2 sm:$0xff]
        %s3680 = scalar_lea.vmem %s182, 177 [#allocation2]
        %v3681 = vld [vmem:[%s3680] ss:$2 sm:$0xff]
        %s3682 = scalar_lea.vmem %s182, 193 [#allocation2]
        %v3683 = vld [vmem:[%s3682] ss:$2 sm:$0xff]
        %s3684 = scalar_lea.vmem %s182, 209 [#allocation2]
        %v3685 = vld [vmem:[%s3684] ss:$2 sm:$0xff]
        %s3686 = scalar_lea.vmem %s182, 225 [#allocation2]
        %v3687 = vld [vmem:[%s3686] ss:$2 sm:$0xff]
        %s3688 = scalar_lea.vmem %s182, 241 [#allocation2]
        %v3689 = vld [vmem:[%s3688] ss:$2 sm:$0xff]
        %s3690 = scalar_lea.vmem %s182, 257 [#allocation2]
        %v3691 = vld [vmem:[%s3690] ss:$2 sm:$0xff]
        %s3692 = scalar_lea.vmem %s182, 273 [#allocation2]
        %v3693 = vld [vmem:[%s3692] ss:$2 sm:$0xff]
        %s3694 = scalar_lea.vmem %s182, 289 [#allocation2]
        %v3695 = vld [vmem:[%s3694] ss:$2 sm:$0xff]
        %s3696 = scalar_lea.vmem %s182, 305 [#allocation2]
        %v3697 = vld [vmem:[%s3696] ss:$2 sm:$0xff]
        %s3698 = scalar_lea.vmem %s182, 321 [#allocation2]
        %v3699 = vld [vmem:[%s3698] ss:$2 sm:$0xff]
        %s3700 = scalar_lea.vmem %s182, 337 [#allocation2]
        %v3701 = vld [vmem:[%s3700] ss:$2 sm:$0xff]
        %s3702 = scalar_lea.vmem %s182, 353 [#allocation2]
        %v3703 = vld [vmem:[%s3702] ss:$2 sm:$0xff]
        %s3704 = scalar_lea.vmem %s182, 369 [#allocation2]
        %v3705 = vld [vmem:[%s3704] ss:$2 sm:$0xff]
        %s3706 = scalar_lea.vmem %s182, 385 [#allocation2]
        %v3707 = vld [vmem:[%s3706] ss:$2 sm:$0xff]
        %s3708 = scalar_lea.vmem %s182, 401 [#allocation2]
        %v3709 = vld [vmem:[%s3708] ss:$2 sm:$0xff]
        %s3710 = scalar_lea.vmem %s182, 417 [#allocation2]
        %v3711 = vld [vmem:[%s3710] ss:$2 sm:$0xff]
        %s3712 = scalar_lea.vmem %s182, 433 [#allocation2]
        %v3713 = vld [vmem:[%s3712] ss:$2 sm:$0xff]
        %s3714 = scalar_lea.vmem %s182, 449 [#allocation2]
        %v3715 = vld [vmem:[%s3714] ss:$2 sm:$0xff]
        %s3716 = scalar_lea.vmem %s182, 465 [#allocation2]
        %v3717 = vld [vmem:[%s3716] ss:$2 sm:$0xff]
        %s3718 = scalar_lea.vmem %s182, 481 [#allocation2]
        %v3719 = vld [vmem:[%s3718] ss:$2 sm:$0xff]
        %s3720 = scalar_lea.vmem %s182, 497 [#allocation2]
        %v3721 = vld [vmem:[%s3720] ss:$2 sm:$0xff]
        %v3754 = vlaneseq
        %v3755 = vshrl.u32 %v3754, 7
        %v3756 = vsub.s32 0, %v3755
        %v3757 = vrot.slane %v3659, %v3756
        %v3758 = vlaneseq
        %v3759 = vshrl.u32 %v3758, 7
        %v3760 = vsub.s32 1, %v3759
        %v3761 = vrot.slane %v3659, %v3760
        %v3762 = vlaneseq
        %v3763 = vshrl.u32 %v3762, 7
        %v3764 = vsub.s32 2, %v3763
        %v3765 = vrot.slane %v3659, %v3764
        %v3766 = vlaneseq
        %v3767 = vshrl.u32 %v3766, 7
        %v3768 = vsub.s32 3, %v3767
        %v3769 = vrot.slane %v3659, %v3768
        %v3770 = vlaneseq
        %v3771 = vshrl.u32 %v3770, 7
        %v3772 = vsub.s32 4, %v3771
        %v3773 = vrot.slane %v3659, %v3772
        %v3774 = vlaneseq
        %v3775 = vshrl.u32 %v3774, 7
        %v3776 = vsub.s32 5, %v3775
        %v3777 = vrot.slane %v3659, %v3776
        %v3778 = vlaneseq
        %v3779 = vshrl.u32 %v3778, 7
        %v3780 = vsub.s32 6, %v3779
        %v3781 = vrot.slane %v3659, %v3780
        %v3782 = vlaneseq
        %v3783 = vshrl.u32 %v3782, 7
        %v3784 = vsub.s32 7, %v3783
        %v3785 = vrot.slane %v3659, %v3784
        %v3786 = vlaneseq
        %v3787 = vshrl.u32 %v3786, 7
        %v3788 = vsub.s32 0, %v3787
        %v3789 = vrot.slane %v3661, %v3788
        %v3790 = vlaneseq
        %v3791 = vshrl.u32 %v3790, 7
        %v3792 = vsub.s32 1, %v3791
        %v3793 = vrot.slane %v3661, %v3792
        %v3794 = vlaneseq
        %v3795 = vshrl.u32 %v3794, 7
        %v3796 = vsub.s32 2, %v3795
        %v3797 = vrot.slane %v3661, %v3796
        %v3798 = vlaneseq
        %v3799 = vshrl.u32 %v3798, 7
        %v3800 = vsub.s32 3, %v3799
        %v3801 = vrot.slane %v3661, %v3800
        %v3802 = vlaneseq
        %v3803 = vshrl.u32 %v3802, 7
        %v3804 = vsub.s32 4, %v3803
        %v3805 = vrot.slane %v3661, %v3804
        %v3806 = vlaneseq
        %v3807 = vshrl.u32 %v3806, 7
        %v3808 = vsub.s32 5, %v3807
        %v3809 = vrot.slane %v3661, %v3808
        %v3810 = vlaneseq
        %v3811 = vshrl.u32 %v3810, 7
        %v3812 = vsub.s32 6, %v3811
        %v3813 = vrot.slane %v3661, %v3812
        %v3814 = vlaneseq
        %v3815 = vshrl.u32 %v3814, 7
        %v3816 = vsub.s32 7, %v3815
        %v3817 = vrot.slane %v3661, %v3816
        %v3818 = vlaneseq
        %v3819 = vshrl.u32 %v3818, 7
        %v3820 = vsub.s32 0, %v3819
        %v3821 = vrot.slane %v3663, %v3820
        %v3822 = vlaneseq
        %v3823 = vshrl.u32 %v3822, 7
        %v3824 = vsub.s32 1, %v3823
        %v3825 = vrot.slane %v3663, %v3824
        %v3826 = vlaneseq
        %v3827 = vshrl.u32 %v3826, 7
        %v3828 = vsub.s32 2, %v3827
        %v3829 = vrot.slane %v3663, %v3828
        %v3830 = vlaneseq
        %v3831 = vshrl.u32 %v3830, 7
        %v3832 = vsub.s32 3, %v3831
        %v3833 = vrot.slane %v3663, %v3832
        %v3834 = vlaneseq
        %v3835 = vshrl.u32 %v3834, 7
        %v3836 = vsub.s32 4, %v3835
        %v3837 = vrot.slane %v3663, %v3836
        %v3838 = vlaneseq
        %v3839 = vshrl.u32 %v3838, 7
        %v3840 = vsub.s32 5, %v3839
        %v3841 = vrot.slane %v3663, %v3840
        %v3842 = vlaneseq
        %v3843 = vshrl.u32 %v3842, 7
        %v3844 = vsub.s32 6, %v3843
        %v3845 = vrot.slane %v3663, %v3844
        %v3846 = vlaneseq
        %v3847 = vshrl.u32 %v3846, 7
        %v3848 = vsub.s32 7, %v3847
        %v3849 = vrot.slane %v3663, %v3848
        %v3850 = vlaneseq
        %v3851 = vshrl.u32 %v3850, 7
        %v3852 = vsub.s32 0, %v3851
        %v3853 = vrot.slane %v3665, %v3852
        %v3854 = vlaneseq
        %v3855 = vshrl.u32 %v3854, 7
        %v3856 = vsub.s32 1, %v3855
        %v3857 = vrot.slane %v3665, %v3856
        %v3858 = vlaneseq
        %v3859 = vshrl.u32 %v3858, 7
        %v3860 = vsub.s32 2, %v3859
        %v3861 = vrot.slane %v3665, %v3860
        %v3862 = vlaneseq
        %v3863 = vshrl.u32 %v3862, 7
        %v3864 = vsub.s32 3, %v3863
        %v3865 = vrot.slane %v3665, %v3864
        %v3866 = vlaneseq
        %v3867 = vshrl.u32 %v3866, 7
        %v3868 = vsub.s32 4, %v3867
        %v3869 = vrot.slane %v3665, %v3868
        %v3870 = vlaneseq
        %v3871 = vshrl.u32 %v3870, 7
        %v3872 = vsub.s32 5, %v3871
        %v3873 = vrot.slane %v3665, %v3872
        %v3874 = vlaneseq
        %v3875 = vshrl.u32 %v3874, 7
        %v3876 = vsub.s32 6, %v3875
        %v3877 = vrot.slane %v3665, %v3876
        %v3878 = vlaneseq
        %v3879 = vshrl.u32 %v3878, 7
        %v3880 = vsub.s32 7, %v3879
        %v3881 = vrot.slane %v3665, %v3880
        %v3882 = vlaneseq
        %v3883 = vshrl.u32 %v3882, 7
        %v3884 = vsub.s32 0, %v3883
        %v3885 = vrot.slane %v3667, %v3884
        %v3886 = vlaneseq
        %v3887 = vshrl.u32 %v3886, 7
        %v3888 = vsub.s32 1, %v3887
        %v3889 = vrot.slane %v3667, %v3888
        %v3890 = vlaneseq
        %v3891 = vshrl.u32 %v3890, 7
        %v3892 = vsub.s32 2, %v3891
        %v3893 = vrot.slane %v3667, %v3892
        %v3894 = vlaneseq
        %v3895 = vshrl.u32 %v3894, 7
        %v3896 = vsub.s32 3, %v3895
        %v3897 = vrot.slane %v3667, %v3896
        %v3898 = vlaneseq
        %v3899 = vshrl.u32 %v3898, 7
        %v3900 = vsub.s32 4, %v3899
        %v3901 = vrot.slane %v3667, %v3900
        %v3902 = vlaneseq
        %v3903 = vshrl.u32 %v3902, 7
        %v3904 = vsub.s32 5, %v3903
        %v3905 = vrot.slane %v3667, %v3904
        %v3906 = vlaneseq
        %v3907 = vshrl.u32 %v3906, 7
        %v3908 = vsub.s32 6, %v3907
        %v3909 = vrot.slane %v3667, %v3908
        %v3910 = vlaneseq
        %v3911 = vshrl.u32 %v3910, 7
        %v3912 = vsub.s32 7, %v3911
        %v3913 = vrot.slane %v3667, %v3912
        %v3914 = vlaneseq
        %v3915 = vshrl.u32 %v3914, 7
        %v3916 = vsub.s32 0, %v3915
        %v3917 = vrot.slane %v3669, %v3916
        %v3918 = vlaneseq
        %v3919 = vshrl.u32 %v3918, 7
        %v3920 = vsub.s32 1, %v3919
        %v3921 = vrot.slane %v3669, %v3920
        %v3922 = vlaneseq
        %v3923 = vshrl.u32 %v3922, 7
        %v3924 = vsub.s32 2, %v3923
        %v3925 = vrot.slane %v3669, %v3924
        %v3926 = vlaneseq
        %v3927 = vshrl.u32 %v3926, 7
        %v3928 = vsub.s32 3, %v3927
        %v3929 = vrot.slane %v3669, %v3928
        %v3930 = vlaneseq
        %v3931 = vshrl.u32 %v3930, 7
        %v3932 = vsub.s32 4, %v3931
        %v3933 = vrot.slane %v3669, %v3932
        %v3934 = vlaneseq
        %v3935 = vshrl.u32 %v3934, 7
        %v3936 = vsub.s32 5, %v3935
        %v3937 = vrot.slane %v3669, %v3936
        %v3938 = vlaneseq
        %v3939 = vshrl.u32 %v3938, 7
        %v3940 = vsub.s32 6, %v3939
        %v3941 = vrot.slane %v3669, %v3940
        %v3942 = vlaneseq
        %v3943 = vshrl.u32 %v3942, 7
        %v3944 = vsub.s32 7, %v3943
        %v3945 = vrot.slane %v3669, %v3944
        %v3946 = vlaneseq
        %v3947 = vshrl.u32 %v3946, 7
        %v3948 = vsub.s32 0, %v3947
        %v3949 = vrot.slane %v3671, %v3948
        %v3950 = vlaneseq
        %v3951 = vshrl.u32 %v3950, 7
        %v3952 = vsub.s32 1, %v3951
        %v3953 = vrot.slane %v3671, %v3952
        %v3954 = vlaneseq
        %v3955 = vshrl.u32 %v3954, 7
        %v3956 = vsub.s32 2, %v3955
        %v3957 = vrot.slane %v3671, %v3956
        %v3958 = vlaneseq
        %v3959 = vshrl.u32 %v3958, 7
        %v3960 = vsub.s32 3, %v3959
        %v3961 = vrot.slane %v3671, %v3960
        %v3962 = vlaneseq
        %v3963 = vshrl.u32 %v3962, 7
        %v3964 = vsub.s32 4, %v3963
        %v3965 = vrot.slane %v3671, %v3964
        %v3966 = vlaneseq
        %v3967 = vshrl.u32 %v3966, 7
        %v3968 = vsub.s32 5, %v3967
        %v3969 = vrot.slane %v3671, %v3968
        %v3970 = vlaneseq
        %v3971 = vshrl.u32 %v3970, 7
        %v3972 = vsub.s32 6, %v3971
        %v3973 = vrot.slane %v3671, %v3972
        %v3974 = vlaneseq
        %v3975 = vshrl.u32 %v3974, 7
        %v3976 = vsub.s32 7, %v3975
        %v3977 = vrot.slane %v3671, %v3976
        %v3978 = vlaneseq
        %v3979 = vshrl.u32 %v3978, 7
        %v3980 = vsub.s32 0, %v3979
        %v3981 = vrot.slane %v3673, %v3980
        %v3982 = vlaneseq
        %v3983 = vshrl.u32 %v3982, 7
        %v3984 = vsub.s32 1, %v3983
        %v3985 = vrot.slane %v3673, %v3984
        %v3986 = vlaneseq
        %v3987 = vshrl.u32 %v3986, 7
        %v3988 = vsub.s32 2, %v3987
        %v3989 = vrot.slane %v3673, %v3988
        %v3990 = vlaneseq
        %v3991 = vshrl.u32 %v3990, 7
        %v3992 = vsub.s32 3, %v3991
        %v3993 = vrot.slane %v3673, %v3992
        %v3994 = vlaneseq
        %v3995 = vshrl.u32 %v3994, 7
        %v3996 = vsub.s32 4, %v3995
        %v3997 = vrot.slane %v3673, %v3996
        %v3998 = vlaneseq
        %v3999 = vshrl.u32 %v3998, 7
        %v4000 = vsub.s32 5, %v3999
        %v4001 = vrot.slane %v3673, %v4000
        %v4002 = vlaneseq
        %v4003 = vshrl.u32 %v4002, 7
        %v4004 = vsub.s32 6, %v4003
        %v4005 = vrot.slane %v3673, %v4004
        %v4006 = vlaneseq
        %v4007 = vshrl.u32 %v4006, 7
        %v4008 = vsub.s32 7, %v4007
        %v4009 = vrot.slane %v3673, %v4008
        %v4010 = vlaneseq
        %v4011 = vshrl.u32 %v4010, 7
        %v4012 = vsub.s32 0, %v4011
        %v4013 = vrot.slane %v3675, %v4012
        %v4014 = vlaneseq
        %v4015 = vshrl.u32 %v4014, 7
        %v4016 = vsub.s32 1, %v4015
        %v4017 = vrot.slane %v3675, %v4016
        %v4018 = vlaneseq
        %v4019 = vshrl.u32 %v4018, 7
        %v4020 = vsub.s32 2, %v4019
        %v4021 = vrot.slane %v3675, %v4020
        %v4022 = vlaneseq
        %v4023 = vshrl.u32 %v4022, 7
        %v4024 = vsub.s32 3, %v4023
        %v4025 = vrot.slane %v3675, %v4024
        %v4026 = vlaneseq
        %v4027 = vshrl.u32 %v4026, 7
        %v4028 = vsub.s32 4, %v4027
        %v4029 = vrot.slane %v3675, %v4028
        %v4030 = vlaneseq
        %v4031 = vshrl.u32 %v4030, 7
        %v4032 = vsub.s32 5, %v4031
        %v4033 = vrot.slane %v3675, %v4032
        %v4034 = vlaneseq
        %v4035 = vshrl.u32 %v4034, 7
        %v4036 = vsub.s32 6, %v4035
        %v4037 = vrot.slane %v3675, %v4036
        %v4038 = vlaneseq
        %v4039 = vshrl.u32 %v4038, 7
        %v4040 = vsub.s32 7, %v4039
        %v4041 = vrot.slane %v3675, %v4040
        %v4042 = vlaneseq
        %v4043 = vshrl.u32 %v4042, 7
        %v4044 = vsub.s32 0, %v4043
        %v4045 = vrot.slane %v3677, %v4044
        %v4046 = vlaneseq
        %v4047 = vshrl.u32 %v4046, 7
        %v4048 = vsub.s32 1, %v4047
        %v4049 = vrot.slane %v3677, %v4048
        %v4050 = vlaneseq
        %v4051 = vshrl.u32 %v4050, 7
        %v4052 = vsub.s32 2, %v4051
        %v4053 = vrot.slane %v3677, %v4052
        %v4054 = vlaneseq
        %v4055 = vshrl.u32 %v4054, 7
        %v4056 = vsub.s32 3, %v4055
        %v4057 = vrot.slane %v3677, %v4056
        %v4058 = vlaneseq
        %v4059 = vshrl.u32 %v4058, 7
        %v4060 = vsub.s32 4, %v4059
        %v4061 = vrot.slane %v3677, %v4060
        %v4062 = vlaneseq
        %v4063 = vshrl.u32 %v4062, 7
        %v4064 = vsub.s32 5, %v4063
        %v4065 = vrot.slane %v3677, %v4064
        %v4066 = vlaneseq
        %v4067 = vshrl.u32 %v4066, 7
        %v4068 = vsub.s32 6, %v4067
        %v4069 = vrot.slane %v3677, %v4068
        %v4070 = vlaneseq
        %v4071 = vshrl.u32 %v4070, 7
        %v4072 = vsub.s32 7, %v4071
        %v4073 = vrot.slane %v3677, %v4072
        %v4074 = vlaneseq
        %v4075 = vshrl.u32 %v4074, 7
        %v4076 = vsub.s32 0, %v4075
        %v4077 = vrot.slane %v3679, %v4076
        %v4078 = vlaneseq
        %v4079 = vshrl.u32 %v4078, 7
        %v4080 = vsub.s32 1, %v4079
        %v4081 = vrot.slane %v3679, %v4080
        %v4082 = vlaneseq
        %v4083 = vshrl.u32 %v4082, 7
        %v4084 = vsub.s32 2, %v4083
        %v4085 = vrot.slane %v3679, %v4084
        %v4086 = vlaneseq
        %v4087 = vshrl.u32 %v4086, 7
        %v4088 = vsub.s32 3, %v4087
        %v4089 = vrot.slane %v3679, %v4088
        %v4090 = vlaneseq
        %v4091 = vshrl.u32 %v4090, 7
        %v4092 = vsub.s32 4, %v4091
        %v4093 = vrot.slane %v3679, %v4092
        %v4094 = vlaneseq
        %v4095 = vshrl.u32 %v4094, 7
        %v4096 = vsub.s32 5, %v4095
        %v4097 = vrot.slane %v3679, %v4096
        %v4098 = vlaneseq
        %v4099 = vshrl.u32 %v4098, 7
        %v4100 = vsub.s32 6, %v4099
        %v4101 = vrot.slane %v3679, %v4100
        %v4102 = vlaneseq
        %v4103 = vshrl.u32 %v4102, 7
        %v4104 = vsub.s32 7, %v4103
        %v4105 = vrot.slane %v3679, %v4104
        %v4106 = vlaneseq
        %v4107 = vshrl.u32 %v4106, 7
        %v4108 = vsub.s32 0, %v4107
        %v4109 = vrot.slane %v3681, %v4108
        %v4110 = vlaneseq
        %v4111 = vshrl.u32 %v4110, 7
        %v4112 = vsub.s32 1, %v4111
        %v4113 = vrot.slane %v3681, %v4112
        %v4114 = vlaneseq
        %v4115 = vshrl.u32 %v4114, 7
        %v4116 = vsub.s32 2, %v4115
        %v4117 = vrot.slane %v3681, %v4116
        %v4118 = vlaneseq
        %v4119 = vshrl.u32 %v4118, 7
        %v4120 = vsub.s32 3, %v4119
        %v4121 = vrot.slane %v3681, %v4120
        %v4122 = vlaneseq
        %v4123 = vshrl.u32 %v4122, 7
        %v4124 = vsub.s32 4, %v4123
        %v4125 = vrot.slane %v3681, %v4124
        %v4126 = vlaneseq
        %v4127 = vshrl.u32 %v4126, 7
        %v4128 = vsub.s32 5, %v4127
        %v4129 = vrot.slane %v3681, %v4128
        %v4130 = vlaneseq
        %v4131 = vshrl.u32 %v4130, 7
        %v4132 = vsub.s32 6, %v4131
        %v4133 = vrot.slane %v3681, %v4132
        %v4134 = vlaneseq
        %v4135 = vshrl.u32 %v4134, 7
        %v4136 = vsub.s32 7, %v4135
        %v4137 = vrot.slane %v3681, %v4136
        %v4138 = vlaneseq
        %v4139 = vshrl.u32 %v4138, 7
        %v4140 = vsub.s32 0, %v4139
        %v4141 = vrot.slane %v3683, %v4140
        %v4142 = vlaneseq
        %v4143 = vshrl.u32 %v4142, 7
        %v4144 = vsub.s32 1, %v4143
        %v4145 = vrot.slane %v3683, %v4144
        %v4146 = vlaneseq
        %v4147 = vshrl.u32 %v4146, 7
        %v4148 = vsub.s32 2, %v4147
        %v4149 = vrot.slane %v3683, %v4148
        %v4150 = vlaneseq
        %v4151 = vshrl.u32 %v4150, 7
        %v4152 = vsub.s32 3, %v4151
        %v4153 = vrot.slane %v3683, %v4152
        %v4154 = vlaneseq
        %v4155 = vshrl.u32 %v4154, 7
        %v4156 = vsub.s32 4, %v4155
        %v4157 = vrot.slane %v3683, %v4156
        %v4158 = vlaneseq
        %v4159 = vshrl.u32 %v4158, 7
        %v4160 = vsub.s32 5, %v4159
        %v4161 = vrot.slane %v3683, %v4160
        %v4162 = vlaneseq
        %v4163 = vshrl.u32 %v4162, 7
        %v4164 = vsub.s32 6, %v4163
        %v4165 = vrot.slane %v3683, %v4164
        %v4166 = vlaneseq
        %v4167 = vshrl.u32 %v4166, 7
        %v4168 = vsub.s32 7, %v4167
        %v4169 = vrot.slane %v3683, %v4168
        %v4170 = vlaneseq
        %v4171 = vshrl.u32 %v4170, 7
        %v4172 = vsub.s32 0, %v4171
        %v4173 = vrot.slane %v3685, %v4172
        %v4174 = vlaneseq
        %v4175 = vshrl.u32 %v4174, 7
        %v4176 = vsub.s32 1, %v4175
        %v4177 = vrot.slane %v3685, %v4176
        %v4178 = vlaneseq
        %v4179 = vshrl.u32 %v4178, 7
        %v4180 = vsub.s32 2, %v4179
        %v4181 = vrot.slane %v3685, %v4180
        %v4182 = vlaneseq
        %v4183 = vshrl.u32 %v4182, 7
        %v4184 = vsub.s32 3, %v4183
        %v4185 = vrot.slane %v3685, %v4184
        %v4186 = vlaneseq
        %v4187 = vshrl.u32 %v4186, 7
        %v4188 = vsub.s32 4, %v4187
        %v4189 = vrot.slane %v3685, %v4188
        %v4190 = vlaneseq
        %v4191 = vshrl.u32 %v4190, 7
        %v4192 = vsub.s32 5, %v4191
        %v4193 = vrot.slane %v3685, %v4192
        %v4194 = vlaneseq
        %v4195 = vshrl.u32 %v4194, 7
        %v4196 = vsub.s32 6, %v4195
        %v4197 = vrot.slane %v3685, %v4196
        %v4198 = vlaneseq
        %v4199 = vshrl.u32 %v4198, 7
        %v4200 = vsub.s32 7, %v4199
        %v4201 = vrot.slane %v3685, %v4200
        %v4202 = vlaneseq
        %v4203 = vshrl.u32 %v4202, 7
        %v4204 = vsub.s32 0, %v4203
        %v4205 = vrot.slane %v3687, %v4204
        %v4206 = vlaneseq
        %v4207 = vshrl.u32 %v4206, 7
        %v4208 = vsub.s32 1, %v4207
        %v4209 = vrot.slane %v3687, %v4208
        %v4210 = vlaneseq
        %v4211 = vshrl.u32 %v4210, 7
        %v4212 = vsub.s32 2, %v4211
        %v4213 = vrot.slane %v3687, %v4212
        %v4214 = vlaneseq
        %v4215 = vshrl.u32 %v4214, 7
        %v4216 = vsub.s32 3, %v4215
        %v4217 = vrot.slane %v3687, %v4216
        %v4218 = vlaneseq
        %v4219 = vshrl.u32 %v4218, 7
        %v4220 = vsub.s32 4, %v4219
        %v4221 = vrot.slane %v3687, %v4220
        %v4222 = vlaneseq
        %v4223 = vshrl.u32 %v4222, 7
        %v4224 = vsub.s32 5, %v4223
        %v4225 = vrot.slane %v3687, %v4224
        %v4226 = vlaneseq
        %v4227 = vshrl.u32 %v4226, 7
        %v4228 = vsub.s32 6, %v4227
        %v4229 = vrot.slane %v3687, %v4228
        %v4230 = vlaneseq
        %v4231 = vshrl.u32 %v4230, 7
        %v4232 = vsub.s32 7, %v4231
        %v4233 = vrot.slane %v3687, %v4232
        %v4234 = vlaneseq
        %v4235 = vshrl.u32 %v4234, 7
        %v4236 = vsub.s32 0, %v4235
        %v4237 = vrot.slane %v3689, %v4236
        %v4238 = vlaneseq
        %v4239 = vshrl.u32 %v4238, 7
        %v4240 = vsub.s32 1, %v4239
        %v4241 = vrot.slane %v3689, %v4240
        %v4242 = vlaneseq
        %v4243 = vshrl.u32 %v4242, 7
        %v4244 = vsub.s32 2, %v4243
        %v4245 = vrot.slane %v3689, %v4244
        %v4246 = vlaneseq
        %v4247 = vshrl.u32 %v4246, 7
        %v4248 = vsub.s32 3, %v4247
        %v4249 = vrot.slane %v3689, %v4248
        %v4250 = vlaneseq
        %v4251 = vshrl.u32 %v4250, 7
        %v4252 = vsub.s32 4, %v4251
        %v4253 = vrot.slane %v3689, %v4252
        %v4254 = vlaneseq
        %v4255 = vshrl.u32 %v4254, 7
        %v4256 = vsub.s32 5, %v4255
        %v4257 = vrot.slane %v3689, %v4256
        %v4258 = vlaneseq
        %v4259 = vshrl.u32 %v4258, 7
        %v4260 = vsub.s32 6, %v4259
        %v4261 = vrot.slane %v3689, %v4260
        %v4262 = vlaneseq
        %v4263 = vshrl.u32 %v4262, 7
        %v4264 = vsub.s32 7, %v4263
        %v4265 = vrot.slane %v3689, %v4264
        %v4266 = vlaneseq
        %v4267 = vshrl.u32 %v4266, 7
        %v4268 = vsub.s32 0, %v4267
        %v4269 = vrot.slane %v3691, %v4268
        %v4270 = vlaneseq
        %v4271 = vshrl.u32 %v4270, 7
        %v4272 = vsub.s32 1, %v4271
        %v4273 = vrot.slane %v3691, %v4272
        %v4274 = vlaneseq
        %v4275 = vshrl.u32 %v4274, 7
        %v4276 = vsub.s32 2, %v4275
        %v4277 = vrot.slane %v3691, %v4276
        %v4278 = vlaneseq
        %v4279 = vshrl.u32 %v4278, 7
        %v4280 = vsub.s32 3, %v4279
        %v4281 = vrot.slane %v3691, %v4280
        %v4282 = vlaneseq
        %v4283 = vshrl.u32 %v4282, 7
        %v4284 = vsub.s32 4, %v4283
        %v4285 = vrot.slane %v3691, %v4284
        %v4286 = vlaneseq
        %v4287 = vshrl.u32 %v4286, 7
        %v4288 = vsub.s32 5, %v4287
        %v4289 = vrot.slane %v3691, %v4288
        %v4290 = vlaneseq
        %v4291 = vshrl.u32 %v4290, 7
        %v4292 = vsub.s32 6, %v4291
        %v4293 = vrot.slane %v3691, %v4292
        %v4294 = vlaneseq
        %v4295 = vshrl.u32 %v4294, 7
        %v4296 = vsub.s32 7, %v4295
        %v4297 = vrot.slane %v3691, %v4296
        %v4298 = vlaneseq
        %v4299 = vshrl.u32 %v4298, 7
        %v4300 = vsub.s32 0, %v4299
        %v4301 = vrot.slane %v3693, %v4300
        %v4302 = vlaneseq
        %v4303 = vshrl.u32 %v4302, 7
        %v4304 = vsub.s32 1, %v4303
        %v4305 = vrot.slane %v3693, %v4304
        %v4306 = vlaneseq
        %v4307 = vshrl.u32 %v4306, 7
        %v4308 = vsub.s32 2, %v4307
        %v4309 = vrot.slane %v3693, %v4308
        %v4310 = vlaneseq
        %v4311 = vshrl.u32 %v4310, 7
        %v4312 = vsub.s32 3, %v4311
        %v4313 = vrot.slane %v3693, %v4312
        %v4314 = vlaneseq
        %v4315 = vshrl.u32 %v4314, 7
        %v4316 = vsub.s32 4, %v4315
        %v4317 = vrot.slane %v3693, %v4316
        %v4318 = vlaneseq
        %v4319 = vshrl.u32 %v4318, 7
        %v4320 = vsub.s32 5, %v4319
        %v4321 = vrot.slane %v3693, %v4320
        %v4322 = vlaneseq
        %v4323 = vshrl.u32 %v4322, 7
        %v4324 = vsub.s32 6, %v4323
        %v4325 = vrot.slane %v3693, %v4324
        %v4326 = vlaneseq
        %v4327 = vshrl.u32 %v4326, 7
        %v4328 = vsub.s32 7, %v4327
        %v4329 = vrot.slane %v3693, %v4328
        %v4330 = vlaneseq
        %v4331 = vshrl.u32 %v4330, 7
        %v4332 = vsub.s32 0, %v4331
        %v4333 = vrot.slane %v3695, %v4332
        %v4334 = vlaneseq
        %v4335 = vshrl.u32 %v4334, 7
        %v4336 = vsub.s32 1, %v4335
        %v4337 = vrot.slane %v3695, %v4336
        %v4338 = vlaneseq
        %v4339 = vshrl.u32 %v4338, 7
        %v4340 = vsub.s32 2, %v4339
        %v4341 = vrot.slane %v3695, %v4340
        %v4342 = vlaneseq
        %v4343 = vshrl.u32 %v4342, 7
        %v4344 = vsub.s32 3, %v4343
        %v4345 = vrot.slane %v3695, %v4344
        %v4346 = vlaneseq
        %v4347 = vshrl.u32 %v4346, 7
        %v4348 = vsub.s32 4, %v4347
        %v4349 = vrot.slane %v3695, %v4348
        %v4350 = vlaneseq
        %v4351 = vshrl.u32 %v4350, 7
        %v4352 = vsub.s32 5, %v4351
        %v4353 = vrot.slane %v3695, %v4352
        %v4354 = vlaneseq
        %v4355 = vshrl.u32 %v4354, 7
        %v4356 = vsub.s32 6, %v4355
        %v4357 = vrot.slane %v3695, %v4356
        %v4358 = vlaneseq
        %v4359 = vshrl.u32 %v4358, 7
        %v4360 = vsub.s32 7, %v4359
        %v4361 = vrot.slane %v3695, %v4360
        %v4362 = vlaneseq
        %v4363 = vshrl.u32 %v4362, 7
        %v4364 = vsub.s32 0, %v4363
        %v4365 = vrot.slane %v3697, %v4364
        %v4366 = vlaneseq
        %v4367 = vshrl.u32 %v4366, 7
        %v4368 = vsub.s32 1, %v4367
        %v4369 = vrot.slane %v3697, %v4368
        %v4370 = vlaneseq
        %v4371 = vshrl.u32 %v4370, 7
        %v4372 = vsub.s32 2, %v4371
        %v4373 = vrot.slane %v3697, %v4372
        %v4374 = vlaneseq
        %v4375 = vshrl.u32 %v4374, 7
        %v4376 = vsub.s32 3, %v4375
        %v4377 = vrot.slane %v3697, %v4376
        %v4378 = vlaneseq
        %v4379 = vshrl.u32 %v4378, 7
        %v4380 = vsub.s32 4, %v4379
        %v4381 = vrot.slane %v3697, %v4380
        %v4382 = vlaneseq
        %v4383 = vshrl.u32 %v4382, 7
        %v4384 = vsub.s32 5, %v4383
        %v4385 = vrot.slane %v3697, %v4384
        %v4386 = vlaneseq
        %v4387 = vshrl.u32 %v4386, 7
        %v4388 = vsub.s32 6, %v4387
        %v4389 = vrot.slane %v3697, %v4388
        %v4390 = vlaneseq
        %v4391 = vshrl.u32 %v4390, 7
        %v4392 = vsub.s32 7, %v4391
        %v4393 = vrot.slane %v3697, %v4392
        %v4394 = vlaneseq
        %v4395 = vshrl.u32 %v4394, 7
        %v4396 = vsub.s32 0, %v4395
        %v4397 = vrot.slane %v3699, %v4396
        %v4398 = vlaneseq
        %v4399 = vshrl.u32 %v4398, 7
        %v4400 = vsub.s32 1, %v4399
        %v4401 = vrot.slane %v3699, %v4400
        %v4402 = vlaneseq
        %v4403 = vshrl.u32 %v4402, 7
        %v4404 = vsub.s32 2, %v4403
        %v4405 = vrot.slane %v3699, %v4404
        %v4406 = vlaneseq
        %v4407 = vshrl.u32 %v4406, 7
        %v4408 = vsub.s32 3, %v4407
        %v4409 = vrot.slane %v3699, %v4408
        %v4410 = vlaneseq
        %v4411 = vshrl.u32 %v4410, 7
        %v4412 = vsub.s32 4, %v4411
        %v4413 = vrot.slane %v3699, %v4412
        %v4414 = vlaneseq
        %v4415 = vshrl.u32 %v4414, 7
        %v4416 = vsub.s32 5, %v4415
        %v4417 = vrot.slane %v3699, %v4416
        %v4418 = vlaneseq
        %v4419 = vshrl.u32 %v4418, 7
        %v4420 = vsub.s32 6, %v4419
        %v4421 = vrot.slane %v3699, %v4420
        %v4422 = vlaneseq
        %v4423 = vshrl.u32 %v4422, 7
        %v4424 = vsub.s32 7, %v4423
        %v4425 = vrot.slane %v3699, %v4424
        %v4426 = vlaneseq
        %v4427 = vshrl.u32 %v4426, 7
        %v4428 = vsub.s32 0, %v4427
        %v4429 = vrot.slane %v3701, %v4428
        %v4430 = vlaneseq
        %v4431 = vshrl.u32 %v4430, 7
        %v4432 = vsub.s32 1, %v4431
        %v4433 = vrot.slane %v3701, %v4432
        %v4434 = vlaneseq
        %v4435 = vshrl.u32 %v4434, 7
        %v4436 = vsub.s32 2, %v4435
        %v4437 = vrot.slane %v3701, %v4436
        %v4438 = vlaneseq
        %v4439 = vshrl.u32 %v4438, 7
        %v4440 = vsub.s32 3, %v4439
        %v4441 = vrot.slane %v3701, %v4440
        %v4442 = vlaneseq
        %v4443 = vshrl.u32 %v4442, 7
        %v4444 = vsub.s32 4, %v4443
        %v4445 = vrot.slane %v3701, %v4444
        %v4446 = vlaneseq
        %v4447 = vshrl.u32 %v4446, 7
        %v4448 = vsub.s32 5, %v4447
        %v4449 = vrot.slane %v3701, %v4448
        %v4450 = vlaneseq
        %v4451 = vshrl.u32 %v4450, 7
        %v4452 = vsub.s32 6, %v4451
        %v4453 = vrot.slane %v3701, %v4452
        %v4454 = vlaneseq
        %v4455 = vshrl.u32 %v4454, 7
        %v4456 = vsub.s32 7, %v4455
        %v4457 = vrot.slane %v3701, %v4456
        %v4458 = vlaneseq
        %v4459 = vshrl.u32 %v4458, 7
        %v4460 = vsub.s32 0, %v4459
        %v4461 = vrot.slane %v3703, %v4460
        %v4462 = vlaneseq
        %v4463 = vshrl.u32 %v4462, 7
        %v4464 = vsub.s32 1, %v4463
        %v4465 = vrot.slane %v3703, %v4464
        %v4466 = vlaneseq
        %v4467 = vshrl.u32 %v4466, 7
        %v4468 = vsub.s32 2, %v4467
        %v4469 = vrot.slane %v3703, %v4468
        %v4470 = vlaneseq
        %v4471 = vshrl.u32 %v4470, 7
        %v4472 = vsub.s32 3, %v4471
        %v4473 = vrot.slane %v3703, %v4472
        %v4474 = vlaneseq
        %v4475 = vshrl.u32 %v4474, 7
        %v4476 = vsub.s32 4, %v4475
        %v4477 = vrot.slane %v3703, %v4476
        %v4478 = vlaneseq
        %v4479 = vshrl.u32 %v4478, 7
        %v4480 = vsub.s32 5, %v4479
        %v4481 = vrot.slane %v3703, %v4480
        %v4482 = vlaneseq
        %v4483 = vshrl.u32 %v4482, 7
        %v4484 = vsub.s32 6, %v4483
        %v4485 = vrot.slane %v3703, %v4484
        %v4486 = vlaneseq
        %v4487 = vshrl.u32 %v4486, 7
        %v4488 = vsub.s32 7, %v4487
        %v4489 = vrot.slane %v3703, %v4488
        %v4490 = vlaneseq
        %v4491 = vshrl.u32 %v4490, 7
        %v4492 = vsub.s32 0, %v4491
        %v4493 = vrot.slane %v3705, %v4492
        %v4494 = vlaneseq
        %v4495 = vshrl.u32 %v4494, 7
        %v4496 = vsub.s32 1, %v4495
        %v4497 = vrot.slane %v3705, %v4496
        %v4498 = vlaneseq
        %v4499 = vshrl.u32 %v4498, 7
        %v4500 = vsub.s32 2, %v4499
        %v4501 = vrot.slane %v3705, %v4500
        %v4502 = vlaneseq
        %v4503 = vshrl.u32 %v4502, 7
        %v4504 = vsub.s32 3, %v4503
        %v4505 = vrot.slane %v3705, %v4504
        %v4506 = vlaneseq
        %v4507 = vshrl.u32 %v4506, 7
        %v4508 = vsub.s32 4, %v4507
        %v4509 = vrot.slane %v3705, %v4508
        %v4510 = vlaneseq
        %v4511 = vshrl.u32 %v4510, 7
        %v4512 = vsub.s32 5, %v4511
        %v4513 = vrot.slane %v3705, %v4512
        %v4514 = vlaneseq
        %v4515 = vshrl.u32 %v4514, 7
        %v4516 = vsub.s32 6, %v4515
        %v4517 = vrot.slane %v3705, %v4516
        %v4518 = vlaneseq
        %v4519 = vshrl.u32 %v4518, 7
        %v4520 = vsub.s32 7, %v4519
        %v4521 = vrot.slane %v3705, %v4520
        %v4522 = vlaneseq
        %v4523 = vshrl.u32 %v4522, 7
        %v4524 = vsub.s32 0, %v4523
        %v4525 = vrot.slane %v3707, %v4524
        %v4526 = vlaneseq
        %v4527 = vshrl.u32 %v4526, 7
        %v4528 = vsub.s32 1, %v4527
        %v4529 = vrot.slane %v3707, %v4528
        %v4530 = vlaneseq
        %v4531 = vshrl.u32 %v4530, 7
        %v4532 = vsub.s32 2, %v4531
        %v4533 = vrot.slane %v3707, %v4532
        %v4534 = vlaneseq
        %v4535 = vshrl.u32 %v4534, 7
        %v4536 = vsub.s32 3, %v4535
        %v4537 = vrot.slane %v3707, %v4536
        %v4538 = vlaneseq
        %v4539 = vshrl.u32 %v4538, 7
        %v4540 = vsub.s32 4, %v4539
        %v4541 = vrot.slane %v3707, %v4540
        %v4542 = vlaneseq
        %v4543 = vshrl.u32 %v4542, 7
        %v4544 = vsub.s32 5, %v4543
        %v4545 = vrot.slane %v3707, %v4544
        %v4546 = vlaneseq
        %v4547 = vshrl.u32 %v4546, 7
        %v4548 = vsub.s32 6, %v4547
        %v4549 = vrot.slane %v3707, %v4548
        %v4550 = vlaneseq
        %v4551 = vshrl.u32 %v4550, 7
        %v4552 = vsub.s32 7, %v4551
        %v4553 = vrot.slane %v3707, %v4552
        %v4554 = vlaneseq
        %v4555 = vshrl.u32 %v4554, 7
        %v4556 = vsub.s32 0, %v4555
        %v4557 = vrot.slane %v3709, %v4556
        %v4558 = vlaneseq
        %v4559 = vshrl.u32 %v4558, 7
        %v4560 = vsub.s32 1, %v4559
        %v4561 = vrot.slane %v3709, %v4560
        %v4562 = vlaneseq
        %v4563 = vshrl.u32 %v4562, 7
        %v4564 = vsub.s32 2, %v4563
        %v4565 = vrot.slane %v3709, %v4564
        %v4566 = vlaneseq
        %v4567 = vshrl.u32 %v4566, 7
        %v4568 = vsub.s32 3, %v4567
        %v4569 = vrot.slane %v3709, %v4568
        %v4570 = vlaneseq
        %v4571 = vshrl.u32 %v4570, 7
        %v4572 = vsub.s32 4, %v4571
        %v4573 = vrot.slane %v3709, %v4572
        %v4574 = vlaneseq
        %v4575 = vshrl.u32 %v4574, 7
        %v4576 = vsub.s32 5, %v4575
        %v4577 = vrot.slane %v3709, %v4576
        %v4578 = vlaneseq
        %v4579 = vshrl.u32 %v4578, 7
        %v4580 = vsub.s32 6, %v4579
        %v4581 = vrot.slane %v3709, %v4580
        %v4582 = vlaneseq
        %v4583 = vshrl.u32 %v4582, 7
        %v4584 = vsub.s32 7, %v4583
        %v4585 = vrot.slane %v3709, %v4584
        %v4586 = vlaneseq
        %v4587 = vshrl.u32 %v4586, 7
        %v4588 = vsub.s32 0, %v4587
        %v4589 = vrot.slane %v3711, %v4588
        %v4590 = vlaneseq
        %v4591 = vshrl.u32 %v4590, 7
        %v4592 = vsub.s32 1, %v4591
        %v4593 = vrot.slane %v3711, %v4592
        %v4594 = vlaneseq
        %v4595 = vshrl.u32 %v4594, 7
        %v4596 = vsub.s32 2, %v4595
        %v4597 = vrot.slane %v3711, %v4596
        %v4598 = vlaneseq
        %v4599 = vshrl.u32 %v4598, 7
        %v4600 = vsub.s32 3, %v4599
        %v4601 = vrot.slane %v3711, %v4600
        %v4602 = vlaneseq
        %v4603 = vshrl.u32 %v4602, 7
        %v4604 = vsub.s32 4, %v4603
        %v4605 = vrot.slane %v3711, %v4604
        %v4606 = vlaneseq
        %v4607 = vshrl.u32 %v4606, 7
        %v4608 = vsub.s32 5, %v4607
        %v4609 = vrot.slane %v3711, %v4608
        %v4610 = vlaneseq
        %v4611 = vshrl.u32 %v4610, 7
        %v4612 = vsub.s32 6, %v4611
        %v4613 = vrot.slane %v3711, %v4612
        %v4614 = vlaneseq
        %v4615 = vshrl.u32 %v4614, 7
        %v4616 = vsub.s32 7, %v4615
        %v4617 = vrot.slane %v3711, %v4616
        %v4618 = vlaneseq
        %v4619 = vshrl.u32 %v4618, 7
        %v4620 = vsub.s32 0, %v4619
        %v4621 = vrot.slane %v3713, %v4620
        %v4622 = vlaneseq
        %v4623 = vshrl.u32 %v4622, 7
        %v4624 = vsub.s32 1, %v4623
        %v4625 = vrot.slane %v3713, %v4624
        %v4626 = vlaneseq
        %v4627 = vshrl.u32 %v4626, 7
        %v4628 = vsub.s32 2, %v4627
        %v4629 = vrot.slane %v3713, %v4628
        %v4630 = vlaneseq
        %v4631 = vshrl.u32 %v4630, 7
        %v4632 = vsub.s32 3, %v4631
        %v4633 = vrot.slane %v3713, %v4632
        %v4634 = vlaneseq
        %v4635 = vshrl.u32 %v4634, 7
        %v4636 = vsub.s32 4, %v4635
        %v4637 = vrot.slane %v3713, %v4636
        %v4638 = vlaneseq
        %v4639 = vshrl.u32 %v4638, 7
        %v4640 = vsub.s32 5, %v4639
        %v4641 = vrot.slane %v3713, %v4640
        %v4642 = vlaneseq
        %v4643 = vshrl.u32 %v4642, 7
        %v4644 = vsub.s32 6, %v4643
        %v4645 = vrot.slane %v3713, %v4644
        %v4646 = vlaneseq
        %v4647 = vshrl.u32 %v4646, 7
        %v4648 = vsub.s32 7, %v4647
        %v4649 = vrot.slane %v3713, %v4648
        %v4650 = vlaneseq
        %v4651 = vshrl.u32 %v4650, 7
        %v4652 = vsub.s32 0, %v4651
        %v4653 = vrot.slane %v3715, %v4652
        %v4654 = vlaneseq
        %v4655 = vshrl.u32 %v4654, 7
        %v4656 = vsub.s32 1, %v4655
        %v4657 = vrot.slane %v3715, %v4656
        %v4658 = vlaneseq
        %v4659 = vshrl.u32 %v4658, 7
        %v4660 = vsub.s32 2, %v4659
        %v4661 = vrot.slane %v3715, %v4660
        %v4662 = vlaneseq
        %v4663 = vshrl.u32 %v4662, 7
        %v4664 = vsub.s32 3, %v4663
        %v4665 = vrot.slane %v3715, %v4664
        %v4666 = vlaneseq
        %v4667 = vshrl.u32 %v4666, 7
        %v4668 = vsub.s32 4, %v4667
        %v4669 = vrot.slane %v3715, %v4668
        %v4670 = vlaneseq
        %v4671 = vshrl.u32 %v4670, 7
        %v4672 = vsub.s32 5, %v4671
        %v4673 = vrot.slane %v3715, %v4672
        %v4674 = vlaneseq
        %v4675 = vshrl.u32 %v4674, 7
        %v4676 = vsub.s32 6, %v4675
        %v4677 = vrot.slane %v3715, %v4676
        %v4678 = vlaneseq
        %v4679 = vshrl.u32 %v4678, 7
        %v4680 = vsub.s32 7, %v4679
        %v4681 = vrot.slane %v3715, %v4680
        %v4682 = vlaneseq
        %v4683 = vshrl.u32 %v4682, 7
        %v4684 = vsub.s32 0, %v4683
        %v4685 = vrot.slane %v3717, %v4684
        %v4686 = vlaneseq
        %v4687 = vshrl.u32 %v4686, 7
        %v4688 = vsub.s32 1, %v4687
        %v4689 = vrot.slane %v3717, %v4688
        %v4690 = vlaneseq
        %v4691 = vshrl.u32 %v4690, 7
        %v4692 = vsub.s32 2, %v4691
        %v4693 = vrot.slane %v3717, %v4692
        %v4694 = vlaneseq
        %v4695 = vshrl.u32 %v4694, 7
        %v4696 = vsub.s32 3, %v4695
        %v4697 = vrot.slane %v3717, %v4696
        %v4698 = vlaneseq
        %v4699 = vshrl.u32 %v4698, 7
        %v4700 = vsub.s32 4, %v4699
        %v4701 = vrot.slane %v3717, %v4700
        %v4702 = vlaneseq
        %v4703 = vshrl.u32 %v4702, 7
        %v4704 = vsub.s32 5, %v4703
        %v4705 = vrot.slane %v3717, %v4704
        %v4706 = vlaneseq
        %v4707 = vshrl.u32 %v4706, 7
        %v4708 = vsub.s32 6, %v4707
        %v4709 = vrot.slane %v3717, %v4708
        %v4710 = vlaneseq
        %v4711 = vshrl.u32 %v4710, 7
        %v4712 = vsub.s32 7, %v4711
        %v4713 = vrot.slane %v3717, %v4712
        %v4714 = vlaneseq
        %v4715 = vshrl.u32 %v4714, 7
        %v4716 = vsub.s32 0, %v4715
        %v4717 = vrot.slane %v3719, %v4716
        %v4718 = vlaneseq
        %v4719 = vshrl.u32 %v4718, 7
        %v4720 = vsub.s32 1, %v4719
        %v4721 = vrot.slane %v3719, %v4720
        %v4722 = vlaneseq
        %v4723 = vshrl.u32 %v4722, 7
        %v4724 = vsub.s32 2, %v4723
        %v4725 = vrot.slane %v3719, %v4724
        %v4726 = vlaneseq
        %v4727 = vshrl.u32 %v4726, 7
        %v4728 = vsub.s32 3, %v4727
        %v4729 = vrot.slane %v3719, %v4728
        %v4730 = vlaneseq
        %v4731 = vshrl.u32 %v4730, 7
        %v4732 = vsub.s32 4, %v4731
        %v4733 = vrot.slane %v3719, %v4732
        %v4734 = vlaneseq
        %v4735 = vshrl.u32 %v4734, 7
        %v4736 = vsub.s32 5, %v4735
        %v4737 = vrot.slane %v3719, %v4736
        %v4738 = vlaneseq
        %v4739 = vshrl.u32 %v4738, 7
        %v4740 = vsub.s32 6, %v4739
        %v4741 = vrot.slane %v3719, %v4740
        %v4742 = vlaneseq
        %v4743 = vshrl.u32 %v4742, 7
        %v4744 = vsub.s32 7, %v4743
        %v4745 = vrot.slane %v3719, %v4744
        %v4746 = vlaneseq
        %v4747 = vshrl.u32 %v4746, 7
        %v4748 = vsub.s32 0, %v4747
        %v4749 = vrot.slane %v3721, %v4748
        %v4750 = vlaneseq
        %v4751 = vshrl.u32 %v4750, 7
        %v4752 = vsub.s32 1, %v4751
        %v4753 = vrot.slane %v3721, %v4752
        %v4754 = vlaneseq
        %v4755 = vshrl.u32 %v4754, 7
        %v4756 = vsub.s32 2, %v4755
        %v4757 = vrot.slane %v3721, %v4756
        %v4758 = vlaneseq
        %v4759 = vshrl.u32 %v4758, 7
        %v4760 = vsub.s32 3, %v4759
        %v4761 = vrot.slane %v3721, %v4760
        %v4762 = vlaneseq
        %v4763 = vshrl.u32 %v4762, 7
        %v4764 = vsub.s32 4, %v4763
        %v4765 = vrot.slane %v3721, %v4764
        %v4766 = vlaneseq
        %v4767 = vshrl.u32 %v4766, 7
        %v4768 = vsub.s32 5, %v4767
        %v4769 = vrot.slane %v3721, %v4768
        %v4770 = vlaneseq
        %v4771 = vshrl.u32 %v4770, 7
        %v4772 = vsub.s32 6, %v4771
        %v4773 = vrot.slane %v3721, %v4772
        %v4774 = vlaneseq
        %v4775 = vshrl.u32 %v4774, 7
        %v4776 = vsub.s32 7, %v4775
        %v4777 = vrot.slane %v3721, %v4776
        %v5034 = vmul.f32 %v480, %v3757
        %v5035 = vmul.f32 %v481, %v3761
        %v5036 = vmul.f32 %v482, %v3765
        %v5037 = vmul.f32 %v483, %v3769
        %v5038 = vmul.f32 %v484, %v3773
        %v5039 = vmul.f32 %v485, %v3777
        %v5040 = vmul.f32 %v486, %v3781
        %v5041 = vmul.f32 %v487, %v3785
        %v5042 = vmul.f32 %v488, %v3789
        %v5043 = vmul.f32 %v489, %v3793
        %v5044 = vmul.f32 %v490, %v3797
        %v5045 = vmul.f32 %v491, %v3801
        %v5046 = vmul.f32 %v492, %v3805
        %v5047 = vmul.f32 %v493, %v3809
        %v5048 = vmul.f32 %v494, %v3813
        %v5049 = vmul.f32 %v495, %v3817
        %v5050 = vmul.f32 %v496, %v3821
        %v5051 = vmul.f32 %v497, %v3825
        %v5052 = vmul.f32 %v498, %v3829
        %v5053 = vmul.f32 %v499, %v3833
        %v5054 = vmul.f32 %v500, %v3837
        %v5055 = vmul.f32 %v501, %v3841
        %v5056 = vmul.f32 %v502, %v3845
        %v5057 = vmul.f32 %v503, %v3849
        %v5058 = vmul.f32 %v504, %v3853
        %v5059 = vmul.f32 %v505, %v3857
        %v5060 = vmul.f32 %v506, %v3861
        %v5061 = vmul.f32 %v507, %v3865
        %v5062 = vmul.f32 %v508, %v3869
        %v5063 = vmul.f32 %v509, %v3873
        %v5064 = vmul.f32 %v510, %v3877
        %v5065 = vmul.f32 %v511, %v3881
        %v5066 = vmul.f32 %v512, %v3885
        %v5067 = vmul.f32 %v513, %v3889
        %v5068 = vmul.f32 %v514, %v3893
        %v5069 = vmul.f32 %v515, %v3897
        %v5070 = vmul.f32 %v516, %v3901
        %v5071 = vmul.f32 %v517, %v3905
        %v5072 = vmul.f32 %v518, %v3909
        %v5073 = vmul.f32 %v519, %v3913
        %v5074 = vmul.f32 %v520, %v3917
        %v5075 = vmul.f32 %v521, %v3921
        %v5076 = vmul.f32 %v522, %v3925
        %v5077 = vmul.f32 %v523, %v3929
        %v5078 = vmul.f32 %v524, %v3933
        %v5079 = vmul.f32 %v525, %v3937
        %v5080 = vmul.f32 %v526, %v3941
        %v5081 = vmul.f32 %v527, %v3945
        %v5082 = vmul.f32 %v528, %v3949
        %v5083 = vmul.f32 %v529, %v3953
        %v5084 = vmul.f32 %v530, %v3957
        %v5085 = vmul.f32 %v531, %v3961
        %v5086 = vmul.f32 %v532, %v3965
        %v5087 = vmul.f32 %v533, %v3969
        %v5088 = vmul.f32 %v534, %v3973
        %v5089 = vmul.f32 %v535, %v3977
        %v5090 = vmul.f32 %v536, %v3981
        %v5091 = vmul.f32 %v537, %v3985
        %v5092 = vmul.f32 %v538, %v3989
        %v5093 = vmul.f32 %v539, %v3993
        %v5094 = vmul.f32 %v540, %v3997
        %v5095 = vmul.f32 %v541, %v4001
        %v5096 = vmul.f32 %v542, %v4005
        %v5097 = vmul.f32 %v543, %v4009
        %v5098 = vmul.f32 %v544, %v4013
        %v5099 = vmul.f32 %v545, %v4017
        %v5100 = vmul.f32 %v546, %v4021
        %v5101 = vmul.f32 %v547, %v4025
        %v5102 = vmul.f32 %v548, %v4029
        %v5103 = vmul.f32 %v549, %v4033
        %v5104 = vmul.f32 %v550, %v4037
        %v5105 = vmul.f32 %v551, %v4041
        %v5106 = vmul.f32 %v552, %v4045
        %v5107 = vmul.f32 %v553, %v4049
        %v5108 = vmul.f32 %v554, %v4053
        %v5109 = vmul.f32 %v555, %v4057
        %v5110 = vmul.f32 %v556, %v4061
        %v5111 = vmul.f32 %v557, %v4065
        %v5112 = vmul.f32 %v558, %v4069
        %v5113 = vmul.f32 %v559, %v4073
        %v5114 = vmul.f32 %v560, %v4077
        %v5115 = vmul.f32 %v561, %v4081
        %v5116 = vmul.f32 %v562, %v4085
        %v5117 = vmul.f32 %v563, %v4089
        %v5118 = vmul.f32 %v564, %v4093
        %v5119 = vmul.f32 %v565, %v4097
        %v5120 = vmul.f32 %v566, %v4101
        %v5121 = vmul.f32 %v567, %v4105
        %v5122 = vmul.f32 %v568, %v4109
        %v5123 = vmul.f32 %v569, %v4113
        %v5124 = vmul.f32 %v570, %v4117
        %v5125 = vmul.f32 %v571, %v4121
        %v5126 = vmul.f32 %v572, %v4125
        %v5127 = vmul.f32 %v573, %v4129
        %v5128 = vmul.f32 %v574, %v4133
        %v5129 = vmul.f32 %v575, %v4137
        %v5130 = vmul.f32 %v576, %v4141
        %v5131 = vmul.f32 %v577, %v4145
        %v5132 = vmul.f32 %v578, %v4149
        %v5133 = vmul.f32 %v579, %v4153
        %v5134 = vmul.f32 %v580, %v4157
        %v5135 = vmul.f32 %v581, %v4161
        %v5136 = vmul.f32 %v582, %v4165
        %v5137 = vmul.f32 %v583, %v4169
        %v5138 = vmul.f32 %v584, %v4173
        %v5139 = vmul.f32 %v585, %v4177
        %v5140 = vmul.f32 %v586, %v4181
        %v5141 = vmul.f32 %v587, %v4185
        %v5142 = vmul.f32 %v588, %v4189
        %v5143 = vmul.f32 %v589, %v4193
        %v5144 = vmul.f32 %v590, %v4197
        %v5145 = vmul.f32 %v591, %v4201
        %v5146 = vmul.f32 %v592, %v4205
        %v5147 = vmul.f32 %v593, %v4209
        %v5148 = vmul.f32 %v594, %v4213
        %v5149 = vmul.f32 %v595, %v4217
        %v5150 = vmul.f32 %v596, %v4221
        %v5151 = vmul.f32 %v597, %v4225
        %v5152 = vmul.f32 %v598, %v4229
        %v5153 = vmul.f32 %v599, %v4233
        %v5154 = vmul.f32 %v600, %v4237
        %v5155 = vmul.f32 %v601, %v4241
        %v5156 = vmul.f32 %v602, %v4245
        %v5157 = vmul.f32 %v603, %v4249
        %v5158 = vmul.f32 %v604, %v4253
        %v5159 = vmul.f32 %v605, %v4257
        %v5160 = vmul.f32 %v606, %v4261
        %v5161 = vmul.f32 %v607, %v4265
        %v5162 = vmul.f32 %v608, %v4269
        %v5163 = vmul.f32 %v609, %v4273
        %v5164 = vmul.f32 %v610, %v4277
        %v5165 = vmul.f32 %v611, %v4281
        %v5166 = vmul.f32 %v612, %v4285
        %v5167 = vmul.f32 %v613, %v4289
        %v5168 = vmul.f32 %v614, %v4293
        %v5169 = vmul.f32 %v615, %v4297
        %v5170 = vmul.f32 %v616, %v4301
        %v5171 = vmul.f32 %v617, %v4305
        %v5172 = vmul.f32 %v618, %v4309
        %v5173 = vmul.f32 %v619, %v4313
        %v5174 = vmul.f32 %v620, %v4317
        %v5175 = vmul.f32 %v621, %v4321
        %v5176 = vmul.f32 %v622, %v4325
        %v5177 = vmul.f32 %v623, %v4329
        %v5178 = vmul.f32 %v624, %v4333
        %v5179 = vmul.f32 %v625, %v4337
        %v5180 = vmul.f32 %v626, %v4341
        %v5181 = vmul.f32 %v627, %v4345
        %v5182 = vmul.f32 %v628, %v4349
        %v5183 = vmul.f32 %v629, %v4353
        %v5184 = vmul.f32 %v630, %v4357
        %v5185 = vmul.f32 %v631, %v4361
        %v5186 = vmul.f32 %v632, %v4365
        %v5187 = vmul.f32 %v633, %v4369
        %v5188 = vmul.f32 %v634, %v4373
        %v5189 = vmul.f32 %v635, %v4377
        %v5190 = vmul.f32 %v636, %v4381
        %v5191 = vmul.f32 %v637, %v4385
        %v5192 = vmul.f32 %v638, %v4389
        %v5193 = vmul.f32 %v639, %v4393
        %v5194 = vmul.f32 %v640, %v4397
        %v5195 = vmul.f32 %v641, %v4401
        %v5196 = vmul.f32 %v642, %v4405
        %v5197 = vmul.f32 %v643, %v4409
        %v5198 = vmul.f32 %v644, %v4413
        %v5199 = vmul.f32 %v645, %v4417
        %v5200 = vmul.f32 %v646, %v4421
        %v5201 = vmul.f32 %v647, %v4425
        %v5202 = vmul.f32 %v648, %v4429
        %v5203 = vmul.f32 %v649, %v4433
        %v5204 = vmul.f32 %v650, %v4437
        %v5205 = vmul.f32 %v651, %v4441
        %v5206 = vmul.f32 %v652, %v4445
        %v5207 = vmul.f32 %v653, %v4449
        %v5208 = vmul.f32 %v654, %v4453
        %v5209 = vmul.f32 %v655, %v4457
        %v5210 = vmul.f32 %v656, %v4461
        %v5211 = vmul.f32 %v657, %v4465
        %v5212 = vmul.f32 %v658, %v4469
        %v5213 = vmul.f32 %v659, %v4473
        %v5214 = vmul.f32 %v660, %v4477
        %v5215 = vmul.f32 %v661, %v4481
        %v5216 = vmul.f32 %v662, %v4485
        %v5217 = vmul.f32 %v663, %v4489
        %v5218 = vmul.f32 %v664, %v4493
        %v5219 = vmul.f32 %v665, %v4497
        %v5220 = vmul.f32 %v666, %v4501
        %v5221 = vmul.f32 %v667, %v4505
        %v5222 = vmul.f32 %v668, %v4509
        %v5223 = vmul.f32 %v669, %v4513
        %v5224 = vmul.f32 %v670, %v4517
        %v5225 = vmul.f32 %v671, %v4521
        %v5226 = vmul.f32 %v672, %v4525
        %v5227 = vmul.f32 %v673, %v4529
        %v5228 = vmul.f32 %v674, %v4533
        %v5229 = vmul.f32 %v675, %v4537
        %v5230 = vmul.f32 %v676, %v4541
        %v5231 = vmul.f32 %v677, %v4545
        %v5232 = vmul.f32 %v678, %v4549
        %v5233 = vmul.f32 %v679, %v4553
        %v5234 = vmul.f32 %v680, %v4557
        %v5235 = vmul.f32 %v681, %v4561
        %v5236 = vmul.f32 %v682, %v4565
        %v5237 = vmul.f32 %v683, %v4569
        %v5238 = vmul.f32 %v684, %v4573
        %v5239 = vmul.f32 %v685, %v4577
        %v5240 = vmul.f32 %v686, %v4581
        %v5241 = vmul.f32 %v687, %v4585
        %v5242 = vmul.f32 %v688, %v4589
        %v5243 = vmul.f32 %v689, %v4593
        %v5244 = vmul.f32 %v690, %v4597
        %v5245 = vmul.f32 %v691, %v4601
        %v5246 = vmul.f32 %v692, %v4605
        %v5247 = vmul.f32 %v693, %v4609
        %v5248 = vmul.f32 %v694, %v4613
        %v5249 = vmul.f32 %v695, %v4617
        %v5250 = vmul.f32 %v696, %v4621
        %v5251 = vmul.f32 %v697, %v4625
        %v5252 = vmul.f32 %v698, %v4629
        %v5253 = vmul.f32 %v699, %v4633
        %v5254 = vmul.f32 %v700, %v4637
        %v5255 = vmul.f32 %v701, %v4641
        %v5256 = vmul.f32 %v702, %v4645
        %v5257 = vmul.f32 %v703, %v4649
        %v5258 = vmul.f32 %v704, %v4653
        %v5259 = vmul.f32 %v705, %v4657
        %v5260 = vmul.f32 %v706, %v4661
        %v5261 = vmul.f32 %v707, %v4665
        %v5262 = vmul.f32 %v708, %v4669
        %v5263 = vmul.f32 %v709, %v4673
        %v5264 = vmul.f32 %v710, %v4677
        %v5265 = vmul.f32 %v711, %v4681
        %v5266 = vmul.f32 %v712, %v4685
        %v5267 = vmul.f32 %v713, %v4689
        %v5268 = vmul.f32 %v714, %v4693
        %v5269 = vmul.f32 %v715, %v4697
        %v5270 = vmul.f32 %v716, %v4701
        %v5271 = vmul.f32 %v717, %v4705
        %v5272 = vmul.f32 %v718, %v4709
        %v5273 = vmul.f32 %v719, %v4713
        %v5274 = vmul.f32 %v720, %v4717
        %v5275 = vmul.f32 %v721, %v4721
        %v5276 = vmul.f32 %v722, %v4725
        %v5277 = vmul.f32 %v723, %v4729
        %v5278 = vmul.f32 %v724, %v4733
        %v5279 = vmul.f32 %v725, %v4737
        %v5280 = vmul.f32 %v726, %v4741
        %v5281 = vmul.f32 %v727, %v4745
        %v5282 = vmul.f32 %v728, %v4749
        %v5283 = vmul.f32 %v729, %v4753
        %v5284 = vmul.f32 %v730, %v4757
        %v5285 = vmul.f32 %v731, %v4761
        %v5286 = vmul.f32 %v732, %v4765
        %v5287 = vmul.f32 %v733, %v4769
        %v5288 = vmul.f32 %v734, %v4773
        %v5289 = vmul.f32 %v735, %v4777
        %v5290 = vmul.f32 %v736, %v3757
        %v5291 = vmul.f32 %v737, %v3761
        %v5292 = vmul.f32 %v738, %v3765
        %v5293 = vmul.f32 %v739, %v3769
        %v5294 = vmul.f32 %v740, %v3773
        %v5295 = vmul.f32 %v741, %v3777
        %v5296 = vmul.f32 %v742, %v3781
        %v5297 = vmul.f32 %v743, %v3785
        %v5298 = vmul.f32 %v744, %v3789
        %v5299 = vmul.f32 %v745, %v3793
        %v5300 = vmul.f32 %v746, %v3797
        %v5301 = vmul.f32 %v747, %v3801
        %v5302 = vmul.f32 %v748, %v3805
        %v5303 = vmul.f32 %v749, %v3809
        %v5304 = vmul.f32 %v750, %v3813
        %v5305 = vmul.f32 %v751, %v3817
        %v5306 = vmul.f32 %v752, %v3821
        %v5307 = vmul.f32 %v753, %v3825
        %v5308 = vmul.f32 %v754, %v3829
        %v5309 = vmul.f32 %v755, %v3833
        %v5310 = vmul.f32 %v756, %v3837
        %v5311 = vmul.f32 %v757, %v3841
        %v5312 = vmul.f32 %v758, %v3845
        %v5313 = vmul.f32 %v759, %v3849
        %v5314 = vmul.f32 %v760, %v3853
        %v5315 = vmul.f32 %v761, %v3857
        %v5316 = vmul.f32 %v762, %v3861
        %v5317 = vmul.f32 %v763, %v3865
        %v5318 = vmul.f32 %v764, %v3869
        %v5319 = vmul.f32 %v765, %v3873
        %v5320 = vmul.f32 %v766, %v3877
        %v5321 = vmul.f32 %v767, %v3881
        %v5322 = vmul.f32 %v768, %v3885
        %v5323 = vmul.f32 %v769, %v3889
        %v5324 = vmul.f32 %v770, %v3893
        %v5325 = vmul.f32 %v771, %v3897
        %v5326 = vmul.f32 %v772, %v3901
        %v5327 = vmul.f32 %v773, %v3905
        %v5328 = vmul.f32 %v774, %v3909
        %v5329 = vmul.f32 %v775, %v3913
        %v5330 = vmul.f32 %v776, %v3917
        %v5331 = vmul.f32 %v777, %v3921
        %v5332 = vmul.f32 %v778, %v3925
        %v5333 = vmul.f32 %v779, %v3929
        %v5334 = vmul.f32 %v780, %v3933
        %v5335 = vmul.f32 %v781, %v3937
        %v5336 = vmul.f32 %v782, %v3941
        %v5337 = vmul.f32 %v783, %v3945
        %v5338 = vmul.f32 %v784, %v3949
        %v5339 = vmul.f32 %v785, %v3953
        %v5340 = vmul.f32 %v786, %v3957
        %v5341 = vmul.f32 %v787, %v3961
        %v5342 = vmul.f32 %v788, %v3965
        %v5343 = vmul.f32 %v789, %v3969
        %v5344 = vmul.f32 %v790, %v3973
        %v5345 = vmul.f32 %v791, %v3977
        %v5346 = vmul.f32 %v792, %v3981
        %v5347 = vmul.f32 %v793, %v3985
        %v5348 = vmul.f32 %v794, %v3989
        %v5349 = vmul.f32 %v795, %v3993
        %v5350 = vmul.f32 %v796, %v3997
        %v5351 = vmul.f32 %v797, %v4001
        %v5352 = vmul.f32 %v798, %v4005
        %v5353 = vmul.f32 %v799, %v4009
        %v5354 = vmul.f32 %v800, %v4013
        %v5355 = vmul.f32 %v801, %v4017
        %v5356 = vmul.f32 %v802, %v4021
        %v5357 = vmul.f32 %v803, %v4025
        %v5358 = vmul.f32 %v804, %v4029
        %v5359 = vmul.f32 %v805, %v4033
        %v5360 = vmul.f32 %v806, %v4037
        %v5361 = vmul.f32 %v807, %v4041
        %v5362 = vmul.f32 %v808, %v4045
        %v5363 = vmul.f32 %v809, %v4049
        %v5364 = vmul.f32 %v810, %v4053
        %v5365 = vmul.f32 %v811, %v4057
        %v5366 = vmul.f32 %v812, %v4061
        %v5367 = vmul.f32 %v813, %v4065
        %v5368 = vmul.f32 %v814, %v4069
        %v5369 = vmul.f32 %v815, %v4073
        %v5370 = vmul.f32 %v816, %v4077
        %v5371 = vmul.f32 %v817, %v4081
        %v5372 = vmul.f32 %v818, %v4085
        %v5373 = vmul.f32 %v819, %v4089
        %v5374 = vmul.f32 %v820, %v4093
        %v5375 = vmul.f32 %v821, %v4097
        %v5376 = vmul.f32 %v822, %v4101
        %v5377 = vmul.f32 %v823, %v4105
        %v5378 = vmul.f32 %v824, %v4109
        %v5379 = vmul.f32 %v825, %v4113
        %v5380 = vmul.f32 %v826, %v4117
        %v5381 = vmul.f32 %v827, %v4121
        %v5382 = vmul.f32 %v828, %v4125
        %v5383 = vmul.f32 %v829, %v4129
        %v5384 = vmul.f32 %v830, %v4133
        %v5385 = vmul.f32 %v831, %v4137
        %v5386 = vmul.f32 %v832, %v4141
        %v5387 = vmul.f32 %v833, %v4145
        %v5388 = vmul.f32 %v834, %v4149
        %v5389 = vmul.f32 %v835, %v4153
        %v5390 = vmul.f32 %v836, %v4157
        %v5391 = vmul.f32 %v837, %v4161
        %v5392 = vmul.f32 %v838, %v4165
        %v5393 = vmul.f32 %v839, %v4169
        %v5394 = vmul.f32 %v840, %v4173
        %v5395 = vmul.f32 %v841, %v4177
        %v5396 = vmul.f32 %v842, %v4181
        %v5397 = vmul.f32 %v843, %v4185
        %v5398 = vmul.f32 %v844, %v4189
        %v5399 = vmul.f32 %v845, %v4193
        %v5400 = vmul.f32 %v846, %v4197
        %v5401 = vmul.f32 %v847, %v4201
        %v5402 = vmul.f32 %v848, %v4205
        %v5403 = vmul.f32 %v849, %v4209
        %v5404 = vmul.f32 %v850, %v4213
        %v5405 = vmul.f32 %v851, %v4217
        %v5406 = vmul.f32 %v852, %v4221
        %v5407 = vmul.f32 %v853, %v4225
        %v5408 = vmul.f32 %v854, %v4229
        %v5409 = vmul.f32 %v855, %v4233
        %v5410 = vmul.f32 %v856, %v4237
        %v5411 = vmul.f32 %v857, %v4241
        %v5412 = vmul.f32 %v858, %v4245
        %v5413 = vmul.f32 %v859, %v4249
        %v5414 = vmul.f32 %v860, %v4253
        %v5415 = vmul.f32 %v861, %v4257
        %v5416 = vmul.f32 %v862, %v4261
        %v5417 = vmul.f32 %v863, %v4265
        %v5418 = vmul.f32 %v864, %v4269
        %v5419 = vmul.f32 %v865, %v4273
        %v5420 = vmul.f32 %v866, %v4277
        %v5421 = vmul.f32 %v867, %v4281
        %v5422 = vmul.f32 %v868, %v4285
        %v5423 = vmul.f32 %v869, %v4289
        %v5424 = vmul.f32 %v870, %v4293
        %v5425 = vmul.f32 %v871, %v4297
        %v5426 = vmul.f32 %v872, %v4301
        %v5427 = vmul.f32 %v873, %v4305
        %v5428 = vmul.f32 %v874, %v4309
        %v5429 = vmul.f32 %v875, %v4313
        %v5430 = vmul.f32 %v876, %v4317
        %v5431 = vmul.f32 %v877, %v4321
        %v5432 = vmul.f32 %v878, %v4325
        %v5433 = vmul.f32 %v879, %v4329
        %v5434 = vmul.f32 %v880, %v4333
        %v5435 = vmul.f32 %v881, %v4337
        %v5436 = vmul.f32 %v882, %v4341
        %v5437 = vmul.f32 %v883, %v4345
        %v5438 = vmul.f32 %v884, %v4349
        %v5439 = vmul.f32 %v885, %v4353
        %v5440 = vmul.f32 %v886, %v4357
        %v5441 = vmul.f32 %v887, %v4361
        %v5442 = vmul.f32 %v888, %v4365
        %v5443 = vmul.f32 %v889, %v4369
        %v5444 = vmul.f32 %v890, %v4373
        %v5445 = vmul.f32 %v891, %v4377
        %v5446 = vmul.f32 %v892, %v4381
        %v5447 = vmul.f32 %v893, %v4385
        %v5448 = vmul.f32 %v894, %v4389
        %v5449 = vmul.f32 %v895, %v4393
        %v5450 = vmul.f32 %v896, %v4397
        %v5451 = vmul.f32 %v897, %v4401
        %v5452 = vmul.f32 %v898, %v4405
        %v5453 = vmul.f32 %v899, %v4409
        %v5454 = vmul.f32 %v900, %v4413
        %v5455 = vmul.f32 %v901, %v4417
        %v5456 = vmul.f32 %v902, %v4421
        %v5457 = vmul.f32 %v903, %v4425
        %v5458 = vmul.f32 %v904, %v4429
        %v5459 = vmul.f32 %v905, %v4433
        %v5460 = vmul.f32 %v906, %v4437
        %v5461 = vmul.f32 %v907, %v4441
        %v5462 = vmul.f32 %v908, %v4445
        %v5463 = vmul.f32 %v909, %v4449
        %v5464 = vmul.f32 %v910, %v4453
        %v5465 = vmul.f32 %v911, %v4457
        %v5466 = vmul.f32 %v912, %v4461
        %v5467 = vmul.f32 %v913, %v4465
        %v5468 = vmul.f32 %v914, %v4469
        %v5469 = vmul.f32 %v915, %v4473
        %v5470 = vmul.f32 %v916, %v4477
        %v5471 = vmul.f32 %v917, %v4481
        %v5472 = vmul.f32 %v918, %v4485
        %v5473 = vmul.f32 %v919, %v4489
        %v5474 = vmul.f32 %v920, %v4493
        %v5475 = vmul.f32 %v921, %v4497
        %v5476 = vmul.f32 %v922, %v4501
        %v5477 = vmul.f32 %v923, %v4505
        %v5478 = vmul.f32 %v924, %v4509
        %v5479 = vmul.f32 %v925, %v4513
        %v5480 = vmul.f32 %v926, %v4517
        %v5481 = vmul.f32 %v927, %v4521
        %v5482 = vmul.f32 %v928, %v4525
        %v5483 = vmul.f32 %v929, %v4529
        %v5484 = vmul.f32 %v930, %v4533
        %v5485 = vmul.f32 %v931, %v4537
        %v5486 = vmul.f32 %v932, %v4541
        %v5487 = vmul.f32 %v933, %v4545
        %v5488 = vmul.f32 %v934, %v4549
        %v5489 = vmul.f32 %v935, %v4553
        %v5490 = vmul.f32 %v936, %v4557
        %v5491 = vmul.f32 %v937, %v4561
        %v5492 = vmul.f32 %v938, %v4565
        %v5493 = vmul.f32 %v939, %v4569
        %v5494 = vmul.f32 %v940, %v4573
        %v5495 = vmul.f32 %v941, %v4577
        %v5496 = vmul.f32 %v942, %v4581
        %v5497 = vmul.f32 %v943, %v4585
        %v5498 = vmul.f32 %v944, %v4589
        %v5499 = vmul.f32 %v945, %v4593
        %v5500 = vmul.f32 %v946, %v4597
        %v5501 = vmul.f32 %v947, %v4601
        %v5502 = vmul.f32 %v948, %v4605
        %v5503 = vmul.f32 %v949, %v4609
        %v5504 = vmul.f32 %v950, %v4613
        %v5505 = vmul.f32 %v951, %v4617
        %v5506 = vmul.f32 %v952, %v4621
        %v5507 = vmul.f32 %v953, %v4625
        %v5508 = vmul.f32 %v954, %v4629
        %v5509 = vmul.f32 %v955, %v4633
        %v5510 = vmul.f32 %v956, %v4637
        %v5511 = vmul.f32 %v957, %v4641
        %v5512 = vmul.f32 %v958, %v4645
        %v5513 = vmul.f32 %v959, %v4649
        %v5514 = vmul.f32 %v960, %v4653
        %v5515 = vmul.f32 %v961, %v4657
        %v5516 = vmul.f32 %v962, %v4661
        %v5517 = vmul.f32 %v963, %v4665
        %v5518 = vmul.f32 %v964, %v4669
        %v5519 = vmul.f32 %v965, %v4673
        %v5520 = vmul.f32 %v966, %v4677
        %v5521 = vmul.f32 %v967, %v4681
        %v5522 = vmul.f32 %v968, %v4685
        %v5523 = vmul.f32 %v969, %v4689
        %v5524 = vmul.f32 %v970, %v4693
        %v5525 = vmul.f32 %v971, %v4697
        %v5526 = vmul.f32 %v972, %v4701
        %v5527 = vmul.f32 %v973, %v4705
        %v5528 = vmul.f32 %v974, %v4709
        %v5529 = vmul.f32 %v975, %v4713
        %v5530 = vmul.f32 %v976, %v4717
        %v5531 = vmul.f32 %v977, %v4721
        %v5532 = vmul.f32 %v978, %v4725
        %v5533 = vmul.f32 %v979, %v4729
        %v5534 = vmul.f32 %v980, %v4733
        %v5535 = vmul.f32 %v981, %v4737
        %v5536 = vmul.f32 %v982, %v4741
        %v5537 = vmul.f32 %v983, %v4745
        %v5538 = vmul.f32 %v984, %v4749
        %v5539 = vmul.f32 %v985, %v4753
        %v5540 = vmul.f32 %v986, %v4757
        %v5541 = vmul.f32 %v987, %v4761
        %v5542 = vmul.f32 %v988, %v4765
        %v5543 = vmul.f32 %v989, %v4769
        %v5544 = vmul.f32 %v990, %v4773
        %v5545 = vmul.f32 %v991, %v4777
        %v5546 = vadd.f32 %v5034, %v5035
        %v5547 = vadd.f32 %v5546, %v5036
        %v5548 = vadd.f32 %v5547, %v5037
        %v5549 = vadd.f32 %v5548, %v5038
        %v5550 = vadd.f32 %v5549, %v5039
        %v5551 = vadd.f32 %v5550, %v5040
        %v5552 = vadd.f32 %v5551, %v5041
        %v5553 = vadd.f32 %v5552, %v5042
        %v5554 = vadd.f32 %v5553, %v5043
        %v5555 = vadd.f32 %v5554, %v5044
        %v5556 = vadd.f32 %v5555, %v5045
        %v5557 = vadd.f32 %v5556, %v5046
        %v5558 = vadd.f32 %v5557, %v5047
        %v5559 = vadd.f32 %v5558, %v5048
        %v5560 = vadd.f32 %v5559, %v5049
        %v5561 = vadd.f32 %v5560, %v5050
        %v5562 = vadd.f32 %v5561, %v5051
        %v5563 = vadd.f32 %v5562, %v5052
        %v5564 = vadd.f32 %v5563, %v5053
        %v5565 = vadd.f32 %v5564, %v5054
        %v5566 = vadd.f32 %v5565, %v5055
        %v5567 = vadd.f32 %v5566, %v5056
        %v5568 = vadd.f32 %v5567, %v5057
        %v5569 = vadd.f32 %v5568, %v5058
        %v5570 = vadd.f32 %v5569, %v5059
        %v5571 = vadd.f32 %v5570, %v5060
        %v5572 = vadd.f32 %v5571, %v5061
        %v5573 = vadd.f32 %v5572, %v5062
        %v5574 = vadd.f32 %v5573, %v5063
        %v5575 = vadd.f32 %v5574, %v5064
        %v5576 = vadd.f32 %v5575, %v5065
        %v5577 = vadd.f32 %v5576, %v5066
        %v5578 = vadd.f32 %v5577, %v5067
        %v5579 = vadd.f32 %v5578, %v5068
        %v5580 = vadd.f32 %v5579, %v5069
        %v5581 = vadd.f32 %v5580, %v5070
        %v5582 = vadd.f32 %v5581, %v5071
        %v5583 = vadd.f32 %v5582, %v5072
        %v5584 = vadd.f32 %v5583, %v5073
        %v5585 = vadd.f32 %v5584, %v5074
        %v5586 = vadd.f32 %v5585, %v5075
        %v5587 = vadd.f32 %v5586, %v5076
        %v5588 = vadd.f32 %v5587, %v5077
        %v5589 = vadd.f32 %v5588, %v5078
        %v5590 = vadd.f32 %v5589, %v5079
        %v5591 = vadd.f32 %v5590, %v5080
        %v5592 = vadd.f32 %v5591, %v5081
        %v5593 = vadd.f32 %v5592, %v5082
        %v5594 = vadd.f32 %v5593, %v5083
        %v5595 = vadd.f32 %v5594, %v5084
        %v5596 = vadd.f32 %v5595, %v5085
        %v5597 = vadd.f32 %v5596, %v5086
        %v5598 = vadd.f32 %v5597, %v5087
        %v5599 = vadd.f32 %v5598, %v5088
        %v5600 = vadd.f32 %v5599, %v5089
        %v5601 = vadd.f32 %v5600, %v5090
        %v5602 = vadd.f32 %v5601, %v5091
        %v5603 = vadd.f32 %v5602, %v5092
        %v5604 = vadd.f32 %v5603, %v5093
        %v5605 = vadd.f32 %v5604, %v5094
        %v5606 = vadd.f32 %v5605, %v5095
        %v5607 = vadd.f32 %v5606, %v5096
        %v5608 = vadd.f32 %v5607, %v5097
        %v5609 = vadd.f32 %v5608, %v5098
        %v5610 = vadd.f32 %v5609, %v5099
        %v5611 = vadd.f32 %v5610, %v5100
        %v5612 = vadd.f32 %v5611, %v5101
        %v5613 = vadd.f32 %v5612, %v5102
        %v5614 = vadd.f32 %v5613, %v5103
        %v5615 = vadd.f32 %v5614, %v5104
        %v5616 = vadd.f32 %v5615, %v5105
        %v5617 = vadd.f32 %v5616, %v5106
        %v5618 = vadd.f32 %v5617, %v5107
        %v5619 = vadd.f32 %v5618, %v5108
        %v5620 = vadd.f32 %v5619, %v5109
        %v5621 = vadd.f32 %v5620, %v5110
        %v5622 = vadd.f32 %v5621, %v5111
        %v5623 = vadd.f32 %v5622, %v5112
        %v5624 = vadd.f32 %v5623, %v5113
        %v5625 = vadd.f32 %v5624, %v5114
        %v5626 = vadd.f32 %v5625, %v5115
        %v5627 = vadd.f32 %v5626, %v5116
        %v5628 = vadd.f32 %v5627, %v5117
        %v5629 = vadd.f32 %v5628, %v5118
        %v5630 = vadd.f32 %v5629, %v5119
        %v5631 = vadd.f32 %v5630, %v5120
        %v5632 = vadd.f32 %v5631, %v5121
        %v5633 = vadd.f32 %v5632, %v5122
        %v5634 = vadd.f32 %v5633, %v5123
        %v5635 = vadd.f32 %v5634, %v5124
        %v5636 = vadd.f32 %v5635, %v5125
        %v5637 = vadd.f32 %v5636, %v5126
        %v5638 = vadd.f32 %v5637, %v5127
        %v5639 = vadd.f32 %v5638, %v5128
        %v5640 = vadd.f32 %v5639, %v5129
        %v5641 = vadd.f32 %v5640, %v5130
        %v5642 = vadd.f32 %v5641, %v5131
        %v5643 = vadd.f32 %v5642, %v5132
        %v5644 = vadd.f32 %v5643, %v5133
        %v5645 = vadd.f32 %v5644, %v5134
        %v5646 = vadd.f32 %v5645, %v5135
        %v5647 = vadd.f32 %v5646, %v5136
        %v5648 = vadd.f32 %v5647, %v5137
        %v5649 = vadd.f32 %v5648, %v5138
        %v5650 = vadd.f32 %v5649, %v5139
        %v5651 = vadd.f32 %v5650, %v5140
        %v5652 = vadd.f32 %v5651, %v5141
        %v5653 = vadd.f32 %v5652, %v5142
        %v5654 = vadd.f32 %v5653, %v5143
        %v5655 = vadd.f32 %v5654, %v5144
        %v5656 = vadd.f32 %v5655, %v5145
        %v5657 = vadd.f32 %v5656, %v5146
        %v5658 = vadd.f32 %v5657, %v5147
        %v5659 = vadd.f32 %v5658, %v5148
        %v5660 = vadd.f32 %v5659, %v5149
        %v5661 = vadd.f32 %v5660, %v5150
        %v5662 = vadd.f32 %v5661, %v5151
        %v5663 = vadd.f32 %v5662, %v5152
        %v5664 = vadd.f32 %v5663, %v5153
        %v5665 = vadd.f32 %v5664, %v5154
        %v5666 = vadd.f32 %v5665, %v5155
        %v5667 = vadd.f32 %v5666, %v5156
        %v5668 = vadd.f32 %v5667, %v5157
        %v5669 = vadd.f32 %v5668, %v5158
        %v5670 = vadd.f32 %v5669, %v5159
        %v5671 = vadd.f32 %v5670, %v5160
        %v5672 = vadd.f32 %v5671, %v5161
        %v5673 = vadd.f32 %v5672, %v5162
        %v5674 = vadd.f32 %v5673, %v5163
        %v5675 = vadd.f32 %v5674, %v5164
        %v5676 = vadd.f32 %v5675, %v5165
        %v5677 = vadd.f32 %v5676, %v5166
        %v5678 = vadd.f32 %v5677, %v5167
        %v5679 = vadd.f32 %v5678, %v5168
        %v5680 = vadd.f32 %v5679, %v5169
        %v5681 = vadd.f32 %v5680, %v5170
        %v5682 = vadd.f32 %v5681, %v5171
        %v5683 = vadd.f32 %v5682, %v5172
        %v5684 = vadd.f32 %v5683, %v5173
        %v5685 = vadd.f32 %v5684, %v5174
        %v5686 = vadd.f32 %v5685, %v5175
        %v5687 = vadd.f32 %v5686, %v5176
        %v5688 = vadd.f32 %v5687, %v5177
        %v5689 = vadd.f32 %v5688, %v5178
        %v5690 = vadd.f32 %v5689, %v5179
        %v5691 = vadd.f32 %v5690, %v5180
        %v5692 = vadd.f32 %v5691, %v5181
        %v5693 = vadd.f32 %v5692, %v5182
        %v5694 = vadd.f32 %v5693, %v5183
        %v5695 = vadd.f32 %v5694, %v5184
        %v5696 = vadd.f32 %v5695, %v5185
        %v5697 = vadd.f32 %v5696, %v5186
        %v5698 = vadd.f32 %v5697, %v5187
        %v5699 = vadd.f32 %v5698, %v5188
        %v5700 = vadd.f32 %v5699, %v5189
        %v5701 = vadd.f32 %v5700, %v5190
        %v5702 = vadd.f32 %v5701, %v5191
        %v5703 = vadd.f32 %v5702, %v5192
        %v5704 = vadd.f32 %v5703, %v5193
        %v5705 = vadd.f32 %v5704, %v5194
        %v5706 = vadd.f32 %v5705, %v5195
        %v5707 = vadd.f32 %v5706, %v5196
        %v5708 = vadd.f32 %v5707, %v5197
        %v5709 = vadd.f32 %v5708, %v5198
        %v5710 = vadd.f32 %v5709, %v5199
        %v5711 = vadd.f32 %v5710, %v5200
        %v5712 = vadd.f32 %v5711, %v5201
        %v5713 = vadd.f32 %v5712, %v5202
        %v5714 = vadd.f32 %v5713, %v5203
        %v5715 = vadd.f32 %v5714, %v5204
        %v5716 = vadd.f32 %v5715, %v5205
        %v5717 = vadd.f32 %v5716, %v5206
        %v5718 = vadd.f32 %v5717, %v5207
        %v5719 = vadd.f32 %v5718, %v5208
        %v5720 = vadd.f32 %v5719, %v5209
        %v5721 = vadd.f32 %v5720, %v5210
        %v5722 = vadd.f32 %v5721, %v5211
        %v5723 = vadd.f32 %v5722, %v5212
        %v5724 = vadd.f32 %v5723, %v5213
        %v5725 = vadd.f32 %v5724, %v5214
        %v5726 = vadd.f32 %v5725, %v5215
        %v5727 = vadd.f32 %v5726, %v5216
        %v5728 = vadd.f32 %v5727, %v5217
        %v5729 = vadd.f32 %v5728, %v5218
        %v5730 = vadd.f32 %v5729, %v5219
        %v5731 = vadd.f32 %v5730, %v5220
        %v5732 = vadd.f32 %v5731, %v5221
        %v5733 = vadd.f32 %v5732, %v5222
        %v5734 = vadd.f32 %v5733, %v5223
        %v5735 = vadd.f32 %v5734, %v5224
        %v5736 = vadd.f32 %v5735, %v5225
        %v5737 = vadd.f32 %v5736, %v5226
        %v5738 = vadd.f32 %v5737, %v5227
        %v5739 = vadd.f32 %v5738, %v5228
        %v5740 = vadd.f32 %v5739, %v5229
        %v5741 = vadd.f32 %v5740, %v5230
        %v5742 = vadd.f32 %v5741, %v5231
        %v5743 = vadd.f32 %v5742, %v5232
        %v5744 = vadd.f32 %v5743, %v5233
        %v5745 = vadd.f32 %v5744, %v5234
        %v5746 = vadd.f32 %v5745, %v5235
        %v5747 = vadd.f32 %v5746, %v5236
        %v5748 = vadd.f32 %v5747, %v5237
        %v5749 = vadd.f32 %v5748, %v5238
        %v5750 = vadd.f32 %v5749, %v5239
        %v5751 = vadd.f32 %v5750, %v5240
        %v5752 = vadd.f32 %v5751, %v5241
        %v5753 = vadd.f32 %v5752, %v5242
        %v5754 = vadd.f32 %v5753, %v5243
        %v5755 = vadd.f32 %v5754, %v5244
        %v5756 = vadd.f32 %v5755, %v5245
        %v5757 = vadd.f32 %v5756, %v5246
        %v5758 = vadd.f32 %v5757, %v5247
        %v5759 = vadd.f32 %v5758, %v5248
        %v5760 = vadd.f32 %v5759, %v5249
        %v5761 = vadd.f32 %v5760, %v5250
        %v5762 = vadd.f32 %v5761, %v5251
        %v5763 = vadd.f32 %v5762, %v5252
        %v5764 = vadd.f32 %v5763, %v5253
        %v5765 = vadd.f32 %v5764, %v5254
        %v5766 = vadd.f32 %v5765, %v5255
        %v5767 = vadd.f32 %v5766, %v5256
        %v5768 = vadd.f32 %v5767, %v5257
        %v5769 = vadd.f32 %v5768, %v5258
        %v5770 = vadd.f32 %v5769, %v5259
        %v5771 = vadd.f32 %v5770, %v5260
        %v5772 = vadd.f32 %v5771, %v5261
        %v5773 = vadd.f32 %v5772, %v5262
        %v5774 = vadd.f32 %v5773, %v5263
        %v5775 = vadd.f32 %v5774, %v5264
        %v5776 = vadd.f32 %v5775, %v5265
        %v5777 = vadd.f32 %v5776, %v5266
        %v5778 = vadd.f32 %v5777, %v5267
        %v5779 = vadd.f32 %v5778, %v5268
        %v5780 = vadd.f32 %v5779, %v5269
        %v5781 = vadd.f32 %v5780, %v5270
        %v5782 = vadd.f32 %v5781, %v5271
        %v5783 = vadd.f32 %v5782, %v5272
        %v5784 = vadd.f32 %v5783, %v5273
        %v5785 = vadd.f32 %v5784, %v5274
        %v5786 = vadd.f32 %v5785, %v5275
        %v5787 = vadd.f32 %v5786, %v5276
        %v5788 = vadd.f32 %v5787, %v5277
        %v5789 = vadd.f32 %v5788, %v5278
        %v5790 = vadd.f32 %v5789, %v5279
        %v5791 = vadd.f32 %v5790, %v5280
        %v5792 = vadd.f32 %v5791, %v5281
        %v5793 = vadd.f32 %v5792, %v5282
        %v5794 = vadd.f32 %v5793, %v5283
        %v5795 = vadd.f32 %v5794, %v5284
        %v5796 = vadd.f32 %v5795, %v5285
        %v5797 = vadd.f32 %v5796, %v5286
        %v5798 = vadd.f32 %v5797, %v5287
        %v5799 = vadd.f32 %v5798, %v5288
        %v5800 = vadd.f32 %v5799, %v5289
        %5801 = vadd.xlane.f32.xlu0 %v5800
        %v5802 = vpop.xlane.xlu0 %5801
        %v5803 = vsel %vm3136, %v5290, 0.0
        %v5804 = vsel %vm3136, %v5291, 0.0
        %v5805 = vadd.f32 %v5803, %v5804
        %v5806 = vsel %vm3136, %v5292, 0.0
        %v5807 = vadd.f32 %v5805, %v5806
        %v5808 = vsel %vm3136, %v5293, 0.0
        %v5809 = vadd.f32 %v5807, %v5808
        %v5810 = vsel %vm3136, %v5294, 0.0
        %v5811 = vadd.f32 %v5809, %v5810
        %v5812 = vsel %vm3136, %v5295, 0.0
        %v5813 = vadd.f32 %v5811, %v5812
        %v5814 = vsel %vm3136, %v5296, 0.0
        %v5815 = vadd.f32 %v5813, %v5814
        %v5816 = vsel %vm3136, %v5297, 0.0
        %v5817 = vadd.f32 %v5815, %v5816
        %v5818 = vsel %vm3136, %v5298, 0.0
        %v5819 = vadd.f32 %v5817, %v5818
        %v5820 = vsel %vm3136, %v5299, 0.0
        %v5821 = vadd.f32 %v5819, %v5820
        %v5822 = vsel %vm3136, %v5300, 0.0
        %v5823 = vadd.f32 %v5821, %v5822
        %v5824 = vsel %vm3136, %v5301, 0.0
        %v5825 = vadd.f32 %v5823, %v5824
        %v5826 = vsel %vm3136, %v5302, 0.0
        %v5827 = vadd.f32 %v5825, %v5826
        %v5828 = vsel %vm3136, %v5303, 0.0
        %v5829 = vadd.f32 %v5827, %v5828
        %v5830 = vsel %vm3136, %v5304, 0.0
        %v5831 = vadd.f32 %v5829, %v5830
        %v5832 = vsel %vm3136, %v5305, 0.0
        %v5833 = vadd.f32 %v5831, %v5832
        %v5834 = vsel %vm3136, %v5306, 0.0
        %v5835 = vadd.f32 %v5833, %v5834
        %v5836 = vsel %vm3136, %v5307, 0.0
        %v5837 = vadd.f32 %v5835, %v5836
        %v5838 = vsel %vm3136, %v5308, 0.0
        %v5839 = vadd.f32 %v5837, %v5838
        %v5840 = vsel %vm3136, %v5309, 0.0
        %v5841 = vadd.f32 %v5839, %v5840
        %v5842 = vsel %vm3136, %v5310, 0.0
        %v5843 = vadd.f32 %v5841, %v5842
        %v5844 = vsel %vm3136, %v5311, 0.0
        %v5845 = vadd.f32 %v5843, %v5844
        %v5846 = vsel %vm3136, %v5312, 0.0
        %v5847 = vadd.f32 %v5845, %v5846
        %v5848 = vsel %vm3136, %v5313, 0.0
        %v5849 = vadd.f32 %v5847, %v5848
        %v5850 = vsel %vm3136, %v5314, 0.0
        %v5851 = vadd.f32 %v5849, %v5850
        %v5852 = vsel %vm3136, %v5315, 0.0
        %v5853 = vadd.f32 %v5851, %v5852
        %v5854 = vsel %vm3136, %v5316, 0.0
        %v5855 = vadd.f32 %v5853, %v5854
        %v5856 = vsel %vm3136, %v5317, 0.0
        %v5857 = vadd.f32 %v5855, %v5856
        %v5858 = vsel %vm3136, %v5318, 0.0
        %v5859 = vadd.f32 %v5857, %v5858
        %v5860 = vsel %vm3136, %v5319, 0.0
        %v5861 = vadd.f32 %v5859, %v5860
        %v5862 = vsel %vm3136, %v5320, 0.0
        %v5863 = vadd.f32 %v5861, %v5862
        %v5864 = vsel %vm3136, %v5321, 0.0
        %v5865 = vadd.f32 %v5863, %v5864
        %v5866 = vsel %vm3136, %v5322, 0.0
        %v5867 = vadd.f32 %v5865, %v5866
        %v5868 = vsel %vm3136, %v5323, 0.0
        %v5869 = vadd.f32 %v5867, %v5868
        %v5870 = vsel %vm3136, %v5324, 0.0
        %v5871 = vadd.f32 %v5869, %v5870
        %v5872 = vsel %vm3136, %v5325, 0.0
        %v5873 = vadd.f32 %v5871, %v5872
        %v5874 = vsel %vm3136, %v5326, 0.0
        %v5875 = vadd.f32 %v5873, %v5874
        %v5876 = vsel %vm3136, %v5327, 0.0
        %v5877 = vadd.f32 %v5875, %v5876
        %v5878 = vsel %vm3136, %v5328, 0.0
        %v5879 = vadd.f32 %v5877, %v5878
        %v5880 = vsel %vm3136, %v5329, 0.0
        %v5881 = vadd.f32 %v5879, %v5880
        %v5882 = vsel %vm3136, %v5330, 0.0
        %v5883 = vadd.f32 %v5881, %v5882
        %v5884 = vsel %vm3136, %v5331, 0.0
        %v5885 = vadd.f32 %v5883, %v5884
        %v5886 = vsel %vm3136, %v5332, 0.0
        %v5887 = vadd.f32 %v5885, %v5886
        %v5888 = vsel %vm3136, %v5333, 0.0
        %v5889 = vadd.f32 %v5887, %v5888
        %v5890 = vsel %vm3136, %v5334, 0.0
        %v5891 = vadd.f32 %v5889, %v5890
        %v5892 = vsel %vm3136, %v5335, 0.0
        %v5893 = vadd.f32 %v5891, %v5892
        %v5894 = vsel %vm3136, %v5336, 0.0
        %v5895 = vadd.f32 %v5893, %v5894
        %v5896 = vsel %vm3136, %v5337, 0.0
        %v5897 = vadd.f32 %v5895, %v5896
        %v5898 = vsel %vm3136, %v5338, 0.0
        %v5899 = vadd.f32 %v5897, %v5898
        %v5900 = vsel %vm3136, %v5339, 0.0
        %v5901 = vadd.f32 %v5899, %v5900
        %v5902 = vsel %vm3136, %v5340, 0.0
        %v5903 = vadd.f32 %v5901, %v5902
        %v5904 = vsel %vm3136, %v5341, 0.0
        %v5905 = vadd.f32 %v5903, %v5904
        %v5906 = vsel %vm3136, %v5342, 0.0
        %v5907 = vadd.f32 %v5905, %v5906
        %v5908 = vsel %vm3136, %v5343, 0.0
        %v5909 = vadd.f32 %v5907, %v5908
        %v5910 = vsel %vm3136, %v5344, 0.0
        %v5911 = vadd.f32 %v5909, %v5910
        %v5912 = vsel %vm3136, %v5345, 0.0
        %v5913 = vadd.f32 %v5911, %v5912
        %v5914 = vsel %vm3136, %v5346, 0.0
        %v5915 = vadd.f32 %v5913, %v5914
        %v5916 = vsel %vm3136, %v5347, 0.0
        %v5917 = vadd.f32 %v5915, %v5916
        %v5918 = vsel %vm3136, %v5348, 0.0
        %v5919 = vadd.f32 %v5917, %v5918
        %v5920 = vsel %vm3136, %v5349, 0.0
        %v5921 = vadd.f32 %v5919, %v5920
        %v5922 = vsel %vm3136, %v5350, 0.0
        %v5923 = vadd.f32 %v5921, %v5922
        %v5924 = vsel %vm3136, %v5351, 0.0
        %v5925 = vadd.f32 %v5923, %v5924
        %v5926 = vsel %vm3136, %v5352, 0.0
        %v5927 = vadd.f32 %v5925, %v5926
        %v5928 = vsel %vm3136, %v5353, 0.0
        %v5929 = vadd.f32 %v5927, %v5928
        %v5930 = vsel %vm3136, %v5354, 0.0
        %v5931 = vadd.f32 %v5929, %v5930
        %v5932 = vsel %vm3136, %v5355, 0.0
        %v5933 = vadd.f32 %v5931, %v5932
        %v5934 = vsel %vm3136, %v5356, 0.0
        %v5935 = vadd.f32 %v5933, %v5934
        %v5936 = vsel %vm3136, %v5357, 0.0
        %v5937 = vadd.f32 %v5935, %v5936
        %v5938 = vsel %vm3136, %v5358, 0.0
        %v5939 = vadd.f32 %v5937, %v5938
        %v5940 = vsel %vm3136, %v5359, 0.0
        %v5941 = vadd.f32 %v5939, %v5940
        %v5942 = vsel %vm3136, %v5360, 0.0
        %v5943 = vadd.f32 %v5941, %v5942
        %v5944 = vsel %vm3136, %v5361, 0.0
        %v5945 = vadd.f32 %v5943, %v5944
        %v5946 = vsel %vm3136, %v5362, 0.0
        %v5947 = vadd.f32 %v5945, %v5946
        %v5948 = vsel %vm3136, %v5363, 0.0
        %v5949 = vadd.f32 %v5947, %v5948
        %v5950 = vsel %vm3136, %v5364, 0.0
        %v5951 = vadd.f32 %v5949, %v5950
        %v5952 = vsel %vm3136, %v5365, 0.0
        %v5953 = vadd.f32 %v5951, %v5952
        %v5954 = vsel %vm3136, %v5366, 0.0
        %v5955 = vadd.f32 %v5953, %v5954
        %v5956 = vsel %vm3136, %v5367, 0.0
        %v5957 = vadd.f32 %v5955, %v5956
        %v5958 = vsel %vm3136, %v5368, 0.0
        %v5959 = vadd.f32 %v5957, %v5958
        %v5960 = vsel %vm3136, %v5369, 0.0
        %v5961 = vadd.f32 %v5959, %v5960
        %v5962 = vsel %vm3136, %v5370, 0.0
        %v5963 = vadd.f32 %v5961, %v5962
        %v5964 = vsel %vm3136, %v5371, 0.0
        %v5965 = vadd.f32 %v5963, %v5964
        %v5966 = vsel %vm3136, %v5372, 0.0
        %v5967 = vadd.f32 %v5965, %v5966
        %v5968 = vsel %vm3136, %v5373, 0.0
        %v5969 = vadd.f32 %v5967, %v5968
        %v5970 = vsel %vm3136, %v5374, 0.0
        %v5971 = vadd.f32 %v5969, %v5970
        %v5972 = vsel %vm3136, %v5375, 0.0
        %v5973 = vadd.f32 %v5971, %v5972
        %v5974 = vsel %vm3136, %v5376, 0.0
        %v5975 = vadd.f32 %v5973, %v5974
        %v5976 = vsel %vm3136, %v5377, 0.0
        %v5977 = vadd.f32 %v5975, %v5976
        %v5978 = vsel %vm3136, %v5378, 0.0
        %v5979 = vadd.f32 %v5977, %v5978
        %v5980 = vsel %vm3136, %v5379, 0.0
        %v5981 = vadd.f32 %v5979, %v5980
        %v5982 = vsel %vm3136, %v5380, 0.0
        %v5983 = vadd.f32 %v5981, %v5982
        %v5984 = vsel %vm3136, %v5381, 0.0
        %v5985 = vadd.f32 %v5983, %v5984
        %v5986 = vsel %vm3136, %v5382, 0.0
        %v5987 = vadd.f32 %v5985, %v5986
        %v5988 = vsel %vm3136, %v5383, 0.0
        %v5989 = vadd.f32 %v5987, %v5988
        %v5990 = vsel %vm3136, %v5384, 0.0
        %v5991 = vadd.f32 %v5989, %v5990
        %v5992 = vsel %vm3136, %v5385, 0.0
        %v5993 = vadd.f32 %v5991, %v5992
        %v5994 = vsel %vm3136, %v5386, 0.0
        %v5995 = vadd.f32 %v5993, %v5994
        %v5996 = vsel %vm3136, %v5387, 0.0
        %v5997 = vadd.f32 %v5995, %v5996
        %v5998 = vsel %vm3136, %v5388, 0.0
        %v5999 = vadd.f32 %v5997, %v5998
        %v6000 = vsel %vm3136, %v5389, 0.0
        %v6001 = vadd.f32 %v5999, %v6000
        %v6002 = vsel %vm3136, %v5390, 0.0
        %v6003 = vadd.f32 %v6001, %v6002
        %v6004 = vsel %vm3136, %v5391, 0.0
        %v6005 = vadd.f32 %v6003, %v6004
        %v6006 = vsel %vm3136, %v5392, 0.0
        %v6007 = vadd.f32 %v6005, %v6006
        %v6008 = vsel %vm3136, %v5393, 0.0
        %v6009 = vadd.f32 %v6007, %v6008
        %v6010 = vsel %vm3136, %v5394, 0.0
        %v6011 = vadd.f32 %v6009, %v6010
        %v6012 = vsel %vm3136, %v5395, 0.0
        %v6013 = vadd.f32 %v6011, %v6012
        %v6014 = vsel %vm3136, %v5396, 0.0
        %v6015 = vadd.f32 %v6013, %v6014
        %v6016 = vsel %vm3136, %v5397, 0.0
        %v6017 = vadd.f32 %v6015, %v6016
        %v6018 = vsel %vm3136, %v5398, 0.0
        %v6019 = vadd.f32 %v6017, %v6018
        %v6020 = vsel %vm3136, %v5399, 0.0
        %v6021 = vadd.f32 %v6019, %v6020
        %v6022 = vsel %vm3136, %v5400, 0.0
        %v6023 = vadd.f32 %v6021, %v6022
        %v6024 = vsel %vm3136, %v5401, 0.0
        %v6025 = vadd.f32 %v6023, %v6024
        %v6026 = vsel %vm3136, %v5402, 0.0
        %v6027 = vadd.f32 %v6025, %v6026
        %v6028 = vsel %vm3136, %v5403, 0.0
        %v6029 = vadd.f32 %v6027, %v6028
        %v6030 = vsel %vm3136, %v5404, 0.0
        %v6031 = vadd.f32 %v6029, %v6030
        %v6032 = vsel %vm3136, %v5405, 0.0
        %v6033 = vadd.f32 %v6031, %v6032
        %v6034 = vsel %vm3136, %v5406, 0.0
        %v6035 = vadd.f32 %v6033, %v6034
        %v6036 = vsel %vm3136, %v5407, 0.0
        %v6037 = vadd.f32 %v6035, %v6036
        %v6038 = vsel %vm3136, %v5408, 0.0
        %v6039 = vadd.f32 %v6037, %v6038
        %v6040 = vsel %vm3136, %v5409, 0.0
        %v6041 = vadd.f32 %v6039, %v6040
        %v6042 = vsel %vm3136, %v5410, 0.0
        %v6043 = vadd.f32 %v6041, %v6042
        %v6044 = vsel %vm3136, %v5411, 0.0
        %v6045 = vadd.f32 %v6043, %v6044
        %v6046 = vsel %vm3136, %v5412, 0.0
        %v6047 = vadd.f32 %v6045, %v6046
        %v6048 = vsel %vm3136, %v5413, 0.0
        %v6049 = vadd.f32 %v6047, %v6048
        %v6050 = vsel %vm3136, %v5414, 0.0
        %v6051 = vadd.f32 %v6049, %v6050
        %v6052 = vsel %vm3136, %v5415, 0.0
        %v6053 = vadd.f32 %v6051, %v6052
        %v6054 = vsel %vm3136, %v5416, 0.0
        %v6055 = vadd.f32 %v6053, %v6054
        %v6056 = vsel %vm3136, %v5417, 0.0
        %v6057 = vadd.f32 %v6055, %v6056
        %v6058 = vsel %vm3136, %v5418, 0.0
        %v6059 = vadd.f32 %v6057, %v6058
        %v6060 = vsel %vm3136, %v5419, 0.0
        %v6061 = vadd.f32 %v6059, %v6060
        %v6062 = vsel %vm3136, %v5420, 0.0
        %v6063 = vadd.f32 %v6061, %v6062
        %v6064 = vsel %vm3136, %v5421, 0.0
        %v6065 = vadd.f32 %v6063, %v6064
        %v6066 = vsel %vm3136, %v5422, 0.0
        %v6067 = vadd.f32 %v6065, %v6066
        %v6068 = vsel %vm3136, %v5423, 0.0
        %v6069 = vadd.f32 %v6067, %v6068
        %v6070 = vsel %vm3136, %v5424, 0.0
        %v6071 = vadd.f32 %v6069, %v6070
        %v6072 = vsel %vm3136, %v5425, 0.0
        %v6073 = vadd.f32 %v6071, %v6072
        %v6074 = vsel %vm3136, %v5426, 0.0
        %v6075 = vadd.f32 %v6073, %v6074
        %v6076 = vsel %vm3136, %v5427, 0.0
        %v6077 = vadd.f32 %v6075, %v6076
        %v6078 = vsel %vm3136, %v5428, 0.0
        %v6079 = vadd.f32 %v6077, %v6078
        %v6080 = vsel %vm3136, %v5429, 0.0
        %v6081 = vadd.f32 %v6079, %v6080
        %v6082 = vsel %vm3136, %v5430, 0.0
        %v6083 = vadd.f32 %v6081, %v6082
        %v6084 = vsel %vm3136, %v5431, 0.0
        %v6085 = vadd.f32 %v6083, %v6084
        %v6086 = vsel %vm3136, %v5432, 0.0
        %v6087 = vadd.f32 %v6085, %v6086
        %v6088 = vsel %vm3136, %v5433, 0.0
        %v6089 = vadd.f32 %v6087, %v6088
        %v6090 = vsel %vm3136, %v5434, 0.0
        %v6091 = vadd.f32 %v6089, %v6090
        %v6092 = vsel %vm3136, %v5435, 0.0
        %v6093 = vadd.f32 %v6091, %v6092
        %v6094 = vsel %vm3136, %v5436, 0.0
        %v6095 = vadd.f32 %v6093, %v6094
        %v6096 = vsel %vm3136, %v5437, 0.0
        %v6097 = vadd.f32 %v6095, %v6096
        %v6098 = vsel %vm3136, %v5438, 0.0
        %v6099 = vadd.f32 %v6097, %v6098
        %v6100 = vsel %vm3136, %v5439, 0.0
        %v6101 = vadd.f32 %v6099, %v6100
        %v6102 = vsel %vm3136, %v5440, 0.0
        %v6103 = vadd.f32 %v6101, %v6102
        %v6104 = vsel %vm3136, %v5441, 0.0
        %v6105 = vadd.f32 %v6103, %v6104
        %v6106 = vsel %vm3136, %v5442, 0.0
        %v6107 = vadd.f32 %v6105, %v6106
        %v6108 = vsel %vm3136, %v5443, 0.0
        %v6109 = vadd.f32 %v6107, %v6108
        %v6110 = vsel %vm3136, %v5444, 0.0
        %v6111 = vadd.f32 %v6109, %v6110
        %v6112 = vsel %vm3136, %v5445, 0.0
        %v6113 = vadd.f32 %v6111, %v6112
        %v6114 = vsel %vm3136, %v5446, 0.0
        %v6115 = vadd.f32 %v6113, %v6114
        %v6116 = vsel %vm3136, %v5447, 0.0
        %v6117 = vadd.f32 %v6115, %v6116
        %v6118 = vsel %vm3136, %v5448, 0.0
        %v6119 = vadd.f32 %v6117, %v6118
        %v6120 = vsel %vm3136, %v5449, 0.0
        %v6121 = vadd.f32 %v6119, %v6120
        %v6122 = vsel %vm3136, %v5450, 0.0
        %v6123 = vadd.f32 %v6121, %v6122
        %v6124 = vsel %vm3136, %v5451, 0.0
        %v6125 = vadd.f32 %v6123, %v6124
        %v6126 = vsel %vm3136, %v5452, 0.0
        %v6127 = vadd.f32 %v6125, %v6126
        %v6128 = vsel %vm3136, %v5453, 0.0
        %v6129 = vadd.f32 %v6127, %v6128
        %v6130 = vsel %vm3136, %v5454, 0.0
        %v6131 = vadd.f32 %v6129, %v6130
        %v6132 = vsel %vm3136, %v5455, 0.0
        %v6133 = vadd.f32 %v6131, %v6132
        %v6134 = vsel %vm3136, %v5456, 0.0
        %v6135 = vadd.f32 %v6133, %v6134
        %v6136 = vsel %vm3136, %v5457, 0.0
        %v6137 = vadd.f32 %v6135, %v6136
        %v6138 = vsel %vm3136, %v5458, 0.0
        %v6139 = vadd.f32 %v6137, %v6138
        %v6140 = vsel %vm3136, %v5459, 0.0
        %v6141 = vadd.f32 %v6139, %v6140
        %v6142 = vsel %vm3136, %v5460, 0.0
        %v6143 = vadd.f32 %v6141, %v6142
        %v6144 = vsel %vm3136, %v5461, 0.0
        %v6145 = vadd.f32 %v6143, %v6144
        %v6146 = vsel %vm3136, %v5462, 0.0
        %v6147 = vadd.f32 %v6145, %v6146
        %v6148 = vsel %vm3136, %v5463, 0.0
        %v6149 = vadd.f32 %v6147, %v6148
        %v6150 = vsel %vm3136, %v5464, 0.0
        %v6151 = vadd.f32 %v6149, %v6150
        %v6152 = vsel %vm3136, %v5465, 0.0
        %v6153 = vadd.f32 %v6151, %v6152
        %v6154 = vsel %vm3136, %v5466, 0.0
        %v6155 = vadd.f32 %v6153, %v6154
        %v6156 = vsel %vm3136, %v5467, 0.0
        %v6157 = vadd.f32 %v6155, %v6156
        %v6158 = vsel %vm3136, %v5468, 0.0
        %v6159 = vadd.f32 %v6157, %v6158
        %v6160 = vsel %vm3136, %v5469, 0.0
        %v6161 = vadd.f32 %v6159, %v6160
        %v6162 = vsel %vm3136, %v5470, 0.0
        %v6163 = vadd.f32 %v6161, %v6162
        %v6164 = vsel %vm3136, %v5471, 0.0
        %v6165 = vadd.f32 %v6163, %v6164
        %v6166 = vsel %vm3136, %v5472, 0.0
        %v6167 = vadd.f32 %v6165, %v6166
        %v6168 = vsel %vm3136, %v5473, 0.0
        %v6169 = vadd.f32 %v6167, %v6168
        %v6170 = vsel %vm3136, %v5474, 0.0
        %v6171 = vadd.f32 %v6169, %v6170
        %v6172 = vsel %vm3136, %v5475, 0.0
        %v6173 = vadd.f32 %v6171, %v6172
        %v6174 = vsel %vm3136, %v5476, 0.0
        %v6175 = vadd.f32 %v6173, %v6174
        %v6176 = vsel %vm3136, %v5477, 0.0
        %v6177 = vadd.f32 %v6175, %v6176
        %v6178 = vsel %vm3136, %v5478, 0.0
        %v6179 = vadd.f32 %v6177, %v6178
        %v6180 = vsel %vm3136, %v5479, 0.0
        %v6181 = vadd.f32 %v6179, %v6180
        %v6182 = vsel %vm3136, %v5480, 0.0
        %v6183 = vadd.f32 %v6181, %v6182
        %v6184 = vsel %vm3136, %v5481, 0.0
        %v6185 = vadd.f32 %v6183, %v6184
        %v6186 = vsel %vm3136, %v5482, 0.0
        %v6187 = vadd.f32 %v6185, %v6186
        %v6188 = vsel %vm3136, %v5483, 0.0
        %v6189 = vadd.f32 %v6187, %v6188
        %v6190 = vsel %vm3136, %v5484, 0.0
        %v6191 = vadd.f32 %v6189, %v6190
        %v6192 = vsel %vm3136, %v5485, 0.0
        %v6193 = vadd.f32 %v6191, %v6192
        %v6194 = vsel %vm3136, %v5486, 0.0
        %v6195 = vadd.f32 %v6193, %v6194
        %v6196 = vsel %vm3136, %v5487, 0.0
        %v6197 = vadd.f32 %v6195, %v6196
        %v6198 = vsel %vm3136, %v5488, 0.0
        %v6199 = vadd.f32 %v6197, %v6198
        %v6200 = vsel %vm3136, %v5489, 0.0
        %v6201 = vadd.f32 %v6199, %v6200
        %v6202 = vsel %vm3136, %v5490, 0.0
        %v6203 = vadd.f32 %v6201, %v6202
        %v6204 = vsel %vm3136, %v5491, 0.0
        %v6205 = vadd.f32 %v6203, %v6204
        %v6206 = vsel %vm3136, %v5492, 0.0
        %v6207 = vadd.f32 %v6205, %v6206
        %v6208 = vsel %vm3136, %v5493, 0.0
        %v6209 = vadd.f32 %v6207, %v6208
        %v6210 = vsel %vm3136, %v5494, 0.0
        %v6211 = vadd.f32 %v6209, %v6210
        %v6212 = vsel %vm3136, %v5495, 0.0
        %v6213 = vadd.f32 %v6211, %v6212
        %v6214 = vsel %vm3136, %v5496, 0.0
        %v6215 = vadd.f32 %v6213, %v6214
        %v6216 = vsel %vm3136, %v5497, 0.0
        %v6217 = vadd.f32 %v6215, %v6216
        %v6218 = vsel %vm3136, %v5498, 0.0
        %v6219 = vadd.f32 %v6217, %v6218
        %v6220 = vsel %vm3136, %v5499, 0.0
        %v6221 = vadd.f32 %v6219, %v6220
        %v6222 = vsel %vm3136, %v5500, 0.0
        %v6223 = vadd.f32 %v6221, %v6222
        %v6224 = vsel %vm3136, %v5501, 0.0
        %v6225 = vadd.f32 %v6223, %v6224
        %v6226 = vsel %vm3136, %v5502, 0.0
        %v6227 = vadd.f32 %v6225, %v6226
        %v6228 = vsel %vm3136, %v5503, 0.0
        %v6229 = vadd.f32 %v6227, %v6228
        %v6230 = vsel %vm3136, %v5504, 0.0
        %v6231 = vadd.f32 %v6229, %v6230
        %v6232 = vsel %vm3136, %v5505, 0.0
        %v6233 = vadd.f32 %v6231, %v6232
        %v6234 = vsel %vm3136, %v5506, 0.0
        %v6235 = vadd.f32 %v6233, %v6234
        %v6236 = vsel %vm3136, %v5507, 0.0
        %v6237 = vadd.f32 %v6235, %v6236
        %v6238 = vsel %vm3136, %v5508, 0.0
        %v6239 = vadd.f32 %v6237, %v6238
        %v6240 = vsel %vm3136, %v5509, 0.0
        %v6241 = vadd.f32 %v6239, %v6240
        %v6242 = vsel %vm3136, %v5510, 0.0
        %v6243 = vadd.f32 %v6241, %v6242
        %v6244 = vsel %vm3136, %v5511, 0.0
        %v6245 = vadd.f32 %v6243, %v6244
        %v6246 = vsel %vm3136, %v5512, 0.0
        %v6247 = vadd.f32 %v6245, %v6246
        %v6248 = vsel %vm3136, %v5513, 0.0
        %v6249 = vadd.f32 %v6247, %v6248
        %v6250 = vsel %vm3136, %v5514, 0.0
        %v6251 = vadd.f32 %v6249, %v6250
        %v6252 = vsel %vm3136, %v5515, 0.0
        %v6253 = vadd.f32 %v6251, %v6252
        %v6254 = vsel %vm3136, %v5516, 0.0
        %v6255 = vadd.f32 %v6253, %v6254
        %v6256 = vsel %vm3136, %v5517, 0.0
        %v6257 = vadd.f32 %v6255, %v6256
        %v6258 = vsel %vm3136, %v5518, 0.0
        %v6259 = vadd.f32 %v6257, %v6258
        %v6260 = vsel %vm3136, %v5519, 0.0
        %v6261 = vadd.f32 %v6259, %v6260
        %v6262 = vsel %vm3136, %v5520, 0.0
        %v6263 = vadd.f32 %v6261, %v6262
        %v6264 = vsel %vm3136, %v5521, 0.0
        %v6265 = vadd.f32 %v6263, %v6264
        %v6266 = vsel %vm3136, %v5522, 0.0
        %v6267 = vadd.f32 %v6265, %v6266
        %v6268 = vsel %vm3136, %v5523, 0.0
        %v6269 = vadd.f32 %v6267, %v6268
        %v6270 = vsel %vm3136, %v5524, 0.0
        %v6271 = vadd.f32 %v6269, %v6270
        %v6272 = vsel %vm3136, %v5525, 0.0
        %v6273 = vadd.f32 %v6271, %v6272
        %v6274 = vsel %vm3136, %v5526, 0.0
        %v6275 = vadd.f32 %v6273, %v6274
        %v6276 = vsel %vm3136, %v5527, 0.0
        %v6277 = vadd.f32 %v6275, %v6276
        %v6278 = vsel %vm3136, %v5528, 0.0
        %v6279 = vadd.f32 %v6277, %v6278
        %v6280 = vsel %vm3136, %v5529, 0.0
        %v6281 = vadd.f32 %v6279, %v6280
        %v6282 = vsel %vm3136, %v5530, 0.0
        %v6283 = vadd.f32 %v6281, %v6282
        %v6284 = vsel %vm3136, %v5531, 0.0
        %v6285 = vadd.f32 %v6283, %v6284
        %v6286 = vsel %vm3136, %v5532, 0.0
        %v6287 = vadd.f32 %v6285, %v6286
        %v6288 = vsel %vm3136, %v5533, 0.0
        %v6289 = vadd.f32 %v6287, %v6288
        %v6290 = vsel %vm3136, %v5534, 0.0
        %v6291 = vadd.f32 %v6289, %v6290
        %v6292 = vsel %vm3136, %v5535, 0.0
        %v6293 = vadd.f32 %v6291, %v6292
        %v6294 = vsel %vm3136, %v5536, 0.0
        %v6295 = vadd.f32 %v6293, %v6294
        %v6296 = vsel %vm3136, %v5537, 0.0
        %v6297 = vadd.f32 %v6295, %v6296
        %v6298 = vsel %vm3136, %v5538, 0.0
        %v6299 = vadd.f32 %v6297, %v6298
        %v6300 = vsel %vm3136, %v5539, 0.0
        %v6301 = vadd.f32 %v6299, %v6300
        %v6302 = vsel %vm3136, %v5540, 0.0
        %v6303 = vadd.f32 %v6301, %v6302
        %v6304 = vsel %vm3136, %v5541, 0.0
        %v6305 = vadd.f32 %v6303, %v6304
        %v6306 = vsel %vm3136, %v5542, 0.0
        %v6307 = vadd.f32 %v6305, %v6306
        %v6308 = vsel %vm3136, %v5543, 0.0
        %v6309 = vadd.f32 %v6307, %v6308
        %v6310 = vsel %vm3136, %v5544, 0.0
        %v6311 = vadd.f32 %v6309, %v6310
        %v6312 = vsel %vm3136, %v5545, 0.0
        %v6313 = vadd.f32 %v6311, %v6312
        %6314 = vadd.xlane.f32.xlu0 %v6313
        %v6315 = vpop.xlane.xlu0 %6314
        %v6316 = vld [vmem:[%s3] sm:$0xff]
        %v6317 = vld [vmem:[%s3 + $0x8] sm:$0x3]
        %v6318 = vadd.f32 %v6316, %v5802
        %v6319 = vadd.f32 %v6317, %v6315
        %vm6320 = vcmask 15368
        %6321 = vst.msk [vmem:[%s3] sm:$0xff] %vm6320, %v6318
        %vm6322 = vcmask 9224
        %6323 = vst.msk [vmem:[%s3 + $0x8] sm:$0x3] %vm6322, %v6319
        %p6324 = scmp.eq.s32.totalorder %s20, 5
        // Predicated region
        $region45: #{linear_pallas.1} parent=31 // pred_check
          %p6325 = pneg %p6324
        $region46: #{linear_pallas.1} parent=31 // pred_check_branch
          %6327 = sbr.rel (%p6325) target = $region48
        $region47: #{linear_pallas.1} parent=31 // pred_region
          %v6328 = vld [vmem:[%s3] sm:$0xff]
          %v6329 = vld [vmem:[%s3 + $0x8] sm:$0x3]
          %v6330 = vld [vmem:[%s2] sm:$0xff]
          %v6331 = vld [vmem:[%s2 + $0x8] sm:$0x3]
          %6333 = vset.pattern.permute.xlu0 0
          %6334 = vperm.xlu0 %6333, %v6330
          %v6335 = vpop.permute.xlu0 %6334
          %6338 = vset.pattern.permute.xlu0 0
          %6339 = vperm.xlu0 %6338, %v6331
          %v6340 = vpop.permute.xlu0 %6339
          %v6342 = vadd.f32 %v6328, %v6335
          %v6343 = vadd.f32 %v6329, %v6340
          %vm6344 = vcmask 15360
          %6345 = vst.msk [vmem:[%s3] sm:$0xff] %vm6344, %v6342
          %vm6346 = vcmask 9216
          %6347 = vst.msk [vmem:[%s3 + $0x8] sm:$0x3] %vm6346, %v6343
        $region48: #{linear_pallas.1} parent=31 // pred_fallthru
          _
        // Predicated region
        $region49: #{linear_pallas.1} parent=31 // pred_check
          %p6348 = pneg %p106
        $region50: #{linear_pallas.1} parent=31 // pred_check_branch
          %6350 = sbr.rel (%p6348) target = $region52
        $region51: #{linear_pallas.1} parent=31 // pred_region
          _
        $region52: #{linear_pallas.1} parent=31 // pred_fallthru
          _
        // Predicated region
        $region53: #{linear_pallas.1} parent=31 // pred_check
          %p6351 = pneg %p106
        $region54: #{linear_pallas.1} parent=31 // pred_check_branch
          %6353 = sbr.rel (%p6351) target = $region56
        $region55: #{linear_pallas.1} parent=31 // pred_region
          _
        $region56: #{linear_pallas.1} parent=31 // pred_fallthru
          _
      $region32: #{linear_pallas.1} parent=5 // pred_fallthru
        _
      %p6354 = scmp.le.s32.totalorder 2, %s15
      // Predicated region
      $region57: #{linear_pallas.1} parent=5 // pred_check
        %p6355 = pneg %p6354
      $region58: #{linear_pallas.1} parent=5 // pred_check_branch
        %6357 = sbr.rel (%p6355) target = $region60
      $region59: #{linear_pallas.1} parent=5 // pred_region
        %s6358 = ssub.s32 %s15, 2
      $region60: #{linear_pallas.1} parent=5 // pred_fallthru
        _
    $region6: #{linear_pallas.1} parent=1 // loop_footer
      %s19 = sadd.s32 1, %s15
    $region7: #{linear_pallas.1} parent=1 // loop_footer_branch
      %14 = sbr.rel target = $region3
    $region8: #{linear_pallas.1} parent=1 // loop_exit
      _
    %6359 = vsyncpa [#allocation3], 1
    %s6360 = scalar_lea.sflag [#allocation3], 1
    %6361 = vsyncpa %s6360, 1
    %6362 = vsyncpa [#allocation5], 1
    %s6363 = scalar_lea.sflag [#allocation5], 1
    %6364 = vsyncpa %s6363, 1

</llo_original>
